<compile_context>
chip_gen: v5e
topology: v5e:2x2
jax: 0.10.0
libtpu: 0.0.40
codegen_flags: <defaults>
</compile_context>

<pallas_src>
import math

import jax
import jax.numpy as jnp
from jax.experimental import pallas as pl
from jax.experimental.pallas import tpu as pltpu


def _round_up(n, m):
    return ((n + m - 1) // m) * m


def _make_encoder_kernel(T, B, H1p, H2p):
    """Builds the fused 2-layer LSTM kernel for static (T, B, padded H1, H2)."""

    def lstm_cell(gx_t, h, c, whh, Hp):
        # gx_t: (B, 4*Hp) f32 precomputed input projection (+bias)
        gates = gx_t + jnp.dot(h.astype(jnp.bfloat16), whh,
                               preferred_element_type=jnp.float32)
        i_g = jax.nn.sigmoid(gates[:, 0 * Hp:1 * Hp])
        f_g = jax.nn.sigmoid(gates[:, 1 * Hp:2 * Hp])
        g_g = jnp.tanh(gates[:, 2 * Hp:3 * Hp])
        o_g = jax.nn.sigmoid(gates[:, 3 * Hp:4 * Hp])
        c_new = f_g * c + i_g * g_g
        h_new = o_g * jnp.tanh(c_new)
        return h_new, c_new

    def kernel(x_ref, wih1_ref, whh1_ref, b1_ref,
               wih2_ref, whh2_ref, b2_ref, out_ref, y1_scr):
        # ---- layer 1: hoisted input projection for all T timesteps ----
        # x_ref: (T*B, F) bf16 ; wih1: (F, 4*H1p) bf16 ; b1: (1, 4*H1p) f32
        gx1 = jnp.dot(x_ref[...], wih1_ref[...],
                      preferred_element_type=jnp.float32) + b1_ref[...]

        whh1 = whh1_ref[...]                      # (H1p, 4*H1p) bf16
        h1 = jnp.zeros((B, H1p), jnp.float32)
        c1 = jnp.zeros((B, H1p), jnp.float32)
        for t in range(T):                        # static unroll
            h1, c1 = lstm_cell(gx1[t * B:(t + 1) * B, :], h1, c1, whh1, H1p)
            y1_scr[t * B:(t + 1) * B, :] = h1     # keep layer-1 outputs in VMEM

        # ---- layer 2: hoisted input projection on layer-1 outputs ----
        gx2 = jnp.dot(y1_scr[...].astype(jnp.bfloat16), wih2_ref[...],
                      preferred_element_type=jnp.float32) + b2_ref[...]

        whh2 = whh2_ref[...]                      # (H2p, 4*H2p) bf16
        h2 = jnp.zeros((B, H2p), jnp.float32)
        c2 = jnp.zeros((B, H2p), jnp.float32)
        for t in range(T):                        # static unroll
            h2, c2 = lstm_cell(gx2[t * B:(t + 1) * B, :], h2, c2, whh2, H2p)

        # Only the final hidden state is needed by the Encoder.
        out_ref[...] = h2                         # (B, H2p), lane-dense store

    return kernel


def _init_lstm_params(key, input_size, hidden_size):
    """Deterministic PyTorch-style uniform(-1/sqrt(H), 1/sqrt(H)) init."""
    k = 1.0 / math.sqrt(hidden_size)
    k1, k2, k3, k4 = jax.random.split(key, 4)
    w_ih = jax.random.uniform(k1, (4 * hidden_size, input_size), jnp.float32, -k, k)
    w_hh = jax.random.uniform(k2, (4 * hidden_size, hidden_size), jnp.float32, -k, k)
    b_ih = jax.random.uniform(k3, (4 * hidden_size,), jnp.float32, -k, k)
    b_hh = jax.random.uniform(k4, (4 * hidden_size,), jnp.float32, -k, k)
    return w_ih, w_hh, b_ih, b_hh


def _prep_lstm_params(w_ih, w_hh, b_ih, b_hh, in_pad, Hp):
    """PyTorch (4H, in) layout -> kernel-ready, gate-padded, transposed bf16.

    Returns:
      wih_t: (in_pad, 4*Hp) bf16   (zero-padded input rows / gate columns)
      whh_t: (Hp,     4*Hp) bf16
      bias : (1,      4*Hp) f32    (b_ih + b_hh)
    Gate order i, f, g, o; each gate occupies one Hp-wide (128-aligned) block.
    """
    H4, F = w_ih.shape
    H = H4 // 4
    w_ih = jnp.asarray(w_ih, jnp.float32).reshape(4, H, F)
    w_hh = jnp.asarray(w_hh, jnp.float32).reshape(4, H, H)
    bias = (jnp.asarray(b_ih, jnp.float32) + jnp.asarray(b_hh, jnp.float32)).reshape(4, H)

    wih_p = jnp.zeros((4, Hp, in_pad), jnp.float32).at[:, :H, :F].set(w_ih)
    whh_p = jnp.zeros((4, Hp, Hp), jnp.float32).at[:, :H, :H].set(w_hh)
    b_p = jnp.zeros((4, Hp), jnp.float32).at[:, :H].set(bias)

    wih_t = jnp.transpose(wih_p, (2, 0, 1)).reshape(in_pad, 4 * Hp).astype(jnp.bfloat16)
    whh_t = jnp.transpose(whh_p, (2, 0, 1)).reshape(Hp, 4 * Hp).astype(jnp.bfloat16)
    b_row = b_p.reshape(1, 4 * Hp)
    return wih_t, whh_t, b_row


class EncoderPallas:
    """Pallas equivalent of the PyTorch Encoder (num_layers must be 1, as the
    original's final reshape (num_layers*B, E) -> (B, E) implies)."""

    def __init__(self, seq_len, n_features, embedding_dim, num_layers=1, key=None):
        assert num_layers == 1, "reshape in forward implies num_layers == 1"
        self.seq_len = seq_len
        self.n_features = n_features
        self.embedding_dim = embedding_dim
        self.hidden_dim = embedding_dim * 2
        # pad hidden sizes so each gate is a whole 128-lane block
        self.H1p = _round_up(self.hidden_dim, 128)
        self.H2p = _round_up(self.embedding_dim, 128)

        if key is None:
            key = jax.random.PRNGKey(0)
        k1, k2 = jax.random.split(key)
        p1 = _init_lstm_params(k1, n_features, self.hidden_dim)
        p2 = _init_lstm_params(k2, self.hidden_dim, embedding_dim)

        # Kernel-ready layouts hoisted out of the per-call path.
        self._w1 = _prep_lstm_params(*p1, in_pad=n_features, Hp=self.H1p)
        self._w2 = _prep_lstm_params(*p2, in_pad=self.H1p, Hp=self.H2p)

        self._forward = jax.jit(self._forward_impl)

    def _forward_impl(self, x):
        B = x.shape[0]
        T, F = self.seq_len, self.n_features
        x = x.reshape(B, T, F)
        # time-major, flattened to (T*B, F) so the kernel can do one batched
        # input-projection matmul for all timesteps
        x_tbf = jnp.transpose(x, (1, 0, 2)).reshape(T * B, F).astype(jnp.bfloat16)

        kernel = _make_encoder_kernel(T, B, self.H1p, self.H2p)
        vspec = pl.BlockSpec(memory_space=pltpu.MemorySpace.VMEM)
        out = pl.pallas_call(
            kernel,
            out_shape=jax.ShapeDtypeStruct((B, self.H2p), jnp.float32),
            in_specs=[vspec] * 7,
            out_specs=vspec,
            scratch_shapes=[pltpu.VMEM((T * B, self.H1p), jnp.float32)],
        )(x_tbf, *self._w1, *self._w2)
        # drop gate-padding lanes; this is h_T of lstm2, exactly what the
        # PyTorch Encoder returns.
        return out[:, :self.embedding_dim]

    def __call__(self, x):
        return self._forward(x)


if __name__ == "__main__":
    batch = 2
    seq_len = 8
    n_features = 4
    embedding_dim = 32

    key = jax.random.PRNGKey(0)
    k_x, k_p = jax.random.split(key)
    x = jax.random.normal(k_x, (batch, seq_len, n_features), jnp.float32)

    enc = EncoderPallas(seq_len, n_features, embedding_dim, num_layers=1, key=k_p)
    out = enc(x)
    out = jax.block_until_ready(out)
    assert out.shape == (batch, embedding_dim), out.shape
    assert bool(jnp.all(jnp.isfinite(out)))
    print("KERNEL_OK")
</pallas_src>

<mosaic_0001>
module attributes {stable_mosaic.version = 11 : i64} {
  func.func @kernel(%arg0: memref<16x4xbf16, #tpu.memory_space<vmem>>, %arg1: memref<4x512xbf16, #tpu.memory_space<vmem>>, %arg2: memref<128x512xbf16, #tpu.memory_space<vmem>>, %arg3: memref<1x512xf32, #tpu.memory_space<vmem>>, %arg4: memref<128x512xbf16, #tpu.memory_space<vmem>>, %arg5: memref<128x512xbf16, #tpu.memory_space<vmem>>, %arg6: memref<1x512xf32, #tpu.memory_space<vmem>>, %arg7: memref<2x128xf32, #tpu.memory_space<vmem>>, %arg8: memref<16x128xf32, #tpu.memory_space<vmem>>) attributes {dimension_semantics = [], scalar_prefetch = 0 : i64, scratch_operands = 1 : i64, tpu.core_type = #tpu.core_type<tc>} {
    %c0 = arith.constant 0 : index
    %c0_0 = arith.constant 0 : index
    %0 = vector.load %arg0[%c0, %c0_0] : memref<16x4xbf16, #tpu.memory_space<vmem>>, vector<16x4xbf16>
    %c0_1 = arith.constant 0 : index
    %c0_2 = arith.constant 0 : index
    %1 = vector.load %arg1[%c0_1, %c0_2] : memref<4x512xbf16, #tpu.memory_space<vmem>>, vector<4x512xbf16>
    %cst = arith.constant dense<0.000000e+00> : vector<16x512xf32>
    %2 = tpu.matmul %0, %1, %cst {dimension_numbers = #tpu.dot_dimension_numbers<[1], [0], [0], [1], [0, 0, 1, 1], [], []>} : vector<16x4xbf16>, vector<4x512xbf16>, vector<16x512xf32> -> vector<16x512xf32>
    %c0_3 = arith.constant 0 : index
    %c0_4 = arith.constant 0 : index
    %3 = vector.load %arg3[%c0_3, %c0_4] : memref<1x512xf32, #tpu.memory_space<vmem>>, vector<1x512xf32>
    %4 = vector.broadcast %3 : vector<1x512xf32> to vector<16x512xf32>
    %5 = arith.addf %2, %4 : vector<16x512xf32>
    %c0_5 = arith.constant 0 : index
    %c0_6 = arith.constant 0 : index
    %6 = vector.load %arg2[%c0_5, %c0_6] : memref<128x512xbf16, #tpu.memory_space<vmem>>, vector<128x512xbf16>
    %cst_7 = arith.constant 0.000000e+00 : f32
    %7 = vector.broadcast %cst_7 : f32 to vector<2x128xf32>
    %cst_8 = arith.constant 0.000000e+00 : f32
    %8 = vector.broadcast %cst_8 : f32 to vector<2x128xf32>
    %9 = vector.extract_strided_slice %5 {offsets = [0, 0], sizes = [2, 512], strides = [1, 1]} : vector<16x512xf32> to vector<2x512xf32>
    %10 = arith.truncf %7 : vector<2x128xf32> to vector<2x128xbf16>
    %cst_9 = arith.constant dense<0.000000e+00> : vector<2x512xf32>
    %11 = tpu.matmul %10, %6, %cst_9 {dimension_numbers = #tpu.dot_dimension_numbers<[1], [0], [0], [1], [0, 0, 1, 1], [], []>} : vector<2x128xbf16>, vector<128x512xbf16>, vector<2x512xf32> -> vector<2x512xf32>
    %12 = arith.addf %9, %11 : vector<2x512xf32>
    %13 = vector.extract_strided_slice %12 {offsets = [0, 0], sizes = [2, 128], strides = [1, 1]} : vector<2x512xf32> to vector<2x128xf32>
    %14 = arith.negf %13 : vector<2x128xf32>
    %15 = math.exp %14 : vector<2x128xf32>
    %cst_10 = arith.constant 1.000000e+00 : f32
    %16 = vector.broadcast %cst_10 : f32 to vector<2x128xf32>
    %17 = arith.addf %16, %15 : vector<2x128xf32>
    %18 = arith.divf %16, %17 : vector<2x128xf32>
    %19 = vector.extract_strided_slice %12 {offsets = [0, 128], sizes = [2, 128], strides = [1, 1]} : vector<2x512xf32> to vector<2x128xf32>
    %20 = arith.negf %19 : vector<2x128xf32>
    %21 = math.exp %20 : vector<2x128xf32>
    %cst_11 = arith.constant 1.000000e+00 : f32
    %22 = vector.broadcast %cst_11 : f32 to vector<2x128xf32>
    %23 = arith.addf %22, %21 : vector<2x128xf32>
    %24 = arith.divf %22, %23 : vector<2x128xf32>
    %25 = vector.extract_strided_slice %12 {offsets = [0, 256], sizes = [2, 128], strides = [1, 1]} : vector<2x512xf32> to vector<2x128xf32>
    %26 = math.tanh %25 : vector<2x128xf32>
    %27 = vector.extract_strided_slice %12 {offsets = [0, 384], sizes = [2, 128], strides = [1, 1]} : vector<2x512xf32> to vector<2x128xf32>
    %28 = arith.negf %27 : vector<2x128xf32>
    %29 = math.exp %28 : vector<2x128xf32>
    %cst_12 = arith.constant 1.000000e+00 : f32
    %30 = vector.broadcast %cst_12 : f32 to vector<2x128xf32>
    %31 = arith.addf %30, %29 : vector<2x128xf32>
    %32 = arith.divf %30, %31 : vector<2x128xf32>
    %33 = arith.mulf %24, %8 : vector<2x128xf32>
    %34 = arith.mulf %18, %26 : vector<2x128xf32>
    %35 = arith.addf %33, %34 : vector<2x128xf32>
    %36 = math.tanh %35 : vector<2x128xf32>
    %37 = arith.mulf %32, %36 : vector<2x128xf32>
    %c0_13 = arith.constant 0 : index
    %c0_14 = arith.constant 0 : index
    %38 = vector.load %arg8[%c0_13, %c0_14] : memref<16x128xf32, #tpu.memory_space<vmem>>, vector<2x128xf32>
    tpu.vector_store %arg8[%c0_13, %c0_14], %37 {strides = array<i32>} : memref<16x128xf32, #tpu.memory_space<vmem>>, vector<2x128xf32>,
    %39 = vector.extract_strided_slice %5 {offsets = [2, 0], sizes = [2, 512], strides = [1, 1]} : vector<16x512xf32> to vector<2x512xf32>
    %40 = arith.truncf %37 : vector<2x128xf32> to vector<2x128xbf16>
    %cst_15 = arith.constant dense<0.000000e+00> : vector<2x512xf32>
    %41 = tpu.matmul %40, %6, %cst_15 {dimension_numbers = #tpu.dot_dimension_numbers<[1], [0], [0], [1], [0, 0, 1, 1], [], []>} : vector<2x128xbf16>, vector<128x512xbf16>, vector<2x512xf32> -> vector<2x512xf32>
    %42 = arith.addf %39, %41 : vector<2x512xf32>
    %43 = vector.extract_strided_slice %42 {offsets = [0, 0], sizes = [2, 128], strides = [1, 1]} : vector<2x512xf32> to vector<2x128xf32>
    %44 = arith.negf %43 : vector<2x128xf32>
    %45 = math.exp %44 : vector<2x128xf32>
    %cst_16 = arith.constant 1.000000e+00 : f32
    %46 = vector.broadcast %cst_16 : f32 to vector<2x128xf32>
    %47 = arith.addf %46, %45 : vector<2x128xf32>
    %48 = arith.divf %46, %47 : vector<2x128xf32>
    %49 = vector.extract_strided_slice %42 {offsets = [0, 128], sizes = [2, 128], strides = [1, 1]} : vector<2x512xf32> to vector<2x128xf32>
    %50 = arith.negf %49 : vector<2x128xf32>
    %51 = math.exp %50 : vector<2x128xf32>
    %cst_17 = arith.constant 1.000000e+00 : f32
    %52 = vector.broadcast %cst_17 : f32 to vector<2x128xf32>
    %53 = arith.addf %52, %51 : vector<2x128xf32>
    %54 = arith.divf %52, %53 : vector<2x128xf32>
    %55 = vector.extract_strided_slice %42 {offsets = [0, 256], sizes = [2, 128], strides = [1, 1]} : vector<2x512xf32> to vector<2x128xf32>
    %56 = math.tanh %55 : vector<2x128xf32>
    %57 = vector.extract_strided_slice %42 {offsets = [0, 384], sizes = [2, 128], strides = [1, 1]} : vector<2x512xf32> to vector<2x128xf32>
    %58 = arith.negf %57 : vector<2x128xf32>
    %59 = math.exp %58 : vector<2x128xf32>
    %cst_18 = arith.constant 1.000000e+00 : f32
    %60 = vector.broadcast %cst_18 : f32 to vector<2x128xf32>
    %61 = arith.addf %60, %59 : vector<2x128xf32>
    %62 = arith.divf %60, %61 : vector<2x128xf32>
    %63 = arith.mulf %54, %35 : vector<2x128xf32>
    %64 = arith.mulf %48, %56 : vector<2x128xf32>
    %65 = arith.addf %63, %64 : vector<2x128xf32>
    %66 = math.tanh %65 : vector<2x128xf32>
    %67 = arith.mulf %62, %66 : vector<2x128xf32>
    %c2 = arith.constant 2 : index
    %c0_19 = arith.constant 0 : index
    %68 = vector.load %arg8[%c2, %c0_19] : memref<16x128xf32, #tpu.memory_space<vmem>>, vector<2x128xf32>
    tpu.vector_store %arg8[%c2, %c0_19], %67 {strides = array<i32>} : memref<16x128xf32, #tpu.memory_space<vmem>>, vector<2x128xf32>,
    %69 = vector.extract_strided_slice %5 {offsets = [4, 0], sizes = [2, 512], strides = [1, 1]} : vector<16x512xf32> to vector<2x512xf32>
    %70 = arith.truncf %67 : vector<2x128xf32> to vector<2x128xbf16>
    %cst_20 = arith.constant dense<0.000000e+00> : vector<2x512xf32>
    %71 = tpu.matmul %70, %6, %cst_20 {dimension_numbers = #tpu.dot_dimension_numbers<[1], [0], [0], [1], [0, 0, 1, 1], [], []>} : vector<2x128xbf16>, vector<128x512xbf16>, vector<2x512xf32> -> vector<2x512xf32>
    %72 = arith.addf %69, %71 : vector<2x512xf32>
    %73 = vector.extract_strided_slice %72 {offsets = [0, 0], sizes = [2, 128], strides = [1, 1]} : vector<2x512xf32> to vector<2x128xf32>
    %74 = arith.negf %73 : vector<2x128xf32>
    %75 = math.exp %74 : vector<2x128xf32>
    %cst_21 = arith.constant 1.000000e+00 : f32
    %76 = vector.broadcast %cst_21 : f32 to vector<2x128xf32>
    %77 = arith.addf %76, %75 : vector<2x128xf32>
    %78 = arith.divf %76, %77 : vector<2x128xf32>
    %79 = vector.extract_strided_slice %72 {offsets = [0, 128], sizes = [2, 128], strides = [1, 1]} : vector<2x512xf32> to vector<2x128xf32>
    %80 = arith.negf %79 : vector<2x128xf32>
    %81 = math.exp %80 : vector<2x128xf32>
    %cst_22 = arith.constant 1.000000e+00 : f32
    %82 = vector.broadcast %cst_22 : f32 to vector<2x128xf32>
    %83 = arith.addf %82, %81 : vector<2x128xf32>
    %84 = arith.divf %82, %83 : vector<2x128xf32>
    %85 = vector.extract_strided_slice %72 {offsets = [0, 256], sizes = [2, 128], strides = [1, 1]} : vector<2x512xf32> to vector<2x128xf32>
    %86 = math.tanh %85 : vector<2x128xf32>
    %87 = vector.extract_strided_slice %72 {offsets = [0, 384], sizes = [2, 128], strides = [1, 1]} : vector<2x512xf32> to vector<2x128xf32>
    %88 = arith.negf %87 : vector<2x128xf32>
    %89 = math.exp %88 : vector<2x128xf32>
    %cst_23 = arith.constant 1.000000e+00 : f32
    %90 = vector.broadcast %cst_23 : f32 to vector<2x128xf32>
    %91 = arith.addf %90, %89 : vector<2x128xf32>
    %92 = arith.divf %90, %91 : vector<2x128xf32>
    %93 = arith.mulf %84, %65 : vector<2x128xf32>
    %94 = arith.mulf %78, %86 : vector<2x128xf32>
    %95 = arith.addf %93, %94 : vector<2x128xf32>
    %96 = math.tanh %95 : vector<2x128xf32>
    %97 = arith.mulf %92, %96 : vector<2x128xf32>
    %c4 = arith.constant 4 : index
    %c0_24 = arith.constant 0 : index
    %98 = vector.load %arg8[%c4, %c0_24] : memref<16x128xf32, #tpu.memory_space<vmem>>, vector<2x128xf32>
    tpu.vector_store %arg8[%c4, %c0_24], %97 {strides = array<i32>} : memref<16x128xf32, #tpu.memory_space<vmem>>, vector<2x128xf32>,
    %99 = vector.extract_strided_slice %5 {offsets = [6, 0], sizes = [2, 512], strides = [1, 1]} : vector<16x512xf32> to vector<2x512xf32>
    %100 = arith.truncf %97 : vector<2x128xf32> to vector<2x128xbf16>
    %cst_25 = arith.constant dense<0.000000e+00> : vector<2x512xf32>
    %101 = tpu.matmul %100, %6, %cst_25 {dimension_numbers = #tpu.dot_dimension_numbers<[1], [0], [0], [1], [0, 0, 1, 1], [], []>} : vector<2x128xbf16>, vector<128x512xbf16>, vector<2x512xf32> -> vector<2x512xf32>
    %102 = arith.addf %99, %101 : vector<2x512xf32>
    %103 = vector.extract_strided_slice %102 {offsets = [0, 0], sizes = [2, 128], strides = [1, 1]} : vector<2x512xf32> to vector<2x128xf32>
    %104 = arith.negf %103 : vector<2x128xf32>
    %105 = math.exp %104 : vector<2x128xf32>
    %cst_26 = arith.constant 1.000000e+00 : f32
    %106 = vector.broadcast %cst_26 : f32 to vector<2x128xf32>
    %107 = arith.addf %106, %105 : vector<2x128xf32>
    %108 = arith.divf %106, %107 : vector<2x128xf32>
    %109 = vector.extract_strided_slice %102 {offsets = [0, 128], sizes = [2, 128], strides = [1, 1]} : vector<2x512xf32> to vector<2x128xf32>
    %110 = arith.negf %109 : vector<2x128xf32>
    %111 = math.exp %110 : vector<2x128xf32>
    %cst_27 = arith.constant 1.000000e+00 : f32
    %112 = vector.broadcast %cst_27 : f32 to vector<2x128xf32>
    %113 = arith.addf %112, %111 : vector<2x128xf32>
    %114 = arith.divf %112, %113 : vector<2x128xf32>
    %115 = vector.extract_strided_slice %102 {offsets = [0, 256], sizes = [2, 128], strides = [1, 1]} : vector<2x512xf32> to vector<2x128xf32>
    %116 = math.tanh %115 : vector<2x128xf32>
    %117 = vector.extract_strided_slice %102 {offsets = [0, 384], sizes = [2, 128], strides = [1, 1]} : vector<2x512xf32> to vector<2x128xf32>
    %118 = arith.negf %117 : vector<2x128xf32>
    %119 = math.exp %118 : vector<2x128xf32>
    %cst_28 = arith.constant 1.000000e+00 : f32
    %120 = vector.broadcast %cst_28 : f32 to vector<2x128xf32>
    %121 = arith.addf %120, %119 : vector<2x128xf32>
    %122 = arith.divf %120, %121 : vector<2x128xf32>
    %123 = arith.mulf %114, %95 : vector<2x128xf32>
    %124 = arith.mulf %108, %116 : vector<2x128xf32>
    %125 = arith.addf %123, %124 : vector<2x128xf32>
    %126 = math.tanh %125 : vector<2x128xf32>
    %127 = arith.mulf %122, %126 : vector<2x128xf32>
    %c6 = arith.constant 6 : index
    %c0_29 = arith.constant 0 : index
    %128 = vector.load %arg8[%c6, %c0_29] : memref<16x128xf32, #tpu.memory_space<vmem>>, vector<2x128xf32>
    tpu.vector_store %arg8[%c6, %c0_29], %127 {strides = array<i32>} : memref<16x128xf32, #tpu.memory_space<vmem>>, vector<2x128xf32>,
    %129 = vector.extract_strided_slice %5 {offsets = [8, 0], sizes = [2, 512], strides = [1, 1]} : vector<16x512xf32> to vector<2x512xf32>
    %130 = arith.truncf %127 : vector<2x128xf32> to vector<2x128xbf16>
    %cst_30 = arith.constant dense<0.000000e+00> : vector<2x512xf32>
    %131 = tpu.matmul %130, %6, %cst_30 {dimension_numbers = #tpu.dot_dimension_numbers<[1], [0], [0], [1], [0, 0, 1, 1], [], []>} : vector<2x128xbf16>, vector<128x512xbf16>, vector<2x512xf32> -> vector<2x512xf32>
    %132 = arith.addf %129, %131 : vector<2x512xf32>
    %133 = vector.extract_strided_slice %132 {offsets = [0, 0], sizes = [2, 128], strides = [1, 1]} : vector<2x512xf32> to vector<2x128xf32>
    %134 = arith.negf %133 : vector<2x128xf32>
    %135 = math.exp %134 : vector<2x128xf32>
    %cst_31 = arith.constant 1.000000e+00 : f32
    %136 = vector.broadcast %cst_31 : f32 to vector<2x128xf32>
    %137 = arith.addf %136, %135 : vector<2x128xf32>
    %138 = arith.divf %136, %137 : vector<2x128xf32>
    %139 = vector.extract_strided_slice %132 {offsets = [0, 128], sizes = [2, 128], strides = [1, 1]} : vector<2x512xf32> to vector<2x128xf32>
    %140 = arith.negf %139 : vector<2x128xf32>
    %141 = math.exp %140 : vector<2x128xf32>
    %cst_32 = arith.constant 1.000000e+00 : f32
    %142 = vector.broadcast %cst_32 : f32 to vector<2x128xf32>
    %143 = arith.addf %142, %141 : vector<2x128xf32>
    %144 = arith.divf %142, %143 : vector<2x128xf32>
    %145 = vector.extract_strided_slice %132 {offsets = [0, 256], sizes = [2, 128], strides = [1, 1]} : vector<2x512xf32> to vector<2x128xf32>
    %146 = math.tanh %145 : vector<2x128xf32>
    %147 = vector.extract_strided_slice %132 {offsets = [0, 384], sizes = [2, 128], strides = [1, 1]} : vector<2x512xf32> to vector<2x128xf32>
    %148 = arith.negf %147 : vector<2x128xf32>
    %149 = math.exp %148 : vector<2x128xf32>
    %cst_33 = arith.constant 1.000000e+00 : f32
    %150 = vector.broadcast %cst_33 : f32 to vector<2x128xf32>
    %151 = arith.addf %150, %149 : vector<2x128xf32>
    %152 = arith.divf %150, %151 : vector<2x128xf32>
    %153 = arith.mulf %144, %125 : vector<2x128xf32>
    %154 = arith.mulf %138, %146 : vector<2x128xf32>
    %155 = arith.addf %153, %154 : vector<2x128xf32>
    %156 = math.tanh %155 : vector<2x128xf32>
    %157 = arith.mulf %152, %156 : vector<2x128xf32>
    %c8 = arith.constant 8 : index
    %c0_34 = arith.constant 0 : index
    %158 = vector.load %arg8[%c8, %c0_34] : memref<16x128xf32, #tpu.memory_space<vmem>>, vector<2x128xf32>
    tpu.vector_store %arg8[%c8, %c0_34], %157 {strides = array<i32>} : memref<16x128xf32, #tpu.memory_space<vmem>>, vector<2x128xf32>,
    %159 = vector.extract_strided_slice %5 {offsets = [10, 0], sizes = [2, 512], strides = [1, 1]} : vector<16x512xf32> to vector<2x512xf32>
    %160 = arith.truncf %157 : vector<2x128xf32> to vector<2x128xbf16>
    %cst_35 = arith.constant dense<0.000000e+00> : vector<2x512xf32>
    %161 = tpu.matmul %160, %6, %cst_35 {dimension_numbers = #tpu.dot_dimension_numbers<[1], [0], [0], [1], [0, 0, 1, 1], [], []>} : vector<2x128xbf16>, vector<128x512xbf16>, vector<2x512xf32> -> vector<2x512xf32>
    %162 = arith.addf %159, %161 : vector<2x512xf32>
    %163 = vector.extract_strided_slice %162 {offsets = [0, 0], sizes = [2, 128], strides = [1, 1]} : vector<2x512xf32> to vector<2x128xf32>
    %164 = arith.negf %163 : vector<2x128xf32>
    %165 = math.exp %164 : vector<2x128xf32>
    %cst_36 = arith.constant 1.000000e+00 : f32
    %166 = vector.broadcast %cst_36 : f32 to vector<2x128xf32>
    %167 = arith.addf %166, %165 : vector<2x128xf32>
    %168 = arith.divf %166, %167 : vector<2x128xf32>
    %169 = vector.extract_strided_slice %162 {offsets = [0, 128], sizes = [2, 128], strides = [1, 1]} : vector<2x512xf32> to vector<2x128xf32>
    %170 = arith.negf %169 : vector<2x128xf32>
    %171 = math.exp %170 : vector<2x128xf32>
    %cst_37 = arith.constant 1.000000e+00 : f32
    %172 = vector.broadcast %cst_37 : f32 to vector<2x128xf32>
    %173 = arith.addf %172, %171 : vector<2x128xf32>
    %174 = arith.divf %172, %173 : vector<2x128xf32>
    %175 = vector.extract_strided_slice %162 {offsets = [0, 256], sizes = [2, 128], strides = [1, 1]} : vector<2x512xf32> to vector<2x128xf32>
    %176 = math.tanh %175 : vector<2x128xf32>
    %177 = vector.extract_strided_slice %162 {offsets = [0, 384], sizes = [2, 128], strides = [1, 1]} : vector<2x512xf32> to vector<2x128xf32>
    %178 = arith.negf %177 : vector<2x128xf32>
    %179 = math.exp %178 : vector<2x128xf32>
    %cst_38 = arith.constant 1.000000e+00 : f32
    %180 = vector.broadcast %cst_38 : f32 to vector<2x128xf32>
    %181 = arith.addf %180, %179 : vector<2x128xf32>
    %182 = arith.divf %180, %181 : vector<2x128xf32>
    %183 = arith.mulf %174, %155 : vector<2x128xf32>
    %184 = arith.mulf %168, %176 : vector<2x128xf32>
    %185 = arith.addf %183, %184 : vector<2x128xf32>
    %186 = math.tanh %185 : vector<2x128xf32>
    %187 = arith.mulf %182, %186 : vector<2x128xf32>
    %c10 = arith.constant 10 : index
    %c0_39 = arith.constant 0 : index
    %188 = vector.load %arg8[%c10, %c0_39] : memref<16x128xf32, #tpu.memory_space<vmem>>, vector<2x128xf32>
    tpu.vector_store %arg8[%c10, %c0_39], %187 {strides = array<i32>} : memref<16x128xf32, #tpu.memory_space<vmem>>, vector<2x128xf32>,
    %189 = vector.extract_strided_slice %5 {offsets = [12, 0], sizes = [2, 512], strides = [1, 1]} : vector<16x512xf32> to vector<2x512xf32>
    %190 = arith.truncf %187 : vector<2x128xf32> to vector<2x128xbf16>
    %cst_40 = arith.constant dense<0.000000e+00> : vector<2x512xf32>
    %191 = tpu.matmul %190, %6, %cst_40 {dimension_numbers = #tpu.dot_dimension_numbers<[1], [0], [0], [1], [0, 0, 1, 1], [], []>} : vector<2x128xbf16>, vector<128x512xbf16>, vector<2x512xf32> -> vector<2x512xf32>
    %192 = arith.addf %189, %191 : vector<2x512xf32>
    %193 = vector.extract_strided_slice %192 {offsets = [0, 0], sizes = [2, 128], strides = [1, 1]} : vector<2x512xf32> to vector<2x128xf32>
    %194 = arith.negf %193 : vector<2x128xf32>
    %195 = math.exp %194 : vector<2x128xf32>
    %cst_41 = arith.constant 1.000000e+00 : f32
    %196 = vector.broadcast %cst_41 : f32 to vector<2x128xf32>
    %197 = arith.addf %196, %195 : vector<2x128xf32>
    %198 = arith.divf %196, %197 : vector<2x128xf32>
    %199 = vector.extract_strided_slice %192 {offsets = [0, 128], sizes = [2, 128], strides = [1, 1]} : vector<2x512xf32> to vector<2x128xf32>
    %200 = arith.negf %199 : vector<2x128xf32>
    %201 = math.exp %200 : vector<2x128xf32>
    %cst_42 = arith.constant 1.000000e+00 : f32
    %202 = vector.broadcast %cst_42 : f32 to vector<2x128xf32>
    %203 = arith.addf %202, %201 : vector<2x128xf32>
    %204 = arith.divf %202, %203 : vector<2x128xf32>
    %205 = vector.extract_strided_slice %192 {offsets = [0, 256], sizes = [2, 128], strides = [1, 1]} : vector<2x512xf32> to vector<2x128xf32>
    %206 = math.tanh %205 : vector<2x128xf32>
    %207 = vector.extract_strided_slice %192 {offsets = [0, 384], sizes = [2, 128], strides = [1, 1]} : vector<2x512xf32> to vector<2x128xf32>
    %208 = arith.negf %207 : vector<2x128xf32>
    %209 = math.exp %208 : vector<2x128xf32>
    %cst_43 = arith.constant 1.000000e+00 : f32
    %210 = vector.broadcast %cst_43 : f32 to vector<2x128xf32>
    %211 = arith.addf %210, %209 : vector<2x128xf32>
    %212 = arith.divf %210, %211 : vector<2x128xf32>
    %213 = arith.mulf %204, %185 : vector<2x128xf32>
    %214 = arith.mulf %198, %206 : vector<2x128xf32>
    %215 = arith.addf %213, %214 : vector<2x128xf32>
    %216 = math.tanh %215 : vector<2x128xf32>
    %217 = arith.mulf %212, %216 : vector<2x128xf32>
    %c12 = arith.constant 12 : index
    %c0_44 = arith.constant 0 : index
    %218 = vector.load %arg8[%c12, %c0_44] : memref<16x128xf32, #tpu.memory_space<vmem>>, vector<2x128xf32>
    tpu.vector_store %arg8[%c12, %c0_44], %217 {strides = array<i32>} : memref<16x128xf32, #tpu.memory_space<vmem>>, vector<2x128xf32>,
    %219 = vector.extract_strided_slice %5 {offsets = [14, 0], sizes = [2, 512], strides = [1, 1]} : vector<16x512xf32> to vector<2x512xf32>
    %220 = arith.truncf %217 : vector<2x128xf32> to vector<2x128xbf16>
    %cst_45 = arith.constant dense<0.000000e+00> : vector<2x512xf32>
    %221 = tpu.matmul %220, %6, %cst_45 {dimension_numbers = #tpu.dot_dimension_numbers<[1], [0], [0], [1], [0, 0, 1, 1], [], []>} : vector<2x128xbf16>, vector<128x512xbf16>, vector<2x512xf32> -> vector<2x512xf32>
    %222 = arith.addf %219, %221 : vector<2x512xf32>
    %223 = vector.extract_strided_slice %222 {offsets = [0, 0], sizes = [2, 128], strides = [1, 1]} : vector<2x512xf32> to vector<2x128xf32>
    %224 = arith.negf %223 : vector<2x128xf32>
    %225 = math.exp %224 : vector<2x128xf32>
    %cst_46 = arith.constant 1.000000e+00 : f32
    %226 = vector.broadcast %cst_46 : f32 to vector<2x128xf32>
    %227 = arith.addf %226, %225 : vector<2x128xf32>
    %228 = arith.divf %226, %227 : vector<2x128xf32>
    %229 = vector.extract_strided_slice %222 {offsets = [0, 128], sizes = [2, 128], strides = [1, 1]} : vector<2x512xf32> to vector<2x128xf32>
    %230 = arith.negf %229 : vector<2x128xf32>
    %231 = math.exp %230 : vector<2x128xf32>
    %cst_47 = arith.constant 1.000000e+00 : f32
    %232 = vector.broadcast %cst_47 : f32 to vector<2x128xf32>
    %233 = arith.addf %232, %231 : vector<2x128xf32>
    %234 = arith.divf %232, %233 : vector<2x128xf32>
    %235 = vector.extract_strided_slice %222 {offsets = [0, 256], sizes = [2, 128], strides = [1, 1]} : vector<2x512xf32> to vector<2x128xf32>
    %236 = math.tanh %235 : vector<2x128xf32>
    %237 = vector.extract_strided_slice %222 {offsets = [0, 384], sizes = [2, 128], strides = [1, 1]} : vector<2x512xf32> to vector<2x128xf32>
    %238 = arith.negf %237 : vector<2x128xf32>
    %239 = math.exp %238 : vector<2x128xf32>
    %cst_48 = arith.constant 1.000000e+00 : f32
    %240 = vector.broadcast %cst_48 : f32 to vector<2x128xf32>
    %241 = arith.addf %240, %239 : vector<2x128xf32>
    %242 = arith.divf %240, %241 : vector<2x128xf32>
    %243 = arith.mulf %234, %215 : vector<2x128xf32>
    %244 = arith.mulf %228, %236 : vector<2x128xf32>
    %245 = arith.addf %243, %244 : vector<2x128xf32>
    %246 = math.tanh %245 : vector<2x128xf32>
    %247 = arith.mulf %242, %246 : vector<2x128xf32>
    %c14 = arith.constant 14 : index
    %c0_49 = arith.constant 0 : index
    %248 = vector.load %arg8[%c14, %c0_49] : memref<16x128xf32, #tpu.memory_space<vmem>>, vector<2x128xf32>
    tpu.vector_store %arg8[%c14, %c0_49], %247 {strides = array<i32>} : memref<16x128xf32, #tpu.memory_space<vmem>>, vector<2x128xf32>,
    %c0_50 = arith.constant 0 : index
    %c0_51 = arith.constant 0 : index
    %249 = vector.load %arg8[%c0_50, %c0_51] : memref<16x128xf32, #tpu.memory_space<vmem>>, vector<16x128xf32>
    %250 = arith.truncf %249 : vector<16x128xf32> to vector<16x128xbf16>
    %c0_52 = arith.constant 0 : index
    %c0_53 = arith.constant 0 : index
    %251 = vector.load %arg4[%c0_52, %c0_53] : memref<128x512xbf16, #tpu.memory_space<vmem>>, vector<128x512xbf16>
    %cst_54 = arith.constant dense<0.000000e+00> : vector<16x512xf32>
    %252 = tpu.matmul %250, %251, %cst_54 {dimension_numbers = #tpu.dot_dimension_numbers<[1], [0], [0], [1], [0, 0, 1, 1], [], []>} : vector<16x128xbf16>, vector<128x512xbf16>, vector<16x512xf32> -> vector<16x512xf32>
    %c0_55 = arith.constant 0 : index
    %c0_56 = arith.constant 0 : index
    %253 = vector.load %arg6[%c0_55, %c0_56] : memref<1x512xf32, #tpu.memory_space<vmem>>, vector<1x512xf32>
    %254 = vector.broadcast %253 : vector<1x512xf32> to vector<16x512xf32>
    %255 = arith.addf %252, %254 : vector<16x512xf32>
    %c0_57 = arith.constant 0 : index
    %c0_58 = arith.constant 0 : index
    %256 = vector.load %arg5[%c0_57, %c0_58] : memref<128x512xbf16, #tpu.memory_space<vmem>>, vector<128x512xbf16>
    %cst_59 = arith.constant 0.000000e+00 : f32
    %257 = vector.broadcast %cst_59 : f32 to vector<2x128xf32>
    %cst_60 = arith.constant 0.000000e+00 : f32
    %258 = vector.broadcast %cst_60 : f32 to vector<2x128xf32>
    %259 = vector.extract_strided_slice %255 {offsets = [0, 0], sizes = [2, 512], strides = [1, 1]} : vector<16x512xf32> to vector<2x512xf32>
    %260 = arith.truncf %257 : vector<2x128xf32> to vector<2x128xbf16>
    %cst_61 = arith.constant dense<0.000000e+00> : vector<2x512xf32>
    %261 = tpu.matmul %260, %256, %cst_61 {dimension_numbers = #tpu.dot_dimension_numbers<[1], [0], [0], [1], [0, 0, 1, 1], [], []>} : vector<2x128xbf16>, vector<128x512xbf16>, vector<2x512xf32> -> vector<2x512xf32>
    %262 = arith.addf %259, %261 : vector<2x512xf32>
    %263 = vector.extract_strided_slice %262 {offsets = [0, 0], sizes = [2, 128], strides = [1, 1]} : vector<2x512xf32> to vector<2x128xf32>
    %264 = arith.negf %263 : vector<2x128xf32>
    %265 = math.exp %264 : vector<2x128xf32>
    %cst_62 = arith.constant 1.000000e+00 : f32
    %266 = vector.broadcast %cst_62 : f32 to vector<2x128xf32>
    %267 = arith.addf %266, %265 : vector<2x128xf32>
    %268 = arith.divf %266, %267 : vector<2x128xf32>
    %269 = vector.extract_strided_slice %262 {offsets = [0, 128], sizes = [2, 128], strides = [1, 1]} : vector<2x512xf32> to vector<2x128xf32>
    %270 = arith.negf %269 : vector<2x128xf32>
    %271 = math.exp %270 : vector<2x128xf32>
    %cst_63 = arith.constant 1.000000e+00 : f32
    %272 = vector.broadcast %cst_63 : f32 to vector<2x128xf32>
    %273 = arith.addf %272, %271 : vector<2x128xf32>
    %274 = arith.divf %272, %273 : vector<2x128xf32>
    %275 = vector.extract_strided_slice %262 {offsets = [0, 256], sizes = [2, 128], strides = [1, 1]} : vector<2x512xf32> to vector<2x128xf32>
    %276 = math.tanh %275 : vector<2x128xf32>
    %277 = vector.extract_strided_slice %262 {offsets = [0, 384], sizes = [2, 128], strides = [1, 1]} : vector<2x512xf32> to vector<2x128xf32>
    %278 = arith.negf %277 : vector<2x128xf32>
    %279 = math.exp %278 : vector<2x128xf32>
    %cst_64 = arith.constant 1.000000e+00 : f32
    %280 = vector.broadcast %cst_64 : f32 to vector<2x128xf32>
    %281 = arith.addf %280, %279 : vector<2x128xf32>
    %282 = arith.divf %280, %281 : vector<2x128xf32>
    %283 = arith.mulf %274, %258 : vector<2x128xf32>
    %284 = arith.mulf %268, %276 : vector<2x128xf32>
    %285 = arith.addf %283, %284 : vector<2x128xf32>
    %286 = math.tanh %285 : vector<2x128xf32>
    %287 = arith.mulf %282, %286 : vector<2x128xf32>
    %288 = vector.extract_strided_slice %255 {offsets = [2, 0], sizes = [2, 512], strides = [1, 1]} : vector<16x512xf32> to vector<2x512xf32>
    %289 = arith.truncf %287 : vector<2x128xf32> to vector<2x128xbf16>
    %cst_65 = arith.constant dense<0.000000e+00> : vector<2x512xf32>
    %290 = tpu.matmul %289, %256, %cst_65 {dimension_numbers = #tpu.dot_dimension_numbers<[1], [0], [0], [1], [0, 0, 1, 1], [], []>} : vector<2x128xbf16>, vector<128x512xbf16>, vector<2x512xf32> -> vector<2x512xf32>
    %291 = arith.addf %288, %290 : vector<2x512xf32>
    %292 = vector.extract_strided_slice %291 {offsets = [0, 0], sizes = [2, 128], strides = [1, 1]} : vector<2x512xf32> to vector<2x128xf32>
    %293 = arith.negf %292 : vector<2x128xf32>
    %294 = math.exp %293 : vector<2x128xf32>
    %cst_66 = arith.constant 1.000000e+00 : f32
    %295 = vector.broadcast %cst_66 : f32 to vector<2x128xf32>
    %296 = arith.addf %295, %294 : vector<2x128xf32>
    %297 = arith.divf %295, %296 : vector<2x128xf32>
    %298 = vector.extract_strided_slice %291 {offsets = [0, 128], sizes = [2, 128], strides = [1, 1]} : vector<2x512xf32> to vector<2x128xf32>
    %299 = arith.negf %298 : vector<2x128xf32>
    %300 = math.exp %299 : vector<2x128xf32>
    %cst_67 = arith.constant 1.000000e+00 : f32
    %301 = vector.broadcast %cst_67 : f32 to vector<2x128xf32>
    %302 = arith.addf %301, %300 : vector<2x128xf32>
    %303 = arith.divf %301, %302 : vector<2x128xf32>
    %304 = vector.extract_strided_slice %291 {offsets = [0, 256], sizes = [2, 128], strides = [1, 1]} : vector<2x512xf32> to vector<2x128xf32>
    %305 = math.tanh %304 : vector<2x128xf32>
    %306 = vector.extract_strided_slice %291 {offsets = [0, 384], sizes = [2, 128], strides = [1, 1]} : vector<2x512xf32> to vector<2x128xf32>
    %307 = arith.negf %306 : vector<2x128xf32>
    %308 = math.exp %307 : vector<2x128xf32>
    %cst_68 = arith.constant 1.000000e+00 : f32
    %309 = vector.broadcast %cst_68 : f32 to vector<2x128xf32>
    %310 = arith.addf %309, %308 : vector<2x128xf32>
    %311 = arith.divf %309, %310 : vector<2x128xf32>
    %312 = arith.mulf %303, %285 : vector<2x128xf32>
    %313 = arith.mulf %297, %305 : vector<2x128xf32>
    %314 = arith.addf %312, %313 : vector<2x128xf32>
    %315 = math.tanh %314 : vector<2x128xf32>
    %316 = arith.mulf %311, %315 : vector<2x128xf32>
    %317 = vector.extract_strided_slice %255 {offsets = [4, 0], sizes = [2, 512], strides = [1, 1]} : vector<16x512xf32> to vector<2x512xf32>
    %318 = arith.truncf %316 : vector<2x128xf32> to vector<2x128xbf16>
    %cst_69 = arith.constant dense<0.000000e+00> : vector<2x512xf32>
    %319 = tpu.matmul %318, %256, %cst_69 {dimension_numbers = #tpu.dot_dimension_numbers<[1], [0], [0], [1], [0, 0, 1, 1], [], []>} : vector<2x128xbf16>, vector<128x512xbf16>, vector<2x512xf32> -> vector<2x512xf32>
    %320 = arith.addf %317, %319 : vector<2x512xf32>
    %321 = vector.extract_strided_slice %320 {offsets = [0, 0], sizes = [2, 128], strides = [1, 1]} : vector<2x512xf32> to vector<2x128xf32>
    %322 = arith.negf %321 : vector<2x128xf32>
    %323 = math.exp %322 : vector<2x128xf32>
    %cst_70 = arith.constant 1.000000e+00 : f32
    %324 = vector.broadcast %cst_70 : f32 to vector<2x128xf32>
    %325 = arith.addf %324, %323 : vector<2x128xf32>
    %326 = arith.divf %324, %325 : vector<2x128xf32>
    %327 = vector.extract_strided_slice %320 {offsets = [0, 128], sizes = [2, 128], strides = [1, 1]} : vector<2x512xf32> to vector<2x128xf32>
    %328 = arith.negf %327 : vector<2x128xf32>
    %329 = math.exp %328 : vector<2x128xf32>
    %cst_71 = arith.constant 1.000000e+00 : f32
    %330 = vector.broadcast %cst_71 : f32 to vector<2x128xf32>
    %331 = arith.addf %330, %329 : vector<2x128xf32>
    %332 = arith.divf %330, %331 : vector<2x128xf32>
    %333 = vector.extract_strided_slice %320 {offsets = [0, 256], sizes = [2, 128], strides = [1, 1]} : vector<2x512xf32> to vector<2x128xf32>
    %334 = math.tanh %333 : vector<2x128xf32>
    %335 = vector.extract_strided_slice %320 {offsets = [0, 384], sizes = [2, 128], strides = [1, 1]} : vector<2x512xf32> to vector<2x128xf32>
    %336 = arith.negf %335 : vector<2x128xf32>
    %337 = math.exp %336 : vector<2x128xf32>
    %cst_72 = arith.constant 1.000000e+00 : f32
    %338 = vector.broadcast %cst_72 : f32 to vector<2x128xf32>
    %339 = arith.addf %338, %337 : vector<2x128xf32>
    %340 = arith.divf %338, %339 : vector<2x128xf32>
    %341 = arith.mulf %332, %314 : vector<2x128xf32>
    %342 = arith.mulf %326, %334 : vector<2x128xf32>
    %343 = arith.addf %341, %342 : vector<2x128xf32>
    %344 = math.tanh %343 : vector<2x128xf32>
    %345 = arith.mulf %340, %344 : vector<2x128xf32>
    %346 = vector.extract_strided_slice %255 {offsets = [6, 0], sizes = [2, 512], strides = [1, 1]} : vector<16x512xf32> to vector<2x512xf32>
    %347 = arith.truncf %345 : vector<2x128xf32> to vector<2x128xbf16>
    %cst_73 = arith.constant dense<0.000000e+00> : vector<2x512xf32>
    %348 = tpu.matmul %347, %256, %cst_73 {dimension_numbers = #tpu.dot_dimension_numbers<[1], [0], [0], [1], [0, 0, 1, 1], [], []>} : vector<2x128xbf16>, vector<128x512xbf16>, vector<2x512xf32> -> vector<2x512xf32>
    %349 = arith.addf %346, %348 : vector<2x512xf32>
    %350 = vector.extract_strided_slice %349 {offsets = [0, 0], sizes = [2, 128], strides = [1, 1]} : vector<2x512xf32> to vector<2x128xf32>
    %351 = arith.negf %350 : vector<2x128xf32>
    %352 = math.exp %351 : vector<2x128xf32>
    %cst_74 = arith.constant 1.000000e+00 : f32
    %353 = vector.broadcast %cst_74 : f32 to vector<2x128xf32>
    %354 = arith.addf %353, %352 : vector<2x128xf32>
    %355 = arith.divf %353, %354 : vector<2x128xf32>
    %356 = vector.extract_strided_slice %349 {offsets = [0, 128], sizes = [2, 128], strides = [1, 1]} : vector<2x512xf32> to vector<2x128xf32>
    %357 = arith.negf %356 : vector<2x128xf32>
    %358 = math.exp %357 : vector<2x128xf32>
    %cst_75 = arith.constant 1.000000e+00 : f32
    %359 = vector.broadcast %cst_75 : f32 to vector<2x128xf32>
    %360 = arith.addf %359, %358 : vector<2x128xf32>
    %361 = arith.divf %359, %360 : vector<2x128xf32>
    %362 = vector.extract_strided_slice %349 {offsets = [0, 256], sizes = [2, 128], strides = [1, 1]} : vector<2x512xf32> to vector<2x128xf32>
    %363 = math.tanh %362 : vector<2x128xf32>
    %364 = vector.extract_strided_slice %349 {offsets = [0, 384], sizes = [2, 128], strides = [1, 1]} : vector<2x512xf32> to vector<2x128xf32>
    %365 = arith.negf %364 : vector<2x128xf32>
    %366 = math.exp %365 : vector<2x128xf32>
    %cst_76 = arith.constant 1.000000e+00 : f32
    %367 = vector.broadcast %cst_76 : f32 to vector<2x128xf32>
    %368 = arith.addf %367, %366 : vector<2x128xf32>
    %369 = arith.divf %367, %368 : vector<2x128xf32>
    %370 = arith.mulf %361, %343 : vector<2x128xf32>
    %371 = arith.mulf %355, %363 : vector<2x128xf32>
    %372 = arith.addf %370, %371 : vector<2x128xf32>
    %373 = math.tanh %372 : vector<2x128xf32>
    %374 = arith.mulf %369, %373 : vector<2x128xf32>
    %375 = vector.extract_strided_slice %255 {offsets = [8, 0], sizes = [2, 512], strides = [1, 1]} : vector<16x512xf32> to vector<2x512xf32>
    %376 = arith.truncf %374 : vector<2x128xf32> to vector<2x128xbf16>
    %cst_77 = arith.constant dense<0.000000e+00> : vector<2x512xf32>
    %377 = tpu.matmul %376, %256, %cst_77 {dimension_numbers = #tpu.dot_dimension_numbers<[1], [0], [0], [1], [0, 0, 1, 1], [], []>} : vector<2x128xbf16>, vector<128x512xbf16>, vector<2x512xf32> -> vector<2x512xf32>
    %378 = arith.addf %375, %377 : vector<2x512xf32>
    %379 = vector.extract_strided_slice %378 {offsets = [0, 0], sizes = [2, 128], strides = [1, 1]} : vector<2x512xf32> to vector<2x128xf32>
    %380 = arith.negf %379 : vector<2x128xf32>
    %381 = math.exp %380 : vector<2x128xf32>
    %cst_78 = arith.constant 1.000000e+00 : f32
    %382 = vector.broadcast %cst_78 : f32 to vector<2x128xf32>
    %383 = arith.addf %382, %381 : vector<2x128xf32>
    %384 = arith.divf %382, %383 : vector<2x128xf32>
    %385 = vector.extract_strided_slice %378 {offsets = [0, 128], sizes = [2, 128], strides = [1, 1]} : vector<2x512xf32> to vector<2x128xf32>
    %386 = arith.negf %385 : vector<2x128xf32>
    %387 = math.exp %386 : vector<2x128xf32>
    %cst_79 = arith.constant 1.000000e+00 : f32
    %388 = vector.broadcast %cst_79 : f32 to vector<2x128xf32>
    %389 = arith.addf %388, %387 : vector<2x128xf32>
    %390 = arith.divf %388, %389 : vector<2x128xf32>
    %391 = vector.extract_strided_slice %378 {offsets = [0, 256], sizes = [2, 128], strides = [1, 1]} : vector<2x512xf32> to vector<2x128xf32>
    %392 = math.tanh %391 : vector<2x128xf32>
    %393 = vector.extract_strided_slice %378 {offsets = [0, 384], sizes = [2, 128], strides = [1, 1]} : vector<2x512xf32> to vector<2x128xf32>
    %394 = arith.negf %393 : vector<2x128xf32>
    %395 = math.exp %394 : vector<2x128xf32>
    %cst_80 = arith.constant 1.000000e+00 : f32
    %396 = vector.broadcast %cst_80 : f32 to vector<2x128xf32>
    %397 = arith.addf %396, %395 : vector<2x128xf32>
    %398 = arith.divf %396, %397 : vector<2x128xf32>
    %399 = arith.mulf %390, %372 : vector<2x128xf32>
    %400 = arith.mulf %384, %392 : vector<2x128xf32>
    %401 = arith.addf %399, %400 : vector<2x128xf32>
    %402 = math.tanh %401 : vector<2x128xf32>
    %403 = arith.mulf %398, %402 : vector<2x128xf32>
    %404 = vector.extract_strided_slice %255 {offsets = [10, 0], sizes = [2, 512], strides = [1, 1]} : vector<16x512xf32> to vector<2x512xf32>
    %405 = arith.truncf %403 : vector<2x128xf32> to vector<2x128xbf16>
    %cst_81 = arith.constant dense<0.000000e+00> : vector<2x512xf32>
    %406 = tpu.matmul %405, %256, %cst_81 {dimension_numbers = #tpu.dot_dimension_numbers<[1], [0], [0], [1], [0, 0, 1, 1], [], []>} : vector<2x128xbf16>, vector<128x512xbf16>, vector<2x512xf32> -> vector<2x512xf32>
    %407 = arith.addf %404, %406 : vector<2x512xf32>
    %408 = vector.extract_strided_slice %407 {offsets = [0, 0], sizes = [2, 128], strides = [1, 1]} : vector<2x512xf32> to vector<2x128xf32>
    %409 = arith.negf %408 : vector<2x128xf32>
    %410 = math.exp %409 : vector<2x128xf32>
    %cst_82 = arith.constant 1.000000e+00 : f32
    %411 = vector.broadcast %cst_82 : f32 to vector<2x128xf32>
    %412 = arith.addf %411, %410 : vector<2x128xf32>
    %413 = arith.divf %411, %412 : vector<2x128xf32>
    %414 = vector.extract_strided_slice %407 {offsets = [0, 128], sizes = [2, 128], strides = [1, 1]} : vector<2x512xf32> to vector<2x128xf32>
    %415 = arith.negf %414 : vector<2x128xf32>
    %416 = math.exp %415 : vector<2x128xf32>
    %cst_83 = arith.constant 1.000000e+00 : f32
    %417 = vector.broadcast %cst_83 : f32 to vector<2x128xf32>
    %418 = arith.addf %417, %416 : vector<2x128xf32>
    %419 = arith.divf %417, %418 : vector<2x128xf32>
    %420 = vector.extract_strided_slice %407 {offsets = [0, 256], sizes = [2, 128], strides = [1, 1]} : vector<2x512xf32> to vector<2x128xf32>
    %421 = math.tanh %420 : vector<2x128xf32>
    %422 = vector.extract_strided_slice %407 {offsets = [0, 384], sizes = [2, 128], strides = [1, 1]} : vector<2x512xf32> to vector<2x128xf32>
    %423 = arith.negf %422 : vector<2x128xf32>
    %424 = math.exp %423 : vector<2x128xf32>
    %cst_84 = arith.constant 1.000000e+00 : f32
    %425 = vector.broadcast %cst_84 : f32 to vector<2x128xf32>
    %426 = arith.addf %425, %424 : vector<2x128xf32>
    %427 = arith.divf %425, %426 : vector<2x128xf32>
    %428 = arith.mulf %419, %401 : vector<2x128xf32>
    %429 = arith.mulf %413, %421 : vector<2x128xf32>
    %430 = arith.addf %428, %429 : vector<2x128xf32>
    %431 = math.tanh %430 : vector<2x128xf32>
    %432 = arith.mulf %427, %431 : vector<2x128xf32>
    %433 = vector.extract_strided_slice %255 {offsets = [12, 0], sizes = [2, 512], strides = [1, 1]} : vector<16x512xf32> to vector<2x512xf32>
    %434 = arith.truncf %432 : vector<2x128xf32> to vector<2x128xbf16>
    %cst_85 = arith.constant dense<0.000000e+00> : vector<2x512xf32>
    %435 = tpu.matmul %434, %256, %cst_85 {dimension_numbers = #tpu.dot_dimension_numbers<[1], [0], [0], [1], [0, 0, 1, 1], [], []>} : vector<2x128xbf16>, vector<128x512xbf16>, vector<2x512xf32> -> vector<2x512xf32>
    %436 = arith.addf %433, %435 : vector<2x512xf32>
    %437 = vector.extract_strided_slice %436 {offsets = [0, 0], sizes = [2, 128], strides = [1, 1]} : vector<2x512xf32> to vector<2x128xf32>
    %438 = arith.negf %437 : vector<2x128xf32>
    %439 = math.exp %438 : vector<2x128xf32>
    %cst_86 = arith.constant 1.000000e+00 : f32
    %440 = vector.broadcast %cst_86 : f32 to vector<2x128xf32>
    %441 = arith.addf %440, %439 : vector<2x128xf32>
    %442 = arith.divf %440, %441 : vector<2x128xf32>
    %443 = vector.extract_strided_slice %436 {offsets = [0, 128], sizes = [2, 128], strides = [1, 1]} : vector<2x512xf32> to vector<2x128xf32>
    %444 = arith.negf %443 : vector<2x128xf32>
    %445 = math.exp %444 : vector<2x128xf32>
    %cst_87 = arith.constant 1.000000e+00 : f32
    %446 = vector.broadcast %cst_87 : f32 to vector<2x128xf32>
    %447 = arith.addf %446, %445 : vector<2x128xf32>
    %448 = arith.divf %446, %447 : vector<2x128xf32>
    %449 = vector.extract_strided_slice %436 {offsets = [0, 256], sizes = [2, 128], strides = [1, 1]} : vector<2x512xf32> to vector<2x128xf32>
    %450 = math.tanh %449 : vector<2x128xf32>
    %451 = vector.extract_strided_slice %436 {offsets = [0, 384], sizes = [2, 128], strides = [1, 1]} : vector<2x512xf32> to vector<2x128xf32>
    %452 = arith.negf %451 : vector<2x128xf32>
    %453 = math.exp %452 : vector<2x128xf32>
    %cst_88 = arith.constant 1.000000e+00 : f32
    %454 = vector.broadcast %cst_88 : f32 to vector<2x128xf32>
    %455 = arith.addf %454, %453 : vector<2x128xf32>
    %456 = arith.divf %454, %455 : vector<2x128xf32>
    %457 = arith.mulf %448, %430 : vector<2x128xf32>
    %458 = arith.mulf %442, %450 : vector<2x128xf32>
    %459 = arith.addf %457, %458 : vector<2x128xf32>
    %460 = math.tanh %459 : vector<2x128xf32>
    %461 = arith.mulf %456, %460 : vector<2x128xf32>
    %462 = vector.extract_strided_slice %255 {offsets = [14, 0], sizes = [2, 512], strides = [1, 1]} : vector<16x512xf32> to vector<2x512xf32>
    %463 = arith.truncf %461 : vector<2x128xf32> to vector<2x128xbf16>
    %cst_89 = arith.constant dense<0.000000e+00> : vector<2x512xf32>
    %464 = tpu.matmul %463, %256, %cst_89 {dimension_numbers = #tpu.dot_dimension_numbers<[1], [0], [0], [1], [0, 0, 1, 1], [], []>} : vector<2x128xbf16>, vector<128x512xbf16>, vector<2x512xf32> -> vector<2x512xf32>
    %465 = arith.addf %462, %464 : vector<2x512xf32>
    %466 = vector.extract_strided_slice %465 {offsets = [0, 0], sizes = [2, 128], strides = [1, 1]} : vector<2x512xf32> to vector<2x128xf32>
    %467 = arith.negf %466 : vector<2x128xf32>
    %468 = math.exp %467 : vector<2x128xf32>
    %cst_90 = arith.constant 1.000000e+00 : f32
    %469 = vector.broadcast %cst_90 : f32 to vector<2x128xf32>
    %470 = arith.addf %469, %468 : vector<2x128xf32>
    %471 = arith.divf %469, %470 : vector<2x128xf32>
    %472 = vector.extract_strided_slice %465 {offsets = [0, 128], sizes = [2, 128], strides = [1, 1]} : vector<2x512xf32> to vector<2x128xf32>
    %473 = arith.negf %472 : vector<2x128xf32>
    %474 = math.exp %473 : vector<2x128xf32>
    %cst_91 = arith.constant 1.000000e+00 : f32
    %475 = vector.broadcast %cst_91 : f32 to vector<2x128xf32>
    %476 = arith.addf %475, %474 : vector<2x128xf32>
    %477 = arith.divf %475, %476 : vector<2x128xf32>
    %478 = vector.extract_strided_slice %465 {offsets = [0, 256], sizes = [2, 128], strides = [1, 1]} : vector<2x512xf32> to vector<2x128xf32>
    %479 = math.tanh %478 : vector<2x128xf32>
    %480 = vector.extract_strided_slice %465 {offsets = [0, 384], sizes = [2, 128], strides = [1, 1]} : vector<2x512xf32> to vector<2x128xf32>
    %481 = arith.negf %480 : vector<2x128xf32>
    %482 = math.exp %481 : vector<2x128xf32>
    %cst_92 = arith.constant 1.000000e+00 : f32
    %483 = vector.broadcast %cst_92 : f32 to vector<2x128xf32>
    %484 = arith.addf %483, %482 : vector<2x128xf32>
    %485 = arith.divf %483, %484 : vector<2x128xf32>
    %486 = arith.mulf %477, %459 : vector<2x128xf32>
    %487 = arith.mulf %471, %479 : vector<2x128xf32>
    %488 = arith.addf %486, %487 : vector<2x128xf32>
    %489 = math.tanh %488 : vector<2x128xf32>
    %490 = arith.mulf %485, %489 : vector<2x128xf32>
    %c0_93 = arith.constant 0 : index
    %c0_94 = arith.constant 0 : index
    %491 = vector.load %arg7[%c0_93, %c0_94] : memref<2x128xf32, #tpu.memory_space<vmem>>, vector<2x128xf32>
    tpu.vector_store %arg7[%c0_93, %c0_94], %490 {strides = array<i32>} : memref<2x128xf32, #tpu.memory_space<vmem>>, vector<2x128xf32>,
    return
  }
}

</mosaic_0001>

<llo_original>
// kernel: _forward_impl.1
$region0: #{_forward_impl.1}
  #allocation0 [shape = 'u32[]', space=smem, size = 0x4, offset = 0x4, fixed_abs, tag = 'smem constant byte address 0x4 - core index']
  #allocation1 [shape = 'u32[72,128]{1,0:T(1,128)}', space=vmem, size = 0x9000, scoped, tag = 'internal scratch']
  #allocation2 [shape = 'f32[16,128]{1,0:T(8,128)}', space=vmem, size = 0x2000, scoped, tag = 'scratch operand']
  %s0 = inlined_call_operand.vmem [shape: bf16[16,4], index: 0, kind: input, shape index: {}]
  %s1 = inlined_call_operand.vmem [shape: bf16[4,512], index: 1, kind: input, shape index: {}]
  %s2 = inlined_call_operand.hbm [shape: bf16[128,512], index: 2, kind: input, shape index: {}]
  %s3 = inlined_call_operand.vmem [shape: f32[1,512], index: 3, kind: input, shape index: {}]
  %s4 = inlined_call_operand.hbm [shape: bf16[128,512], index: 4, kind: input, shape index: {}]
  %s5 = inlined_call_operand.hbm [shape: bf16[128,512], index: 5, kind: input, shape index: {}]
  %s6 = inlined_call_operand.vmem [shape: f32[1,512], index: 6, kind: input, shape index: {}]
  %s7 = inlined_call_operand.hbm [shape: f32[2,128], index: 7, kind: output, shape index: {}]
  %s8 = sld [smem:[#allocation0]]
  $region50: #{_forward_impl.1} parent=0
    _
  %s10 = ssub.s32 1, %s8
  %s11 = scalar_select 0, %s10, %s8
  $region1: #{_forward_impl.1} parent=0
    #allocation3 [shape = 'u8[131072]{0}', space=vmem, size = 0x20000, scoped, tag = 'input window, operand 2, single buffered']
    #allocation4 [shape = 's32[1]{0}', space=sflag, size = 0x4, scoped, tag = 'scoped memory for _forward_impl.1']
    #allocation5 [shape = 's32[1]{0}', space=sflag, size = 0x4, scoped, tag = 'scoped memory for _forward_impl.1']
    #allocation6 [shape = 'u8[131072]{0}', space=vmem, size = 0x20000, scoped, tag = 'input window, operand 4, single buffered']
    #allocation7 [shape = 's32[1]{0}', space=sflag, size = 0x4, scoped, tag = 'scoped memory for _forward_impl.1']
    #allocation8 [shape = 'u8[131072]{0}', space=vmem, size = 0x20000, scoped, tag = 'input window, operand 5, single buffered']
    #allocation9 [shape = 'u8[1024]{0}', space=vmem, size = 0x400, scoped, tag = 'output window, operand 0, single buffered']
    %12 = vsyncpa [#allocation4], 0
    %13 = vsyncpa [#allocation7], 0
    %14 = vsyncpa [#allocation5], 0
    // Predicated region
    $region2: #{_forward_impl.1} parent=1 // pred_check
      _
    $region3: #{_forward_impl.1} parent=1 // pred_check_branch
      %16 = sbr.rel (0) target = $region5
    $region4: #{_forward_impl.1} parent=1 // pred_region
      _
    $region5: #{_forward_impl.1} parent=1 // pred_fallthru
      _
    // Predicated region
    $region6: #{_forward_impl.1} parent=1 // pred_check
      _
    $region7: #{_forward_impl.1} parent=1 // pred_check_branch
      %18 = sbr.rel (0) target = $region9
    $region8: #{_forward_impl.1} parent=1 // pred_region
      _
    $region9: #{_forward_impl.1} parent=1 // pred_fallthru
      _
    // Predicated region
    $region10: #{_forward_impl.1} parent=1 // pred_check
      _
    $region11: #{_forward_impl.1} parent=1 // pred_check_branch
      %20 = sbr.rel (0) target = $region13
    $region12: #{_forward_impl.1} parent=1 // pred_region
      %22 = vsyncadd [#allocation4], 0
      %s23 = sshll.u32 %s2, 4
      %s24 = int_to_ptr.hbm [resolvable:$true] %s23
      %s25 = sshll.u32 [#allocation3], 4
      %s26 = int_to_ptr.vmem [resolvable:$true] %s25
      %31 = dma.hbm_to_vmem [thread:$0]  %s24, 4096, %s26, [#allocation4], 256, 256, 16
    $region13: #{_forward_impl.1} parent=1 // pred_fallthru
      _
    // Predicated region
    $region14: #{_forward_impl.1} parent=1 // pred_check
      _
    $region15: #{_forward_impl.1} parent=1 // pred_check_branch
      %33 = sbr.rel (0) target = $region17
    $region16: #{_forward_impl.1} parent=1 // pred_region
      _
    $region17: #{_forward_impl.1} parent=1 // pred_fallthru
      _
    // Predicated region
    $region18: #{_forward_impl.1} parent=1 // pred_check
      _
    $region19: #{_forward_impl.1} parent=1 // pred_check_branch
      %35 = sbr.rel (0) target = $region21
    $region20: #{_forward_impl.1} parent=1 // pred_region
      %37 = vsyncadd [#allocation7], 0
      %s38 = sshll.u32 %s4, 4
      %s39 = int_to_ptr.hbm [resolvable:$true] %s38
      %s40 = sshll.u32 [#allocation6], 4
      %s41 = int_to_ptr.vmem [resolvable:$true] %s40
      %46 = dma.hbm_to_vmem [thread:$0]  %s39, 4096, %s41, [#allocation7], 256, 256, 16
    $region21: #{_forward_impl.1} parent=1 // pred_fallthru
      _
    // Predicated region
    $region22: #{_forward_impl.1} parent=1 // pred_check
      _
    $region23: #{_forward_impl.1} parent=1 // pred_check_branch
      %48 = sbr.rel (0) target = $region25
    $region24: #{_forward_impl.1} parent=1 // pred_region
      %50 = vsyncadd [#allocation7], 0
      %s51 = sshll.u32 %s5, 4
      %s52 = int_to_ptr.hbm [resolvable:$true] %s51
      %s53 = sshll.u32 [#allocation8], 4
      %s54 = int_to_ptr.vmem [resolvable:$true] %s53
      %59 = dma.hbm_to_vmem [thread:$0]  %s52, 4096, %s54, [#allocation7], 256, 256, 16
    $region25: #{_forward_impl.1} parent=1 // pred_fallthru
      _
    // Predicated region
    $region26: #{_forward_impl.1} parent=1 // pred_check
      _
    $region27: #{_forward_impl.1} parent=1 // pred_check_branch
      %61 = sbr.rel (0) target = $region29
    $region28: #{_forward_impl.1} parent=1 // pred_region
      _
    $region29: #{_forward_impl.1} parent=1 // pred_fallthru
      _
    // Predicated region
    $region30: #{_forward_impl.1} parent=1 // pred_check
      _
    $region31: #{_forward_impl.1} parent=1 // pred_check_branch
      %63 = sbr.rel (0) target = $region33
    $region32: #{_forward_impl.1} parent=1 // pred_region
      %65 = dma.done [#allocation4], 4096
    $region33: #{_forward_impl.1} parent=1 // pred_fallthru
      _
    // Predicated region
    $region34: #{_forward_impl.1} parent=1 // pred_check
      _
    $region35: #{_forward_impl.1} parent=1 // pred_check_branch
      %67 = sbr.rel (0) target = $region37
    $region36: #{_forward_impl.1} parent=1 // pred_region
      %69 = dma.done [#allocation7], 4096
    $region37: #{_forward_impl.1} parent=1 // pred_fallthru
      _
    // Predicated region
    $region38: #{_forward_impl.1} parent=1 // pred_check
      _
    $region39: #{_forward_impl.1} parent=1 // pred_check_branch
      %71 = sbr.rel (0) target = $region41
    $region40: #{_forward_impl.1} parent=1 // pred_region
      %73 = dma.done [#allocation7], 4096
    $region41: #{_forward_impl.1} parent=1 // pred_fallthru
      _
    %v75 = vld [vmem:[%s0] sm:$0xf]
    %v76 = vld [vmem:[%s0 + $0x4] sm:$0xf]
    %v77 = vld [vmem:[%s1] sm:$0xff]
    %v78 = vld [vmem:[%s3] sm:$0xf]
    %v80 = vperm.slane %v78, 0
    %v81 = vperm.slane %v78, 1
    %v82 = vperm.slane %v78, 2
    %v83 = vperm.slane %v78, 3
    %v90 = vunpack.c.l.b16 %v75
    %v91 = vunpack.c.l.b16 %v76
    %v92 = vpack.c.b16 %v91, %v90
    %94 = vst [vmem:[#allocation1] ss:$4 sm:$0xff] %v77
    %v95 = vld.sshfl [vmem:[#allocation1] sm:$0xff pattern:$0x73625140]
    %v96 = vld.sshfl [vmem:[#allocation1 + $0x8] sm:$0xff pattern:$0x73625140]
    %v97 = vld.sshfl [vmem:[#allocation1 + $0x10] sm:$0xff pattern:$0x73625140]
    %v98 = vld.sshfl [vmem:[#allocation1 + $0x18] sm:$0xff pattern:$0x73625140]
    %vm99 = vcmask 31744
    %v101 = vsel %vm99, %v92, 0
    %vm103 = vcmask 1041408
    %v104 = vsel %vm103, %v95, 0
    %v106 = vsel %vm103, %v96, 0
    %v108 = vsel %vm103, %v97, 0
    %v110 = vsel %vm103, %v98, 0
    %112 = vmatpush.bf16.msra.mxu0 0
    %113 = vmatpush.bf16.msra.mxu0 0
    %114 = vmatpush.bf16.msra.mxu0 0
    %115 = vmatpush.bf16.msra.mxu0 0
    %116 = vmatpush.bf16.msra.mxu0 0
    %117 = vmatpush.bf16.msra.mxu0 0
    %118 = vmatpush.bf16.msra.mxu0 0
    %119 = vmatpush.bf16.msra.mxu0 %v104
    %120 = vmatmul.bf16.gmra.mxu0 %v101
    %v121 = vpop.f32.mrf.mxu0
    %v122 = vadd.f32 %v80, %v121
    %v123 = vpop.f32.mrf.mxu0
    %v124 = vadd.f32 %v80, %v123
    %125 = vdwg.mxu0
    %126 = vmatpush.bf16.msra.mxu0 0
    %127 = vmatpush.bf16.msra.mxu0 0
    %128 = vmatpush.bf16.msra.mxu0 0
    %129 = vmatpush.bf16.msra.mxu0 0
    %130 = vmatpush.bf16.msra.mxu0 0
    %131 = vmatpush.bf16.msra.mxu0 0
    %132 = vmatpush.bf16.msra.mxu0 0
    %133 = vmatpush.bf16.msra.mxu0 %v106
    %134 = vmatmul.bf16.gmra.mxu0 %v101
    %v135 = vpop.f32.mrf.mxu0
    %v136 = vadd.f32 %v81, %v135
    %v137 = vpop.f32.mrf.mxu0
    %v138 = vadd.f32 %v81, %v137
    %139 = vdwg.mxu0
    %140 = vmatpush.bf16.msra.mxu0 0
    %141 = vmatpush.bf16.msra.mxu0 0
    %142 = vmatpush.bf16.msra.mxu0 0
    %143 = vmatpush.bf16.msra.mxu0 0
    %144 = vmatpush.bf16.msra.mxu0 0
    %145 = vmatpush.bf16.msra.mxu0 0
    %146 = vmatpush.bf16.msra.mxu0 0
    %147 = vmatpush.bf16.msra.mxu0 %v108
    %148 = vmatmul.bf16.gmra.mxu0 %v101
    %v149 = vpop.f32.mrf.mxu0
    %v150 = vadd.f32 %v82, %v149
    %v151 = vpop.f32.mrf.mxu0
    %v152 = vadd.f32 %v82, %v151
    %153 = vdwg.mxu0
    %154 = vmatpush.bf16.msra.mxu0 0
    %155 = vmatpush.bf16.msra.mxu0 0
    %156 = vmatpush.bf16.msra.mxu0 0
    %157 = vmatpush.bf16.msra.mxu0 0
    %158 = vmatpush.bf16.msra.mxu0 0
    %159 = vmatpush.bf16.msra.mxu0 0
    %160 = vmatpush.bf16.msra.mxu0 0
    %161 = vmatpush.bf16.msra.mxu0 %v110
    %162 = vmatmul.bf16.gmra.mxu0 %v101
    %v163 = vpop.f32.mrf.mxu0
    %v164 = vadd.f32 %v83, %v163
    %v165 = vpop.f32.mrf.mxu0
    %v166 = vadd.f32 %v83, %v165
    %167 = vdwg.mxu0
    %v168 = vld [vmem:[#allocation3] sm:$0xff]
    %v169 = vld [vmem:[#allocation3 + $0x8] sm:$0xff]
    %v170 = vld [vmem:[#allocation3 + $0x10] sm:$0xff]
    %v171 = vld [vmem:[#allocation3 + $0x18] sm:$0xff]
    %v172 = vld [vmem:[#allocation3 + $0x20] sm:$0xff]
    %v173 = vld [vmem:[#allocation3 + $0x28] sm:$0xff]
    %v174 = vld [vmem:[#allocation3 + $0x30] sm:$0xff]
    %v175 = vld [vmem:[#allocation3 + $0x38] sm:$0xff]
    %v176 = vld [vmem:[#allocation3 + $0x40] sm:$0xff]
    %v177 = vld [vmem:[#allocation3 + $0x48] sm:$0xff]
    %v178 = vld [vmem:[#allocation3 + $0x50] sm:$0xff]
    %v179 = vld [vmem:[#allocation3 + $0x58] sm:$0xff]
    %v180 = vld [vmem:[#allocation3 + $0x60] sm:$0xff]
    %v181 = vld [vmem:[#allocation3 + $0x68] sm:$0xff]
    %v182 = vld [vmem:[#allocation3 + $0x70] sm:$0xff]
    %v183 = vld [vmem:[#allocation3 + $0x78] sm:$0xff]
    %v184 = vld [vmem:[#allocation3 + $0x80] sm:$0xff]
    %v185 = vld [vmem:[#allocation3 + $0x88] sm:$0xff]
    %v186 = vld [vmem:[#allocation3 + $0x90] sm:$0xff]
    %v187 = vld [vmem:[#allocation3 + $0x98] sm:$0xff]
    %v188 = vld [vmem:[#allocation3 + $0xa0] sm:$0xff]
    %v189 = vld [vmem:[#allocation3 + $0xa8] sm:$0xff]
    %v190 = vld [vmem:[#allocation3 + $0xb0] sm:$0xff]
    %v191 = vld [vmem:[#allocation3 + $0xb8] sm:$0xff]
    %v192 = vld [vmem:[#allocation3 + $0xc0] sm:$0xff]
    %v193 = vld [vmem:[#allocation3 + $0xc8] sm:$0xff]
    %v194 = vld [vmem:[#allocation3 + $0xd0] sm:$0xff]
    %v195 = vld [vmem:[#allocation3 + $0xd8] sm:$0xff]
    %v196 = vld [vmem:[#allocation3 + $0xe0] sm:$0xff]
    %v197 = vld [vmem:[#allocation3 + $0xe8] sm:$0xff]
    %v198 = vld [vmem:[#allocation3 + $0xf0] sm:$0xff]
    %v199 = vld [vmem:[#allocation3 + $0xf8] sm:$0xff]
    %v232 = vunpack.c.l.b16 %v168
    %v233 = vunpack.c.h.b16 %v168
    %v234 = vunpack.c.l.b16 %v169
    %v235 = vunpack.c.h.b16 %v169
    %v236 = vunpack.c.l.b16 %v170
    %v237 = vunpack.c.h.b16 %v170
    %v238 = vunpack.c.l.b16 %v171
    %v239 = vunpack.c.h.b16 %v171
    %v240 = vunpack.c.l.b16 %v172
    %v241 = vunpack.c.h.b16 %v172
    %v242 = vunpack.c.l.b16 %v173
    %v243 = vunpack.c.h.b16 %v173
    %v244 = vunpack.c.l.b16 %v174
    %v245 = vunpack.c.h.b16 %v174
    %v246 = vunpack.c.l.b16 %v175
    %v247 = vunpack.c.h.b16 %v175
    %v248 = vunpack.c.l.b16 %v176
    %v249 = vunpack.c.h.b16 %v176
    %v250 = vunpack.c.l.b16 %v177
    %v251 = vunpack.c.h.b16 %v177
    %v252 = vunpack.c.l.b16 %v178
    %v253 = vunpack.c.h.b16 %v178
    %v254 = vunpack.c.l.b16 %v179
    %v255 = vunpack.c.h.b16 %v179
    %v256 = vunpack.c.l.b16 %v180
    %v257 = vunpack.c.h.b16 %v180
    %v258 = vunpack.c.l.b16 %v181
    %v259 = vunpack.c.h.b16 %v181
    %v260 = vunpack.c.l.b16 %v182
    %v261 = vunpack.c.h.b16 %v182
    %v262 = vunpack.c.l.b16 %v183
    %v263 = vunpack.c.h.b16 %v183
    %v264 = vunpack.c.l.b16 %v184
    %v265 = vunpack.c.h.b16 %v184
    %v266 = vunpack.c.l.b16 %v185
    %v267 = vunpack.c.h.b16 %v185
    %v268 = vunpack.c.l.b16 %v186
    %v269 = vunpack.c.h.b16 %v186
    %v270 = vunpack.c.l.b16 %v187
    %v271 = vunpack.c.h.b16 %v187
    %v272 = vunpack.c.l.b16 %v188
    %v273 = vunpack.c.h.b16 %v188
    %v274 = vunpack.c.l.b16 %v189
    %v275 = vunpack.c.h.b16 %v189
    %v276 = vunpack.c.l.b16 %v190
    %v277 = vunpack.c.h.b16 %v190
    %v278 = vunpack.c.l.b16 %v191
    %v279 = vunpack.c.h.b16 %v191
    %v280 = vunpack.c.l.b16 %v192
    %v281 = vunpack.c.h.b16 %v192
    %v282 = vunpack.c.l.b16 %v193
    %v283 = vunpack.c.h.b16 %v193
    %v284 = vunpack.c.l.b16 %v194
    %v285 = vunpack.c.h.b16 %v194
    %v286 = vunpack.c.l.b16 %v195
    %v287 = vunpack.c.h.b16 %v195
    %v288 = vunpack.c.l.b16 %v196
    %v289 = vunpack.c.h.b16 %v196
    %v290 = vunpack.c.l.b16 %v197
    %v291 = vunpack.c.h.b16 %v197
    %v292 = vunpack.c.l.b16 %v198
    %v293 = vunpack.c.h.b16 %v198
    %v294 = vunpack.c.l.b16 %v199
    %v295 = vunpack.c.h.b16 %v199
    %v296 = vpack.c.b16 %v236, %v232
    %v297 = vpack.c.b16 %v237, %v233
    %v298 = vpack.c.b16 %v238, %v234
    %v299 = vpack.c.b16 %v239, %v235
    %v300 = vpack.c.b16 %v244, %v240
    %v301 = vpack.c.b16 %v245, %v241
    %v302 = vpack.c.b16 %v246, %v242
    %v303 = vpack.c.b16 %v247, %v243
    %v304 = vpack.c.b16 %v252, %v248
    %v305 = vpack.c.b16 %v253, %v249
    %v306 = vpack.c.b16 %v254, %v250
    %v307 = vpack.c.b16 %v255, %v251
    %v308 = vpack.c.b16 %v260, %v256
    %v309 = vpack.c.b16 %v261, %v257
    %v310 = vpack.c.b16 %v262, %v258
    %v311 = vpack.c.b16 %v263, %v259
    %v312 = vpack.c.b16 %v268, %v264
    %v313 = vpack.c.b16 %v269, %v265
    %v314 = vpack.c.b16 %v270, %v266
    %v315 = vpack.c.b16 %v271, %v267
    %v316 = vpack.c.b16 %v276, %v272
    %v317 = vpack.c.b16 %v277, %v273
    %v318 = vpack.c.b16 %v278, %v274
    %v319 = vpack.c.b16 %v279, %v275
    %v320 = vpack.c.b16 %v284, %v280
    %v321 = vpack.c.b16 %v285, %v281
    %v322 = vpack.c.b16 %v286, %v282
    %v323 = vpack.c.b16 %v287, %v283
    %v324 = vpack.c.b16 %v292, %v288
    %v325 = vpack.c.b16 %v293, %v289
    %v326 = vpack.c.b16 %v294, %v290
    %v327 = vpack.c.b16 %v295, %v291
    %360 = vmatpush.bf16.msra.mxu0 %v324
    %361 = vmatpush.bf16.msra.mxu0 %v320
    %362 = vmatpush.bf16.msra.mxu0 %v316
    %363 = vmatpush.bf16.msra.mxu0 %v312
    %364 = vmatpush.bf16.msra.mxu0 %v308
    %365 = vmatpush.bf16.msra.mxu0 %v304
    %366 = vmatpush.bf16.msra.mxu0 %v300
    %367 = vmatpush.bf16.msra.mxu0 %v296
    %368 = vmatmul.bf16.gmra.mxu0 0
    %v369 = vpop.f32.mrf.mxu0
    %v370 = vadd.f32 0.0, %v369
    %v371 = vpop.f32.mrf.mxu0
    %372 = vdwg.mxu0
    %373 = vmatpush.bf16.msra.mxu0 %v325
    %374 = vmatpush.bf16.msra.mxu0 %v321
    %375 = vmatpush.bf16.msra.mxu0 %v317
    %376 = vmatpush.bf16.msra.mxu0 %v313
    %377 = vmatpush.bf16.msra.mxu0 %v309
    %378 = vmatpush.bf16.msra.mxu0 %v305
    %379 = vmatpush.bf16.msra.mxu0 %v301
    %380 = vmatpush.bf16.msra.mxu0 %v297
    %381 = vmatmul.bf16.gmra.mxu0 0
    %v382 = vpop.f32.mrf.mxu0
    %v383 = vadd.f32 0.0, %v382
    %v384 = vpop.f32.mrf.mxu0
    %385 = vdwg.mxu0
    %386 = vmatpush.bf16.msra.mxu0 %v326
    %387 = vmatpush.bf16.msra.mxu0 %v322
    %388 = vmatpush.bf16.msra.mxu0 %v318
    %389 = vmatpush.bf16.msra.mxu0 %v314
    %390 = vmatpush.bf16.msra.mxu0 %v310
    %391 = vmatpush.bf16.msra.mxu0 %v306
    %392 = vmatpush.bf16.msra.mxu0 %v302
    %393 = vmatpush.bf16.msra.mxu0 %v298
    %394 = vmatmul.bf16.gmra.mxu0 0
    %v395 = vpop.f32.mrf.mxu0
    %v396 = vadd.f32 0.0, %v395
    %v397 = vpop.f32.mrf.mxu0
    %398 = vdwg.mxu0
    %399 = vmatpush.bf16.msra.mxu0 %v327
    %400 = vmatpush.bf16.msra.mxu0 %v323
    %401 = vmatpush.bf16.msra.mxu0 %v319
    %402 = vmatpush.bf16.msra.mxu0 %v315
    %403 = vmatpush.bf16.msra.mxu0 %v311
    %404 = vmatpush.bf16.msra.mxu0 %v307
    %405 = vmatpush.bf16.msra.mxu0 %v303
    %406 = vmatpush.bf16.msra.mxu0 %v299
    %407 = vmatmul.bf16.gmra.mxu0 0
    %v408 = vpop.f32.mrf.mxu0
    %v409 = vadd.f32 0.0, %v408
    %v410 = vpop.f32.mrf.mxu0
    %411 = vdwg.mxu0
    %v412 = vadd.f32 %v122, %v370
    %v413 = vadd.f32 %v136, %v383
    %v414 = vadd.f32 %v150, %v396
    %v415 = vadd.f32 %v164, %v409
    %v416 = vxor.u32 %v412, 2147483648
    %v417 = vmul.f32 %v416, 1.442695
    %v418 = vpow.pop %v417
    %v419 = vadd.f32 %v418, 1.0
    %v420 = vrcp.pop %v419
    %v421 = vmul.f32 %v419, %v420
    %v422 = vsub.f32 1.0, %v421
    %v423 = vmul.f32 %v420, %v422
    %v424 = vadd.f32 %v420, %v423
    %vm425 = vweird.f32 %v419
    %vm426 = vweird.f32 %v420
    %vm427 = vmor %vm425, %vm426
    %v428 = vsel %vm427, %v420, %v424
    %v429 = vand.u32 2147483647, %v419
    %vm430 = vcmp.eq.f32.partialorder %v429, 8.507059e+37
    %v431 = vand.u32 %v419, 2147483648
    %v432 = vor.u32 1.1754944e-38, %v431
    %v433 = vsel %vm430, %v432, %v428
    %v434 = vmul.f32 1.0, %v433
    %v435 = vxor.u32 %v413, 2147483648
    %v436 = vmul.f32 %v435, 1.442695
    %v437 = vpow.pop %v436
    %v438 = vadd.f32 %v437, 1.0
    %v439 = vrcp.pop %v438
    %v440 = vmul.f32 %v438, %v439
    %v441 = vsub.f32 1.0, %v440
    %v442 = vmul.f32 %v439, %v441
    %v443 = vadd.f32 %v439, %v442
    %vm444 = vweird.f32 %v438
    %vm445 = vweird.f32 %v439
    %vm446 = vmor %vm444, %vm445
    %v447 = vsel %vm446, %v439, %v443
    %v448 = vand.u32 2147483647, %v438
    %vm449 = vcmp.eq.f32.partialorder %v448, 8.507059e+37
    %v450 = vand.u32 %v438, 2147483648
    %v451 = vor.u32 1.1754944e-38, %v450
    %v452 = vsel %vm449, %v451, %v447
    %v453 = vmul.f32 1.0, %v452
    %v454 = vtanh.pop %v414
    %v455 = vxor.u32 %v415, 2147483648
    %v456 = vmul.f32 %v455, 1.442695
    %v457 = vpow.pop %v456
    %v458 = vadd.f32 %v457, 1.0
    %v459 = vrcp.pop %v458
    %v460 = vmul.f32 %v458, %v459
    %v461 = vsub.f32 1.0, %v460
    %v462 = vmul.f32 %v459, %v461
    %v463 = vadd.f32 %v459, %v462
    %vm464 = vweird.f32 %v458
    %vm465 = vweird.f32 %v459
    %vm466 = vmor %vm464, %vm465
    %v467 = vsel %vm466, %v459, %v463
    %v468 = vand.u32 2147483647, %v458
    %vm469 = vcmp.eq.f32.partialorder %v468, 8.507059e+37
    %v470 = vand.u32 %v458, 2147483648
    %v471 = vor.u32 1.1754944e-38, %v470
    %v472 = vsel %vm469, %v471, %v467
    %v473 = vmul.f32 1.0, %v472
    %v474 = vmul.f32 %v453, 0.0
    %v475 = vmul.f32 %v434, %v454
    %v476 = vadd.f32 %v474, %v475
    %v477 = vtanh.pop %v476
    %v478 = vmul.f32 %v473, %v477
    %479 = vst [vmem:[#allocation2] sm:$0x3] %v478
    %v480 = vpack.c.bf16 %v478, %v478
    %481 = vmatpush.bf16.msra.mxu0 %v324
    %482 = vmatpush.bf16.msra.mxu0 %v320
    %483 = vmatpush.bf16.msra.mxu0 %v316
    %484 = vmatpush.bf16.msra.mxu0 %v312
    %485 = vmatpush.bf16.msra.mxu0 %v308
    %486 = vmatpush.bf16.msra.mxu0 %v304
    %487 = vmatpush.bf16.msra.mxu0 %v300
    %488 = vmatpush.bf16.msra.mxu0 %v296
    %489 = vmatmul.bf16.gmra.mxu0 %v480
    %v490 = vpop.f32.mrf.mxu0
    %v491 = vadd.f32 0.0, %v490
    %v492 = vpop.f32.mrf.mxu0
    %493 = vdwg.mxu0
    %494 = vmatpush.bf16.msra.mxu0 %v325
    %495 = vmatpush.bf16.msra.mxu0 %v321
    %496 = vmatpush.bf16.msra.mxu0 %v317
    %497 = vmatpush.bf16.msra.mxu0 %v313
    %498 = vmatpush.bf16.msra.mxu0 %v309
    %499 = vmatpush.bf16.msra.mxu0 %v305
    %500 = vmatpush.bf16.msra.mxu0 %v301
    %501 = vmatpush.bf16.msra.mxu0 %v297
    %502 = vmatmul.bf16.gmra.mxu0 %v480
    %v503 = vpop.f32.mrf.mxu0
    %v504 = vadd.f32 0.0, %v503
    %v505 = vpop.f32.mrf.mxu0
    %506 = vdwg.mxu0
    %507 = vmatpush.bf16.msra.mxu0 %v326
    %508 = vmatpush.bf16.msra.mxu0 %v322
    %509 = vmatpush.bf16.msra.mxu0 %v318
    %510 = vmatpush.bf16.msra.mxu0 %v314
    %511 = vmatpush.bf16.msra.mxu0 %v310
    %512 = vmatpush.bf16.msra.mxu0 %v306
    %513 = vmatpush.bf16.msra.mxu0 %v302
    %514 = vmatpush.bf16.msra.mxu0 %v298
    %515 = vmatmul.bf16.gmra.mxu0 %v480
    %v516 = vpop.f32.mrf.mxu0
    %v517 = vadd.f32 0.0, %v516
    %v518 = vpop.f32.mrf.mxu0
    %519 = vdwg.mxu0
    %520 = vmatpush.bf16.msra.mxu0 %v327
    %521 = vmatpush.bf16.msra.mxu0 %v323
    %522 = vmatpush.bf16.msra.mxu0 %v319
    %523 = vmatpush.bf16.msra.mxu0 %v315
    %524 = vmatpush.bf16.msra.mxu0 %v311
    %525 = vmatpush.bf16.msra.mxu0 %v307
    %526 = vmatpush.bf16.msra.mxu0 %v303
    %527 = vmatpush.bf16.msra.mxu0 %v299
    %528 = vmatmul.bf16.gmra.mxu0 %v480
    %v529 = vpop.f32.mrf.mxu0
    %v530 = vadd.f32 0.0, %v529
    %v531 = vpop.f32.mrf.mxu0
    %532 = vdwg.mxu0
    %v537 = vrot.slane %v491, 6
    %v538 = vrot.slane %v504, 6
    %v539 = vrot.slane %v517, 6
    %v540 = vrot.slane %v530, 6
    %v545 = vadd.f32 %v122, %v537
    %v546 = vadd.f32 %v136, %v538
    %v547 = vadd.f32 %v150, %v539
    %v548 = vadd.f32 %v164, %v540
    %v549 = vxor.u32 %v545, 2147483648
    %v550 = vmul.f32 %v549, 1.442695
    %v551 = vpow.pop %v550
    %v552 = vadd.f32 %v551, 1.0
    %v553 = vrcp.pop %v552
    %v554 = vmul.f32 %v552, %v553
    %v555 = vsub.f32 1.0, %v554
    %v556 = vmul.f32 %v553, %v555
    %v557 = vadd.f32 %v553, %v556
    %vm558 = vweird.f32 %v552
    %vm559 = vweird.f32 %v553
    %vm560 = vmor %vm558, %vm559
    %v561 = vsel %vm560, %v553, %v557
    %v562 = vand.u32 2147483647, %v552
    %vm563 = vcmp.eq.f32.partialorder %v562, 8.507059e+37
    %v564 = vand.u32 %v552, 2147483648
    %v565 = vor.u32 1.1754944e-38, %v564
    %v566 = vsel %vm563, %v565, %v561
    %v567 = vmul.f32 1.0, %v566
    %v568 = vxor.u32 %v546, 2147483648
    %v569 = vmul.f32 %v568, 1.442695
    %v570 = vpow.pop %v569
    %v571 = vadd.f32 %v570, 1.0
    %v572 = vrcp.pop %v571
    %v573 = vmul.f32 %v571, %v572
    %v574 = vsub.f32 1.0, %v573
    %v575 = vmul.f32 %v572, %v574
    %v576 = vadd.f32 %v572, %v575
    %vm577 = vweird.f32 %v571
    %vm578 = vweird.f32 %v572
    %vm579 = vmor %vm577, %vm578
    %v580 = vsel %vm579, %v572, %v576
    %v581 = vand.u32 2147483647, %v571
    %vm582 = vcmp.eq.f32.partialorder %v581, 8.507059e+37
    %v583 = vand.u32 %v571, 2147483648
    %v584 = vor.u32 1.1754944e-38, %v583
    %v585 = vsel %vm582, %v584, %v580
    %v586 = vmul.f32 1.0, %v585
    %v587 = vtanh.pop %v547
    %v588 = vxor.u32 %v548, 2147483648
    %v589 = vmul.f32 %v588, 1.442695
    %v590 = vpow.pop %v589
    %v591 = vadd.f32 %v590, 1.0
    %v592 = vrcp.pop %v591
    %v593 = vmul.f32 %v591, %v592
    %v594 = vsub.f32 1.0, %v593
    %v595 = vmul.f32 %v592, %v594
    %v596 = vadd.f32 %v592, %v595
    %vm597 = vweird.f32 %v591
    %vm598 = vweird.f32 %v592
    %vm599 = vmor %vm597, %vm598
    %v600 = vsel %vm599, %v592, %v596
    %v601 = vand.u32 2147483647, %v591
    %vm602 = vcmp.eq.f32.partialorder %v601, 8.507059e+37
    %v603 = vand.u32 %v591, 2147483648
    %v604 = vor.u32 1.1754944e-38, %v603
    %v605 = vsel %vm602, %v604, %v600
    %v606 = vmul.f32 1.0, %v605
    %v608 = vrot.slane %v476, 6
    %v610 = vmul.f32 %v586, %v608
    %v611 = vmul.f32 %v567, %v587
    %v612 = vadd.f32 %v610, %v611
    %v613 = vtanh.pop %v612
    %v614 = vmul.f32 %v606, %v613
    %615 = vst [vmem:[#allocation2] sm:$0xc] %v614
    %v616 = vpack.c.bf16 %v614, %v614
    %v618 = vrot.slane %v616, 1
    %620 = vmatpush.bf16.msra.mxu0 %v324
    %621 = vmatpush.bf16.msra.mxu0 %v320
    %622 = vmatpush.bf16.msra.mxu0 %v316
    %623 = vmatpush.bf16.msra.mxu0 %v312
    %624 = vmatpush.bf16.msra.mxu0 %v308
    %625 = vmatpush.bf16.msra.mxu0 %v304
    %626 = vmatpush.bf16.msra.mxu0 %v300
    %627 = vmatpush.bf16.msra.mxu0 %v296
    %628 = vmatmul.bf16.gmra.mxu0 %v618
    %v629 = vpop.f32.mrf.mxu0
    %v630 = vadd.f32 0.0, %v629
    %v631 = vpop.f32.mrf.mxu0
    %632 = vdwg.mxu0
    %633 = vmatpush.bf16.msra.mxu0 %v325
    %634 = vmatpush.bf16.msra.mxu0 %v321
    %635 = vmatpush.bf16.msra.mxu0 %v317
    %636 = vmatpush.bf16.msra.mxu0 %v313
    %637 = vmatpush.bf16.msra.mxu0 %v309
    %638 = vmatpush.bf16.msra.mxu0 %v305
    %639 = vmatpush.bf16.msra.mxu0 %v301
    %640 = vmatpush.bf16.msra.mxu0 %v297
    %641 = vmatmul.bf16.gmra.mxu0 %v618
    %v642 = vpop.f32.mrf.mxu0
    %v643 = vadd.f32 0.0, %v642
    %v644 = vpop.f32.mrf.mxu0
    %645 = vdwg.mxu0
    %646 = vmatpush.bf16.msra.mxu0 %v326
    %647 = vmatpush.bf16.msra.mxu0 %v322
    %648 = vmatpush.bf16.msra.mxu0 %v318
    %649 = vmatpush.bf16.msra.mxu0 %v314
    %650 = vmatpush.bf16.msra.mxu0 %v310
    %651 = vmatpush.bf16.msra.mxu0 %v306
    %652 = vmatpush.bf16.msra.mxu0 %v302
    %653 = vmatpush.bf16.msra.mxu0 %v298
    %654 = vmatmul.bf16.gmra.mxu0 %v618
    %v655 = vpop.f32.mrf.mxu0
    %v656 = vadd.f32 0.0, %v655
    %v657 = vpop.f32.mrf.mxu0
    %658 = vdwg.mxu0
    %659 = vmatpush.bf16.msra.mxu0 %v327
    %660 = vmatpush.bf16.msra.mxu0 %v323
    %661 = vmatpush.bf16.msra.mxu0 %v319
    %662 = vmatpush.bf16.msra.mxu0 %v315
    %663 = vmatpush.bf16.msra.mxu0 %v311
    %664 = vmatpush.bf16.msra.mxu0 %v307
    %665 = vmatpush.bf16.msra.mxu0 %v303
    %666 = vmatpush.bf16.msra.mxu0 %v299
    %667 = vmatmul.bf16.gmra.mxu0 %v618
    %v668 = vpop.f32.mrf.mxu0
    %v669 = vadd.f32 0.0, %v668
    %v670 = vpop.f32.mrf.mxu0
    %671 = vdwg.mxu0
    %v676 = vrot.slane %v630, 4
    %v677 = vrot.slane %v643, 4
    %v678 = vrot.slane %v656, 4
    %v679 = vrot.slane %v669, 4
    %v684 = vadd.f32 %v122, %v676
    %v685 = vadd.f32 %v136, %v677
    %v686 = vadd.f32 %v150, %v678
    %v687 = vadd.f32 %v164, %v679
    %v688 = vxor.u32 %v684, 2147483648
    %v689 = vmul.f32 %v688, 1.442695
    %v690 = vpow.pop %v689
    %v691 = vadd.f32 %v690, 1.0
    %v692 = vrcp.pop %v691
    %v693 = vmul.f32 %v691, %v692
    %v694 = vsub.f32 1.0, %v693
    %v695 = vmul.f32 %v692, %v694
    %v696 = vadd.f32 %v692, %v695
    %vm697 = vweird.f32 %v691
    %vm698 = vweird.f32 %v692
    %vm699 = vmor %vm697, %vm698
    %v700 = vsel %vm699, %v692, %v696
    %v701 = vand.u32 2147483647, %v691
    %vm702 = vcmp.eq.f32.partialorder %v701, 8.507059e+37
    %v703 = vand.u32 %v691, 2147483648
    %v704 = vor.u32 1.1754944e-38, %v703
    %v705 = vsel %vm702, %v704, %v700
    %v706 = vmul.f32 1.0, %v705
    %v707 = vxor.u32 %v685, 2147483648
    %v708 = vmul.f32 %v707, 1.442695
    %v709 = vpow.pop %v708
    %v710 = vadd.f32 %v709, 1.0
    %v711 = vrcp.pop %v710
    %v712 = vmul.f32 %v710, %v711
    %v713 = vsub.f32 1.0, %v712
    %v714 = vmul.f32 %v711, %v713
    %v715 = vadd.f32 %v711, %v714
    %vm716 = vweird.f32 %v710
    %vm717 = vweird.f32 %v711
    %vm718 = vmor %vm716, %vm717
    %v719 = vsel %vm718, %v711, %v715
    %v720 = vand.u32 2147483647, %v710
    %vm721 = vcmp.eq.f32.partialorder %v720, 8.507059e+37
    %v722 = vand.u32 %v710, 2147483648
    %v723 = vor.u32 1.1754944e-38, %v722
    %v724 = vsel %vm721, %v723, %v719
    %v725 = vmul.f32 1.0, %v724
    %v726 = vtanh.pop %v686
    %v727 = vxor.u32 %v687, 2147483648
    %v728 = vmul.f32 %v727, 1.442695
    %v729 = vpow.pop %v728
    %v730 = vadd.f32 %v729, 1.0
    %v731 = vrcp.pop %v730
    %v732 = vmul.f32 %v730, %v731
    %v733 = vsub.f32 1.0, %v732
    %v734 = vmul.f32 %v731, %v733
    %v735 = vadd.f32 %v731, %v734
    %vm736 = vweird.f32 %v730
    %vm737 = vweird.f32 %v731
    %vm738 = vmor %vm736, %vm737
    %v739 = vsel %vm738, %v731, %v735
    %v740 = vand.u32 2147483647, %v730
    %vm741 = vcmp.eq.f32.partialorder %v740, 8.507059e+37
    %v742 = vand.u32 %v730, 2147483648
    %v743 = vor.u32 1.1754944e-38, %v742
    %v744 = vsel %vm741, %v743, %v739
    %v745 = vmul.f32 1.0, %v744
    %v747 = vrot.slane %v612, 6
    %v749 = vmul.f32 %v725, %v747
    %v750 = vmul.f32 %v706, %v726
    %v751 = vadd.f32 %v749, %v750
    %v752 = vtanh.pop %v751
    %v753 = vmul.f32 %v745, %v752
    %754 = vst [vmem:[#allocation2] sm:$0x30] %v753
    %v755 = vpack.c.bf16 %v753, %v753
    %v757 = vrot.slane %v755, 2
    %759 = vmatpush.bf16.msra.mxu0 %v324
    %760 = vmatpush.bf16.msra.mxu0 %v320
    %761 = vmatpush.bf16.msra.mxu0 %v316
    %762 = vmatpush.bf16.msra.mxu0 %v312
    %763 = vmatpush.bf16.msra.mxu0 %v308
    %764 = vmatpush.bf16.msra.mxu0 %v304
    %765 = vmatpush.bf16.msra.mxu0 %v300
    %766 = vmatpush.bf16.msra.mxu0 %v296
    %767 = vmatmul.bf16.gmra.mxu0 %v757
    %v768 = vpop.f32.mrf.mxu0
    %v769 = vadd.f32 0.0, %v768
    %v770 = vpop.f32.mrf.mxu0
    %771 = vdwg.mxu0
    %772 = vmatpush.bf16.msra.mxu0 %v325
    %773 = vmatpush.bf16.msra.mxu0 %v321
    %774 = vmatpush.bf16.msra.mxu0 %v317
    %775 = vmatpush.bf16.msra.mxu0 %v313
    %776 = vmatpush.bf16.msra.mxu0 %v309
    %777 = vmatpush.bf16.msra.mxu0 %v305
    %778 = vmatpush.bf16.msra.mxu0 %v301
    %779 = vmatpush.bf16.msra.mxu0 %v297
    %780 = vmatmul.bf16.gmra.mxu0 %v757
    %v781 = vpop.f32.mrf.mxu0
    %v782 = vadd.f32 0.0, %v781
    %v783 = vpop.f32.mrf.mxu0
    %784 = vdwg.mxu0
    %785 = vmatpush.bf16.msra.mxu0 %v326
    %786 = vmatpush.bf16.msra.mxu0 %v322
    %787 = vmatpush.bf16.msra.mxu0 %v318
    %788 = vmatpush.bf16.msra.mxu0 %v314
    %789 = vmatpush.bf16.msra.mxu0 %v310
    %790 = vmatpush.bf16.msra.mxu0 %v306
    %791 = vmatpush.bf16.msra.mxu0 %v302
    %792 = vmatpush.bf16.msra.mxu0 %v298
    %793 = vmatmul.bf16.gmra.mxu0 %v757
    %v794 = vpop.f32.mrf.mxu0
    %v795 = vadd.f32 0.0, %v794
    %v796 = vpop.f32.mrf.mxu0
    %797 = vdwg.mxu0
    %798 = vmatpush.bf16.msra.mxu0 %v327
    %799 = vmatpush.bf16.msra.mxu0 %v323
    %800 = vmatpush.bf16.msra.mxu0 %v319
    %801 = vmatpush.bf16.msra.mxu0 %v315
    %802 = vmatpush.bf16.msra.mxu0 %v311
    %803 = vmatpush.bf16.msra.mxu0 %v307
    %804 = vmatpush.bf16.msra.mxu0 %v303
    %805 = vmatpush.bf16.msra.mxu0 %v299
    %806 = vmatmul.bf16.gmra.mxu0 %v757
    %v807 = vpop.f32.mrf.mxu0
    %v808 = vadd.f32 0.0, %v807
    %v809 = vpop.f32.mrf.mxu0
    %810 = vdwg.mxu0
    %v815 = vrot.slane %v769, 2
    %v816 = vrot.slane %v782, 2
    %v817 = vrot.slane %v795, 2
    %v818 = vrot.slane %v808, 2
    %v823 = vadd.f32 %v122, %v815
    %v824 = vadd.f32 %v136, %v816
    %v825 = vadd.f32 %v150, %v817
    %v826 = vadd.f32 %v164, %v818
    %v827 = vxor.u32 %v823, 2147483648
    %v828 = vmul.f32 %v827, 1.442695
    %v829 = vpow.pop %v828
    %v830 = vadd.f32 %v829, 1.0
    %v831 = vrcp.pop %v830
    %v832 = vmul.f32 %v830, %v831
    %v833 = vsub.f32 1.0, %v832
    %v834 = vmul.f32 %v831, %v833
    %v835 = vadd.f32 %v831, %v834
    %vm836 = vweird.f32 %v830
    %vm837 = vweird.f32 %v831
    %vm838 = vmor %vm836, %vm837
    %v839 = vsel %vm838, %v831, %v835
    %v840 = vand.u32 2147483647, %v830
    %vm841 = vcmp.eq.f32.partialorder %v840, 8.507059e+37
    %v842 = vand.u32 %v830, 2147483648
    %v843 = vor.u32 1.1754944e-38, %v842
    %v844 = vsel %vm841, %v843, %v839
    %v845 = vmul.f32 1.0, %v844
    %v846 = vxor.u32 %v824, 2147483648
    %v847 = vmul.f32 %v846, 1.442695
    %v848 = vpow.pop %v847
    %v849 = vadd.f32 %v848, 1.0
    %v850 = vrcp.pop %v849
    %v851 = vmul.f32 %v849, %v850
    %v852 = vsub.f32 1.0, %v851
    %v853 = vmul.f32 %v850, %v852
    %v854 = vadd.f32 %v850, %v853
    %vm855 = vweird.f32 %v849
    %vm856 = vweird.f32 %v850
    %vm857 = vmor %vm855, %vm856
    %v858 = vsel %vm857, %v850, %v854
    %v859 = vand.u32 2147483647, %v849
    %vm860 = vcmp.eq.f32.partialorder %v859, 8.507059e+37
    %v861 = vand.u32 %v849, 2147483648
    %v862 = vor.u32 1.1754944e-38, %v861
    %v863 = vsel %vm860, %v862, %v858
    %v864 = vmul.f32 1.0, %v863
    %v865 = vtanh.pop %v825
    %v866 = vxor.u32 %v826, 2147483648
    %v867 = vmul.f32 %v866, 1.442695
    %v868 = vpow.pop %v867
    %v869 = vadd.f32 %v868, 1.0
    %v870 = vrcp.pop %v869
    %v871 = vmul.f32 %v869, %v870
    %v872 = vsub.f32 1.0, %v871
    %v873 = vmul.f32 %v870, %v872
    %v874 = vadd.f32 %v870, %v873
    %vm875 = vweird.f32 %v869
    %vm876 = vweird.f32 %v870
    %vm877 = vmor %vm875, %vm876
    %v878 = vsel %vm877, %v870, %v874
    %v879 = vand.u32 2147483647, %v869
    %vm880 = vcmp.eq.f32.partialorder %v879, 8.507059e+37
    %v881 = vand.u32 %v869, 2147483648
    %v882 = vor.u32 1.1754944e-38, %v881
    %v883 = vsel %vm880, %v882, %v878
    %v884 = vmul.f32 1.0, %v883
    %v886 = vrot.slane %v751, 6
    %v888 = vmul.f32 %v864, %v886
    %v889 = vmul.f32 %v845, %v865
    %v890 = vadd.f32 %v888, %v889
    %v891 = vtanh.pop %v890
    %v892 = vmul.f32 %v884, %v891
    %893 = vst [vmem:[#allocation2] sm:$0xc0] %v892
    %v894 = vpack.c.bf16 %v892, %v892
    %v896 = vrot.slane %v894, 3
    %898 = vmatpush.bf16.msra.mxu0 %v324
    %899 = vmatpush.bf16.msra.mxu0 %v320
    %900 = vmatpush.bf16.msra.mxu0 %v316
    %901 = vmatpush.bf16.msra.mxu0 %v312
    %902 = vmatpush.bf16.msra.mxu0 %v308
    %903 = vmatpush.bf16.msra.mxu0 %v304
    %904 = vmatpush.bf16.msra.mxu0 %v300
    %905 = vmatpush.bf16.msra.mxu0 %v296
    %906 = vmatmul.bf16.gmra.mxu0 %v896
    %v907 = vpop.f32.mrf.mxu0
    %v908 = vadd.f32 0.0, %v907
    %v909 = vpop.f32.mrf.mxu0
    %910 = vdwg.mxu0
    %911 = vmatpush.bf16.msra.mxu0 %v325
    %912 = vmatpush.bf16.msra.mxu0 %v321
    %913 = vmatpush.bf16.msra.mxu0 %v317
    %914 = vmatpush.bf16.msra.mxu0 %v313
    %915 = vmatpush.bf16.msra.mxu0 %v309
    %916 = vmatpush.bf16.msra.mxu0 %v305
    %917 = vmatpush.bf16.msra.mxu0 %v301
    %918 = vmatpush.bf16.msra.mxu0 %v297
    %919 = vmatmul.bf16.gmra.mxu0 %v896
    %v920 = vpop.f32.mrf.mxu0
    %v921 = vadd.f32 0.0, %v920
    %v922 = vpop.f32.mrf.mxu0
    %923 = vdwg.mxu0
    %924 = vmatpush.bf16.msra.mxu0 %v326
    %925 = vmatpush.bf16.msra.mxu0 %v322
    %926 = vmatpush.bf16.msra.mxu0 %v318
    %927 = vmatpush.bf16.msra.mxu0 %v314
    %928 = vmatpush.bf16.msra.mxu0 %v310
    %929 = vmatpush.bf16.msra.mxu0 %v306
    %930 = vmatpush.bf16.msra.mxu0 %v302
    %931 = vmatpush.bf16.msra.mxu0 %v298
    %932 = vmatmul.bf16.gmra.mxu0 %v896
    %v933 = vpop.f32.mrf.mxu0
    %v934 = vadd.f32 0.0, %v933
    %v935 = vpop.f32.mrf.mxu0
    %936 = vdwg.mxu0
    %937 = vmatpush.bf16.msra.mxu0 %v327
    %938 = vmatpush.bf16.msra.mxu0 %v323
    %939 = vmatpush.bf16.msra.mxu0 %v319
    %940 = vmatpush.bf16.msra.mxu0 %v315
    %941 = vmatpush.bf16.msra.mxu0 %v311
    %942 = vmatpush.bf16.msra.mxu0 %v307
    %943 = vmatpush.bf16.msra.mxu0 %v303
    %944 = vmatpush.bf16.msra.mxu0 %v299
    %945 = vmatmul.bf16.gmra.mxu0 %v896
    %v946 = vpop.f32.mrf.mxu0
    %v947 = vadd.f32 0.0, %v946
    %v948 = vpop.f32.mrf.mxu0
    %949 = vdwg.mxu0
    %v950 = vadd.f32 %v124, %v908
    %v951 = vadd.f32 %v138, %v921
    %v952 = vadd.f32 %v152, %v934
    %v953 = vadd.f32 %v166, %v947
    %v954 = vxor.u32 %v950, 2147483648
    %v955 = vmul.f32 %v954, 1.442695
    %v956 = vpow.pop %v955
    %v957 = vadd.f32 %v956, 1.0
    %v958 = vrcp.pop %v957
    %v959 = vmul.f32 %v957, %v958
    %v960 = vsub.f32 1.0, %v959
    %v961 = vmul.f32 %v958, %v960
    %v962 = vadd.f32 %v958, %v961
    %vm963 = vweird.f32 %v957
    %vm964 = vweird.f32 %v958
    %vm965 = vmor %vm963, %vm964
    %v966 = vsel %vm965, %v958, %v962
    %v967 = vand.u32 2147483647, %v957
    %vm968 = vcmp.eq.f32.partialorder %v967, 8.507059e+37
    %v969 = vand.u32 %v957, 2147483648
    %v970 = vor.u32 1.1754944e-38, %v969
    %v971 = vsel %vm968, %v970, %v966
    %v972 = vmul.f32 1.0, %v971
    %v973 = vxor.u32 %v951, 2147483648
    %v974 = vmul.f32 %v973, 1.442695
    %v975 = vpow.pop %v974
    %v976 = vadd.f32 %v975, 1.0
    %v977 = vrcp.pop %v976
    %v978 = vmul.f32 %v976, %v977
    %v979 = vsub.f32 1.0, %v978
    %v980 = vmul.f32 %v977, %v979
    %v981 = vadd.f32 %v977, %v980
    %vm982 = vweird.f32 %v976
    %vm983 = vweird.f32 %v977
    %vm984 = vmor %vm982, %vm983
    %v985 = vsel %vm984, %v977, %v981
    %v986 = vand.u32 2147483647, %v976
    %vm987 = vcmp.eq.f32.partialorder %v986, 8.507059e+37
    %v988 = vand.u32 %v976, 2147483648
    %v989 = vor.u32 1.1754944e-38, %v988
    %v990 = vsel %vm987, %v989, %v985
    %v991 = vmul.f32 1.0, %v990
    %v992 = vtanh.pop %v952
    %v993 = vxor.u32 %v953, 2147483648
    %v994 = vmul.f32 %v993, 1.442695
    %v995 = vpow.pop %v994
    %v996 = vadd.f32 %v995, 1.0
    %v997 = vrcp.pop %v996
    %v998 = vmul.f32 %v996, %v997
    %v999 = vsub.f32 1.0, %v998
    %v1000 = vmul.f32 %v997, %v999
    %v1001 = vadd.f32 %v997, %v1000
    %vm1002 = vweird.f32 %v996
    %vm1003 = vweird.f32 %v997
    %vm1004 = vmor %vm1002, %vm1003
    %v1005 = vsel %vm1004, %v997, %v1001
    %v1006 = vand.u32 2147483647, %v996
    %vm1007 = vcmp.eq.f32.partialorder %v1006, 8.507059e+37
    %v1008 = vand.u32 %v996, 2147483648
    %v1009 = vor.u32 1.1754944e-38, %v1008
    %v1010 = vsel %vm1007, %v1009, %v1005
    %v1011 = vmul.f32 1.0, %v1010
    %v1013 = vrot.slane %v890, 6
    %v1015 = vmul.f32 %v991, %v1013
    %v1016 = vmul.f32 %v972, %v992
    %v1017 = vadd.f32 %v1015, %v1016
    %v1018 = vtanh.pop %v1017
    %v1019 = vmul.f32 %v1011, %v1018
    %1020 = vst [vmem:[#allocation2 + $0x8] sm:$0x3] %v1019
    %v1021 = vpack.c.bf16 %v1019, %v1019
    %1022 = vmatpush.bf16.msra.mxu0 %v324
    %1023 = vmatpush.bf16.msra.mxu0 %v320
    %1024 = vmatpush.bf16.msra.mxu0 %v316
    %1025 = vmatpush.bf16.msra.mxu0 %v312
    %1026 = vmatpush.bf16.msra.mxu0 %v308
    %1027 = vmatpush.bf16.msra.mxu0 %v304
    %1028 = vmatpush.bf16.msra.mxu0 %v300
    %1029 = vmatpush.bf16.msra.mxu0 %v296
    %1030 = vmatmul.bf16.gmra.mxu0 %v1021
    %v1031 = vpop.f32.mrf.mxu0
    %v1032 = vadd.f32 0.0, %v1031
    %v1033 = vpop.f32.mrf.mxu0
    %1034 = vdwg.mxu0
    %1035 = vmatpush.bf16.msra.mxu0 %v325
    %1036 = vmatpush.bf16.msra.mxu0 %v321
    %1037 = vmatpush.bf16.msra.mxu0 %v317
    %1038 = vmatpush.bf16.msra.mxu0 %v313
    %1039 = vmatpush.bf16.msra.mxu0 %v309
    %1040 = vmatpush.bf16.msra.mxu0 %v305
    %1041 = vmatpush.bf16.msra.mxu0 %v301
    %1042 = vmatpush.bf16.msra.mxu0 %v297
    %1043 = vmatmul.bf16.gmra.mxu0 %v1021
    %v1044 = vpop.f32.mrf.mxu0
    %v1045 = vadd.f32 0.0, %v1044
    %v1046 = vpop.f32.mrf.mxu0
    %1047 = vdwg.mxu0
    %1048 = vmatpush.bf16.msra.mxu0 %v326
    %1049 = vmatpush.bf16.msra.mxu0 %v322
    %1050 = vmatpush.bf16.msra.mxu0 %v318
    %1051 = vmatpush.bf16.msra.mxu0 %v314
    %1052 = vmatpush.bf16.msra.mxu0 %v310
    %1053 = vmatpush.bf16.msra.mxu0 %v306
    %1054 = vmatpush.bf16.msra.mxu0 %v302
    %1055 = vmatpush.bf16.msra.mxu0 %v298
    %1056 = vmatmul.bf16.gmra.mxu0 %v1021
    %v1057 = vpop.f32.mrf.mxu0
    %v1058 = vadd.f32 0.0, %v1057
    %v1059 = vpop.f32.mrf.mxu0
    %1060 = vdwg.mxu0
    %1061 = vmatpush.bf16.msra.mxu0 %v327
    %1062 = vmatpush.bf16.msra.mxu0 %v323
    %1063 = vmatpush.bf16.msra.mxu0 %v319
    %1064 = vmatpush.bf16.msra.mxu0 %v315
    %1065 = vmatpush.bf16.msra.mxu0 %v311
    %1066 = vmatpush.bf16.msra.mxu0 %v307
    %1067 = vmatpush.bf16.msra.mxu0 %v303
    %1068 = vmatpush.bf16.msra.mxu0 %v299
    %1069 = vmatmul.bf16.gmra.mxu0 %v1021
    %v1070 = vpop.f32.mrf.mxu0
    %v1071 = vadd.f32 0.0, %v1070
    %v1072 = vpop.f32.mrf.mxu0
    %1073 = vdwg.mxu0
    %v1078 = vrot.slane %v1032, 6
    %v1079 = vrot.slane %v1045, 6
    %v1080 = vrot.slane %v1058, 6
    %v1081 = vrot.slane %v1071, 6
    %v1086 = vadd.f32 %v124, %v1078
    %v1087 = vadd.f32 %v138, %v1079
    %v1088 = vadd.f32 %v152, %v1080
    %v1089 = vadd.f32 %v166, %v1081
    %v1090 = vxor.u32 %v1086, 2147483648
    %v1091 = vmul.f32 %v1090, 1.442695
    %v1092 = vpow.pop %v1091
    %v1093 = vadd.f32 %v1092, 1.0
    %v1094 = vrcp.pop %v1093
    %v1095 = vmul.f32 %v1093, %v1094
    %v1096 = vsub.f32 1.0, %v1095
    %v1097 = vmul.f32 %v1094, %v1096
    %v1098 = vadd.f32 %v1094, %v1097
    %vm1099 = vweird.f32 %v1093
    %vm1100 = vweird.f32 %v1094
    %vm1101 = vmor %vm1099, %vm1100
    %v1102 = vsel %vm1101, %v1094, %v1098
    %v1103 = vand.u32 2147483647, %v1093
    %vm1104 = vcmp.eq.f32.partialorder %v1103, 8.507059e+37
    %v1105 = vand.u32 %v1093, 2147483648
    %v1106 = vor.u32 1.1754944e-38, %v1105
    %v1107 = vsel %vm1104, %v1106, %v1102
    %v1108 = vmul.f32 1.0, %v1107
    %v1109 = vxor.u32 %v1087, 2147483648
    %v1110 = vmul.f32 %v1109, 1.442695
    %v1111 = vpow.pop %v1110
    %v1112 = vadd.f32 %v1111, 1.0
    %v1113 = vrcp.pop %v1112
    %v1114 = vmul.f32 %v1112, %v1113
    %v1115 = vsub.f32 1.0, %v1114
    %v1116 = vmul.f32 %v1113, %v1115
    %v1117 = vadd.f32 %v1113, %v1116
    %vm1118 = vweird.f32 %v1112
    %vm1119 = vweird.f32 %v1113
    %vm1120 = vmor %vm1118, %vm1119
    %v1121 = vsel %vm1120, %v1113, %v1117
    %v1122 = vand.u32 2147483647, %v1112
    %vm1123 = vcmp.eq.f32.partialorder %v1122, 8.507059e+37
    %v1124 = vand.u32 %v1112, 2147483648
    %v1125 = vor.u32 1.1754944e-38, %v1124
    %v1126 = vsel %vm1123, %v1125, %v1121
    %v1127 = vmul.f32 1.0, %v1126
    %v1128 = vtanh.pop %v1088
    %v1129 = vxor.u32 %v1089, 2147483648
    %v1130 = vmul.f32 %v1129, 1.442695
    %v1131 = vpow.pop %v1130
    %v1132 = vadd.f32 %v1131, 1.0
    %v1133 = vrcp.pop %v1132
    %v1134 = vmul.f32 %v1132, %v1133
    %v1135 = vsub.f32 1.0, %v1134
    %v1136 = vmul.f32 %v1133, %v1135
    %v1137 = vadd.f32 %v1133, %v1136
    %vm1138 = vweird.f32 %v1132
    %vm1139 = vweird.f32 %v1133
    %vm1140 = vmor %vm1138, %vm1139
    %v1141 = vsel %vm1140, %v1133, %v1137
    %v1142 = vand.u32 2147483647, %v1132
    %vm1143 = vcmp.eq.f32.partialorder %v1142, 8.507059e+37
    %v1144 = vand.u32 %v1132, 2147483648
    %v1145 = vor.u32 1.1754944e-38, %v1144
    %v1146 = vsel %vm1143, %v1145, %v1141
    %v1147 = vmul.f32 1.0, %v1146
    %v1149 = vrot.slane %v1017, 6
    %v1151 = vmul.f32 %v1127, %v1149
    %v1152 = vmul.f32 %v1108, %v1128
    %v1153 = vadd.f32 %v1151, %v1152
    %v1154 = vtanh.pop %v1153
    %v1155 = vmul.f32 %v1147, %v1154
    %1156 = vst [vmem:[#allocation2 + $0x8] sm:$0xc] %v1155
    %v1157 = vpack.c.bf16 %v1155, %v1155
    %v1159 = vrot.slane %v1157, 1
    %1161 = vmatpush.bf16.msra.mxu0 %v324
    %1162 = vmatpush.bf16.msra.mxu0 %v320
    %1163 = vmatpush.bf16.msra.mxu0 %v316
    %1164 = vmatpush.bf16.msra.mxu0 %v312
    %1165 = vmatpush.bf16.msra.mxu0 %v308
    %1166 = vmatpush.bf16.msra.mxu0 %v304
    %1167 = vmatpush.bf16.msra.mxu0 %v300
    %1168 = vmatpush.bf16.msra.mxu0 %v296
    %1169 = vmatmul.bf16.gmra.mxu0 %v1159
    %v1170 = vpop.f32.mrf.mxu0
    %v1171 = vadd.f32 0.0, %v1170
    %v1172 = vpop.f32.mrf.mxu0
    %1173 = vdwg.mxu0
    %1174 = vmatpush.bf16.msra.mxu0 %v325
    %1175 = vmatpush.bf16.msra.mxu0 %v321
    %1176 = vmatpush.bf16.msra.mxu0 %v317
    %1177 = vmatpush.bf16.msra.mxu0 %v313
    %1178 = vmatpush.bf16.msra.mxu0 %v309
    %1179 = vmatpush.bf16.msra.mxu0 %v305
    %1180 = vmatpush.bf16.msra.mxu0 %v301
    %1181 = vmatpush.bf16.msra.mxu0 %v297
    %1182 = vmatmul.bf16.gmra.mxu0 %v1159
    %v1183 = vpop.f32.mrf.mxu0
    %v1184 = vadd.f32 0.0, %v1183
    %v1185 = vpop.f32.mrf.mxu0
    %1186 = vdwg.mxu0
    %1187 = vmatpush.bf16.msra.mxu0 %v326
    %1188 = vmatpush.bf16.msra.mxu0 %v322
    %1189 = vmatpush.bf16.msra.mxu0 %v318
    %1190 = vmatpush.bf16.msra.mxu0 %v314
    %1191 = vmatpush.bf16.msra.mxu0 %v310
    %1192 = vmatpush.bf16.msra.mxu0 %v306
    %1193 = vmatpush.bf16.msra.mxu0 %v302
    %1194 = vmatpush.bf16.msra.mxu0 %v298
    %1195 = vmatmul.bf16.gmra.mxu0 %v1159
    %v1196 = vpop.f32.mrf.mxu0
    %v1197 = vadd.f32 0.0, %v1196
    %v1198 = vpop.f32.mrf.mxu0
    %1199 = vdwg.mxu0
    %1200 = vmatpush.bf16.msra.mxu0 %v327
    %1201 = vmatpush.bf16.msra.mxu0 %v323
    %1202 = vmatpush.bf16.msra.mxu0 %v319
    %1203 = vmatpush.bf16.msra.mxu0 %v315
    %1204 = vmatpush.bf16.msra.mxu0 %v311
    %1205 = vmatpush.bf16.msra.mxu0 %v307
    %1206 = vmatpush.bf16.msra.mxu0 %v303
    %1207 = vmatpush.bf16.msra.mxu0 %v299
    %1208 = vmatmul.bf16.gmra.mxu0 %v1159
    %v1209 = vpop.f32.mrf.mxu0
    %v1210 = vadd.f32 0.0, %v1209
    %v1211 = vpop.f32.mrf.mxu0
    %1212 = vdwg.mxu0
    %v1217 = vrot.slane %v1171, 4
    %v1218 = vrot.slane %v1184, 4
    %v1219 = vrot.slane %v1197, 4
    %v1220 = vrot.slane %v1210, 4
    %v1225 = vadd.f32 %v124, %v1217
    %v1226 = vadd.f32 %v138, %v1218
    %v1227 = vadd.f32 %v152, %v1219
    %v1228 = vadd.f32 %v166, %v1220
    %v1229 = vxor.u32 %v1225, 2147483648
    %v1230 = vmul.f32 %v1229, 1.442695
    %v1231 = vpow.pop %v1230
    %v1232 = vadd.f32 %v1231, 1.0
    %v1233 = vrcp.pop %v1232
    %v1234 = vmul.f32 %v1232, %v1233
    %v1235 = vsub.f32 1.0, %v1234
    %v1236 = vmul.f32 %v1233, %v1235
    %v1237 = vadd.f32 %v1233, %v1236
    %vm1238 = vweird.f32 %v1232
    %vm1239 = vweird.f32 %v1233
    %vm1240 = vmor %vm1238, %vm1239
    %v1241 = vsel %vm1240, %v1233, %v1237
    %v1242 = vand.u32 2147483647, %v1232
    %vm1243 = vcmp.eq.f32.partialorder %v1242, 8.507059e+37
    %v1244 = vand.u32 %v1232, 2147483648
    %v1245 = vor.u32 1.1754944e-38, %v1244
    %v1246 = vsel %vm1243, %v1245, %v1241
    %v1247 = vmul.f32 1.0, %v1246
    %v1248 = vxor.u32 %v1226, 2147483648
    %v1249 = vmul.f32 %v1248, 1.442695
    %v1250 = vpow.pop %v1249
    %v1251 = vadd.f32 %v1250, 1.0
    %v1252 = vrcp.pop %v1251
    %v1253 = vmul.f32 %v1251, %v1252
    %v1254 = vsub.f32 1.0, %v1253
    %v1255 = vmul.f32 %v1252, %v1254
    %v1256 = vadd.f32 %v1252, %v1255
    %vm1257 = vweird.f32 %v1251
    %vm1258 = vweird.f32 %v1252
    %vm1259 = vmor %vm1257, %vm1258
    %v1260 = vsel %vm1259, %v1252, %v1256
    %v1261 = vand.u32 2147483647, %v1251
    %vm1262 = vcmp.eq.f32.partialorder %v1261, 8.507059e+37
    %v1263 = vand.u32 %v1251, 2147483648
    %v1264 = vor.u32 1.1754944e-38, %v1263
    %v1265 = vsel %vm1262, %v1264, %v1260
    %v1266 = vmul.f32 1.0, %v1265
    %v1267 = vtanh.pop %v1227
    %v1268 = vxor.u32 %v1228, 2147483648
    %v1269 = vmul.f32 %v1268, 1.442695
    %v1270 = vpow.pop %v1269
    %v1271 = vadd.f32 %v1270, 1.0
    %v1272 = vrcp.pop %v1271
    %v1273 = vmul.f32 %v1271, %v1272
    %v1274 = vsub.f32 1.0, %v1273
    %v1275 = vmul.f32 %v1272, %v1274
    %v1276 = vadd.f32 %v1272, %v1275
    %vm1277 = vweird.f32 %v1271
    %vm1278 = vweird.f32 %v1272
    %vm1279 = vmor %vm1277, %vm1278
    %v1280 = vsel %vm1279, %v1272, %v1276
    %v1281 = vand.u32 2147483647, %v1271
    %vm1282 = vcmp.eq.f32.partialorder %v1281, 8.507059e+37
    %v1283 = vand.u32 %v1271, 2147483648
    %v1284 = vor.u32 1.1754944e-38, %v1283
    %v1285 = vsel %vm1282, %v1284, %v1280
    %v1286 = vmul.f32 1.0, %v1285
    %v1288 = vrot.slane %v1153, 6
    %v1290 = vmul.f32 %v1266, %v1288
    %v1291 = vmul.f32 %v1247, %v1267
    %v1292 = vadd.f32 %v1290, %v1291
    %v1293 = vtanh.pop %v1292
    %v1294 = vmul.f32 %v1286, %v1293
    %1295 = vst [vmem:[#allocation2 + $0x8] sm:$0x30] %v1294
    %v1296 = vpack.c.bf16 %v1294, %v1294
    %v1298 = vrot.slane %v1296, 2
    %1300 = vmatpush.bf16.msra.mxu0 %v324
    %1301 = vmatpush.bf16.msra.mxu0 %v320
    %1302 = vmatpush.bf16.msra.mxu0 %v316
    %1303 = vmatpush.bf16.msra.mxu0 %v312
    %1304 = vmatpush.bf16.msra.mxu0 %v308
    %1305 = vmatpush.bf16.msra.mxu0 %v304
    %1306 = vmatpush.bf16.msra.mxu0 %v300
    %1307 = vmatpush.bf16.msra.mxu0 %v296
    %1308 = vmatmul.bf16.gmra.mxu0 %v1298
    %v1309 = vpop.f32.mrf.mxu0
    %v1310 = vadd.f32 0.0, %v1309
    %v1311 = vpop.f32.mrf.mxu0
    %1312 = vdwg.mxu0
    %1313 = vmatpush.bf16.msra.mxu0 %v325
    %1314 = vmatpush.bf16.msra.mxu0 %v321
    %1315 = vmatpush.bf16.msra.mxu0 %v317
    %1316 = vmatpush.bf16.msra.mxu0 %v313
    %1317 = vmatpush.bf16.msra.mxu0 %v309
    %1318 = vmatpush.bf16.msra.mxu0 %v305
    %1319 = vmatpush.bf16.msra.mxu0 %v301
    %1320 = vmatpush.bf16.msra.mxu0 %v297
    %1321 = vmatmul.bf16.gmra.mxu0 %v1298
    %v1322 = vpop.f32.mrf.mxu0
    %v1323 = vadd.f32 0.0, %v1322
    %v1324 = vpop.f32.mrf.mxu0
    %1325 = vdwg.mxu0
    %1326 = vmatpush.bf16.msra.mxu0 %v326
    %1327 = vmatpush.bf16.msra.mxu0 %v322
    %1328 = vmatpush.bf16.msra.mxu0 %v318
    %1329 = vmatpush.bf16.msra.mxu0 %v314
    %1330 = vmatpush.bf16.msra.mxu0 %v310
    %1331 = vmatpush.bf16.msra.mxu0 %v306
    %1332 = vmatpush.bf16.msra.mxu0 %v302
    %1333 = vmatpush.bf16.msra.mxu0 %v298
    %1334 = vmatmul.bf16.gmra.mxu0 %v1298
    %v1335 = vpop.f32.mrf.mxu0
    %v1336 = vadd.f32 0.0, %v1335
    %v1337 = vpop.f32.mrf.mxu0
    %1338 = vdwg.mxu0
    %1339 = vmatpush.bf16.msra.mxu0 %v327
    %1340 = vmatpush.bf16.msra.mxu0 %v323
    %1341 = vmatpush.bf16.msra.mxu0 %v319
    %1342 = vmatpush.bf16.msra.mxu0 %v315
    %1343 = vmatpush.bf16.msra.mxu0 %v311
    %1344 = vmatpush.bf16.msra.mxu0 %v307
    %1345 = vmatpush.bf16.msra.mxu0 %v303
    %1346 = vmatpush.bf16.msra.mxu0 %v299
    %1347 = vmatmul.bf16.gmra.mxu0 %v1298
    %v1348 = vpop.f32.mrf.mxu0
    %v1349 = vadd.f32 0.0, %v1348
    %v1350 = vpop.f32.mrf.mxu0
    %1351 = vdwg.mxu0
    %v1356 = vrot.slane %v1310, 2
    %v1357 = vrot.slane %v1323, 2
    %v1358 = vrot.slane %v1336, 2
    %v1359 = vrot.slane %v1349, 2
    %v1364 = vadd.f32 %v124, %v1356
    %v1365 = vadd.f32 %v138, %v1357
    %v1366 = vadd.f32 %v152, %v1358
    %v1367 = vadd.f32 %v166, %v1359
    %v1368 = vxor.u32 %v1364, 2147483648
    %v1369 = vmul.f32 %v1368, 1.442695
    %v1370 = vpow.pop %v1369
    %v1371 = vadd.f32 %v1370, 1.0
    %v1372 = vrcp.pop %v1371
    %v1373 = vmul.f32 %v1371, %v1372
    %v1374 = vsub.f32 1.0, %v1373
    %v1375 = vmul.f32 %v1372, %v1374
    %v1376 = vadd.f32 %v1372, %v1375
    %vm1377 = vweird.f32 %v1371
    %vm1378 = vweird.f32 %v1372
    %vm1379 = vmor %vm1377, %vm1378
    %v1380 = vsel %vm1379, %v1372, %v1376
    %v1381 = vand.u32 2147483647, %v1371
    %vm1382 = vcmp.eq.f32.partialorder %v1381, 8.507059e+37
    %v1383 = vand.u32 %v1371, 2147483648
    %v1384 = vor.u32 1.1754944e-38, %v1383
    %v1385 = vsel %vm1382, %v1384, %v1380
    %v1386 = vmul.f32 1.0, %v1385
    %v1387 = vxor.u32 %v1365, 2147483648
    %v1388 = vmul.f32 %v1387, 1.442695
    %v1389 = vpow.pop %v1388
    %v1390 = vadd.f32 %v1389, 1.0
    %v1391 = vrcp.pop %v1390
    %v1392 = vmul.f32 %v1390, %v1391
    %v1393 = vsub.f32 1.0, %v1392
    %v1394 = vmul.f32 %v1391, %v1393
    %v1395 = vadd.f32 %v1391, %v1394
    %vm1396 = vweird.f32 %v1390
    %vm1397 = vweird.f32 %v1391
    %vm1398 = vmor %vm1396, %vm1397
    %v1399 = vsel %vm1398, %v1391, %v1395
    %v1400 = vand.u32 2147483647, %v1390
    %vm1401 = vcmp.eq.f32.partialorder %v1400, 8.507059e+37
    %v1402 = vand.u32 %v1390, 2147483648
    %v1403 = vor.u32 1.1754944e-38, %v1402
    %v1404 = vsel %vm1401, %v1403, %v1399
    %v1405 = vmul.f32 1.0, %v1404
    %v1406 = vtanh.pop %v1366
    %v1407 = vxor.u32 %v1367, 2147483648
    %v1408 = vmul.f32 %v1407, 1.442695
    %v1409 = vpow.pop %v1408
    %v1410 = vadd.f32 %v1409, 1.0
    %v1411 = vrcp.pop %v1410
    %v1412 = vmul.f32 %v1410, %v1411
    %v1413 = vsub.f32 1.0, %v1412
    %v1414 = vmul.f32 %v1411, %v1413
    %v1415 = vadd.f32 %v1411, %v1414
    %vm1416 = vweird.f32 %v1410
    %vm1417 = vweird.f32 %v1411
    %vm1418 = vmor %vm1416, %vm1417
    %v1419 = vsel %vm1418, %v1411, %v1415
    %v1420 = vand.u32 2147483647, %v1410
    %vm1421 = vcmp.eq.f32.partialorder %v1420, 8.507059e+37
    %v1422 = vand.u32 %v1410, 2147483648
    %v1423 = vor.u32 1.1754944e-38, %v1422
    %v1424 = vsel %vm1421, %v1423, %v1419
    %v1425 = vmul.f32 1.0, %v1424
    %v1427 = vrot.slane %v1292, 6
    %v1429 = vmul.f32 %v1405, %v1427
    %v1430 = vmul.f32 %v1386, %v1406
    %v1431 = vadd.f32 %v1429, %v1430
    %v1432 = vtanh.pop %v1431
    %v1433 = vmul.f32 %v1425, %v1432
    %1434 = vst [vmem:[#allocation2 + $0x8] sm:$0xc0] %v1433
    %v1435 = vld [vmem:[#allocation2] sm:$0xff]
    %v1436 = vld [vmem:[#allocation2 + $0x8] sm:$0xff]
    %v1437 = vpack.c.bf16 %v1436, %v1435
    %v1438 = vld [vmem:[#allocation6] sm:$0xff]
    %v1439 = vld [vmem:[#allocation6 + $0x8] sm:$0xff]
    %v1440 = vld [vmem:[#allocation6 + $0x10] sm:$0xff]
    %v1441 = vld [vmem:[#allocation6 + $0x18] sm:$0xff]
    %v1442 = vld [vmem:[#allocation6 + $0x20] sm:$0xff]
    %v1443 = vld [vmem:[#allocation6 + $0x28] sm:$0xff]
    %v1444 = vld [vmem:[#allocation6 + $0x30] sm:$0xff]
    %v1445 = vld [vmem:[#allocation6 + $0x38] sm:$0xff]
    %v1446 = vld [vmem:[#allocation6 + $0x40] sm:$0xff]
    %v1447 = vld [vmem:[#allocation6 + $0x48] sm:$0xff]
    %v1448 = vld [vmem:[#allocation6 + $0x50] sm:$0xff]
    %v1449 = vld [vmem:[#allocation6 + $0x58] sm:$0xff]
    %v1450 = vld [vmem:[#allocation6 + $0x60] sm:$0xff]
    %v1451 = vld [vmem:[#allocation6 + $0x68] sm:$0xff]
    %v1452 = vld [vmem:[#allocation6 + $0x70] sm:$0xff]
    %v1453 = vld [vmem:[#allocation6 + $0x78] sm:$0xff]
    %v1454 = vld [vmem:[#allocation6 + $0x80] sm:$0xff]
    %v1455 = vld [vmem:[#allocation6 + $0x88] sm:$0xff]
    %v1456 = vld [vmem:[#allocation6 + $0x90] sm:$0xff]
    %v1457 = vld [vmem:[#allocation6 + $0x98] sm:$0xff]
    %v1458 = vld [vmem:[#allocation6 + $0xa0] sm:$0xff]
    %v1459 = vld [vmem:[#allocation6 + $0xa8] sm:$0xff]
    %v1460 = vld [vmem:[#allocation6 + $0xb0] sm:$0xff]
    %v1461 = vld [vmem:[#allocation6 + $0xb8] sm:$0xff]
    %v1462 = vld [vmem:[#allocation6 + $0xc0] sm:$0xff]
    %v1463 = vld [vmem:[#allocation6 + $0xc8] sm:$0xff]
    %v1464 = vld [vmem:[#allocation6 + $0xd0] sm:$0xff]
    %v1465 = vld [vmem:[#allocation6 + $0xd8] sm:$0xff]
    %v1466 = vld [vmem:[#allocation6 + $0xe0] sm:$0xff]
    %v1467 = vld [vmem:[#allocation6 + $0xe8] sm:$0xff]
    %v1468 = vld [vmem:[#allocation6 + $0xf0] sm:$0xff]
    %v1469 = vld [vmem:[#allocation6 + $0xf8] sm:$0xff]
    %v1470 = vld [vmem:[%s6] sm:$0xf]
    %v1472 = vperm.slane %v1470, 0
    %v1473 = vperm.slane %v1470, 1
    %v1474 = vperm.slane %v1470, 2
    %v1475 = vperm.slane %v1470, 3
    %v1512 = vunpack.c.l.b16 %v1438
    %v1513 = vunpack.c.h.b16 %v1438
    %v1514 = vunpack.c.l.b16 %v1439
    %v1515 = vunpack.c.h.b16 %v1439
    %v1516 = vunpack.c.l.b16 %v1440
    %v1517 = vunpack.c.h.b16 %v1440
    %v1518 = vunpack.c.l.b16 %v1441
    %v1519 = vunpack.c.h.b16 %v1441
    %v1520 = vunpack.c.l.b16 %v1442
    %v1521 = vunpack.c.h.b16 %v1442
    %v1522 = vunpack.c.l.b16 %v1443
    %v1523 = vunpack.c.h.b16 %v1443
    %v1524 = vunpack.c.l.b16 %v1444
    %v1525 = vunpack.c.h.b16 %v1444
    %v1526 = vunpack.c.l.b16 %v1445
    %v1527 = vunpack.c.h.b16 %v1445
    %v1528 = vunpack.c.l.b16 %v1446
    %v1529 = vunpack.c.h.b16 %v1446
    %v1530 = vunpack.c.l.b16 %v1447
    %v1531 = vunpack.c.h.b16 %v1447
    %v1532 = vunpack.c.l.b16 %v1448
    %v1533 = vunpack.c.h.b16 %v1448
    %v1534 = vunpack.c.l.b16 %v1449
    %v1535 = vunpack.c.h.b16 %v1449
    %v1536 = vunpack.c.l.b16 %v1450
    %v1537 = vunpack.c.h.b16 %v1450
    %v1538 = vunpack.c.l.b16 %v1451
    %v1539 = vunpack.c.h.b16 %v1451
    %v1540 = vunpack.c.l.b16 %v1452
    %v1541 = vunpack.c.h.b16 %v1452
    %v1542 = vunpack.c.l.b16 %v1453
    %v1543 = vunpack.c.h.b16 %v1453
    %v1544 = vunpack.c.l.b16 %v1454
    %v1545 = vunpack.c.h.b16 %v1454
    %v1546 = vunpack.c.l.b16 %v1455
    %v1547 = vunpack.c.h.b16 %v1455
    %v1548 = vunpack.c.l.b16 %v1456
    %v1549 = vunpack.c.h.b16 %v1456
    %v1550 = vunpack.c.l.b16 %v1457
    %v1551 = vunpack.c.h.b16 %v1457
    %v1552 = vunpack.c.l.b16 %v1458
    %v1553 = vunpack.c.h.b16 %v1458
    %v1554 = vunpack.c.l.b16 %v1459
    %v1555 = vunpack.c.h.b16 %v1459
    %v1556 = vunpack.c.l.b16 %v1460
    %v1557 = vunpack.c.h.b16 %v1460
    %v1558 = vunpack.c.l.b16 %v1461
    %v1559 = vunpack.c.h.b16 %v1461
    %v1560 = vunpack.c.l.b16 %v1462
    %v1561 = vunpack.c.h.b16 %v1462
    %v1562 = vunpack.c.l.b16 %v1463
    %v1563 = vunpack.c.h.b16 %v1463
    %v1564 = vunpack.c.l.b16 %v1464
    %v1565 = vunpack.c.h.b16 %v1464
    %v1566 = vunpack.c.l.b16 %v1465
    %v1567 = vunpack.c.h.b16 %v1465
    %v1568 = vunpack.c.l.b16 %v1466
    %v1569 = vunpack.c.h.b16 %v1466
    %v1570 = vunpack.c.l.b16 %v1467
    %v1571 = vunpack.c.h.b16 %v1467
    %v1572 = vunpack.c.l.b16 %v1468
    %v1573 = vunpack.c.h.b16 %v1468
    %v1574 = vunpack.c.l.b16 %v1469
    %v1575 = vunpack.c.h.b16 %v1469
    %v1576 = vpack.c.b16 %v1516, %v1512
    %v1577 = vpack.c.b16 %v1517, %v1513
    %v1578 = vpack.c.b16 %v1518, %v1514
    %v1579 = vpack.c.b16 %v1519, %v1515
    %v1580 = vpack.c.b16 %v1524, %v1520
    %v1581 = vpack.c.b16 %v1525, %v1521
    %v1582 = vpack.c.b16 %v1526, %v1522
    %v1583 = vpack.c.b16 %v1527, %v1523
    %v1584 = vpack.c.b16 %v1532, %v1528
    %v1585 = vpack.c.b16 %v1533, %v1529
    %v1586 = vpack.c.b16 %v1534, %v1530
    %v1587 = vpack.c.b16 %v1535, %v1531
    %v1588 = vpack.c.b16 %v1540, %v1536
    %v1589 = vpack.c.b16 %v1541, %v1537
    %v1590 = vpack.c.b16 %v1542, %v1538
    %v1591 = vpack.c.b16 %v1543, %v1539
    %v1592 = vpack.c.b16 %v1548, %v1544
    %v1593 = vpack.c.b16 %v1549, %v1545
    %v1594 = vpack.c.b16 %v1550, %v1546
    %v1595 = vpack.c.b16 %v1551, %v1547
    %v1596 = vpack.c.b16 %v1556, %v1552
    %v1597 = vpack.c.b16 %v1557, %v1553
    %v1598 = vpack.c.b16 %v1558, %v1554
    %v1599 = vpack.c.b16 %v1559, %v1555
    %v1600 = vpack.c.b16 %v1564, %v1560
    %v1601 = vpack.c.b16 %v1565, %v1561
    %v1602 = vpack.c.b16 %v1566, %v1562
    %v1603 = vpack.c.b16 %v1567, %v1563
    %v1604 = vpack.c.b16 %v1572, %v1568
    %v1605 = vpack.c.b16 %v1573, %v1569
    %v1606 = vpack.c.b16 %v1574, %v1570
    %v1607 = vpack.c.b16 %v1575, %v1571
    %1640 = vmatpush.bf16.msra.mxu0 %v1604
    %1641 = vmatpush.bf16.msra.mxu0 %v1600
    %1642 = vmatpush.bf16.msra.mxu0 %v1596
    %1643 = vmatpush.bf16.msra.mxu0 %v1592
    %1644 = vmatpush.bf16.msra.mxu0 %v1588
    %1645 = vmatpush.bf16.msra.mxu0 %v1584
    %1646 = vmatpush.bf16.msra.mxu0 %v1580
    %1647 = vmatpush.bf16.msra.mxu0 %v1576
    %1648 = vmatmul.bf16.gmra.mxu0 %v1437
    %v1649 = vpop.f32.mrf.mxu0
    %v1650 = vadd.f32 %v1472, %v1649
    %v1651 = vpop.f32.mrf.mxu0
    %v1652 = vadd.f32 %v1472, %v1651
    %1653 = vdwg.mxu0
    %1654 = vmatpush.bf16.msra.mxu0 %v1605
    %1655 = vmatpush.bf16.msra.mxu0 %v1601
    %1656 = vmatpush.bf16.msra.mxu0 %v1597
    %1657 = vmatpush.bf16.msra.mxu0 %v1593
    %1658 = vmatpush.bf16.msra.mxu0 %v1589
    %1659 = vmatpush.bf16.msra.mxu0 %v1585
    %1660 = vmatpush.bf16.msra.mxu0 %v1581
    %1661 = vmatpush.bf16.msra.mxu0 %v1577
    %1662 = vmatmul.bf16.gmra.mxu0 %v1437
    %v1663 = vpop.f32.mrf.mxu0
    %v1664 = vadd.f32 %v1473, %v1663
    %v1665 = vpop.f32.mrf.mxu0
    %v1666 = vadd.f32 %v1473, %v1665
    %1667 = vdwg.mxu0
    %1668 = vmatpush.bf16.msra.mxu0 %v1606
    %1669 = vmatpush.bf16.msra.mxu0 %v1602
    %1670 = vmatpush.bf16.msra.mxu0 %v1598
    %1671 = vmatpush.bf16.msra.mxu0 %v1594
    %1672 = vmatpush.bf16.msra.mxu0 %v1590
    %1673 = vmatpush.bf16.msra.mxu0 %v1586
    %1674 = vmatpush.bf16.msra.mxu0 %v1582
    %1675 = vmatpush.bf16.msra.mxu0 %v1578
    %1676 = vmatmul.bf16.gmra.mxu0 %v1437
    %v1677 = vpop.f32.mrf.mxu0
    %v1678 = vadd.f32 %v1474, %v1677
    %v1679 = vpop.f32.mrf.mxu0
    %v1680 = vadd.f32 %v1474, %v1679
    %1681 = vdwg.mxu0
    %1682 = vmatpush.bf16.msra.mxu0 %v1607
    %1683 = vmatpush.bf16.msra.mxu0 %v1603
    %1684 = vmatpush.bf16.msra.mxu0 %v1599
    %1685 = vmatpush.bf16.msra.mxu0 %v1595
    %1686 = vmatpush.bf16.msra.mxu0 %v1591
    %1687 = vmatpush.bf16.msra.mxu0 %v1587
    %1688 = vmatpush.bf16.msra.mxu0 %v1583
    %1689 = vmatpush.bf16.msra.mxu0 %v1579
    %1690 = vmatmul.bf16.gmra.mxu0 %v1437
    %v1691 = vpop.f32.mrf.mxu0
    %v1692 = vadd.f32 %v1475, %v1691
    %v1693 = vpop.f32.mrf.mxu0
    %v1694 = vadd.f32 %v1475, %v1693
    %1695 = vdwg.mxu0
    %v1696 = vld [vmem:[#allocation8] sm:$0xff]
    %v1697 = vld [vmem:[#allocation8 + $0x8] sm:$0xff]
    %v1698 = vld [vmem:[#allocation8 + $0x10] sm:$0xff]
    %v1699 = vld [vmem:[#allocation8 + $0x18] sm:$0xff]
    %v1700 = vld [vmem:[#allocation8 + $0x20] sm:$0xff]
    %v1701 = vld [vmem:[#allocation8 + $0x28] sm:$0xff]
    %v1702 = vld [vmem:[#allocation8 + $0x30] sm:$0xff]
    %v1703 = vld [vmem:[#allocation8 + $0x38] sm:$0xff]
    %v1704 = vld [vmem:[#allocation8 + $0x40] sm:$0xff]
    %v1705 = vld [vmem:[#allocation8 + $0x48] sm:$0xff]
    %v1706 = vld [vmem:[#allocation8 + $0x50] sm:$0xff]
    %v1707 = vld [vmem:[#allocation8 + $0x58] sm:$0xff]
    %v1708 = vld [vmem:[#allocation8 + $0x60] sm:$0xff]
    %v1709 = vld [vmem:[#allocation8 + $0x68] sm:$0xff]
    %v1710 = vld [vmem:[#allocation8 + $0x70] sm:$0xff]
    %v1711 = vld [vmem:[#allocation8 + $0x78] sm:$0xff]
    %v1712 = vld [vmem:[#allocation8 + $0x80] sm:$0xff]
    %v1713 = vld [vmem:[#allocation8 + $0x88] sm:$0xff]
    %v1714 = vld [vmem:[#allocation8 + $0x90] sm:$0xff]
    %v1715 = vld [vmem:[#allocation8 + $0x98] sm:$0xff]
    %v1716 = vld [vmem:[#allocation8 + $0xa0] sm:$0xff]
    %v1717 = vld [vmem:[#allocation8 + $0xa8] sm:$0xff]
    %v1718 = vld [vmem:[#allocation8 + $0xb0] sm:$0xff]
    %v1719 = vld [vmem:[#allocation8 + $0xb8] sm:$0xff]
    %v1720 = vld [vmem:[#allocation8 + $0xc0] sm:$0xff]
    %v1721 = vld [vmem:[#allocation8 + $0xc8] sm:$0xff]
    %v1722 = vld [vmem:[#allocation8 + $0xd0] sm:$0xff]
    %v1723 = vld [vmem:[#allocation8 + $0xd8] sm:$0xff]
    %v1724 = vld [vmem:[#allocation8 + $0xe0] sm:$0xff]
    %v1725 = vld [vmem:[#allocation8 + $0xe8] sm:$0xff]
    %v1726 = vld [vmem:[#allocation8 + $0xf0] sm:$0xff]
    %v1727 = vld [vmem:[#allocation8 + $0xf8] sm:$0xff]
    %v1760 = vunpack.c.l.b16 %v1696
    %v1761 = vunpack.c.h.b16 %v1696
    %v1762 = vunpack.c.l.b16 %v1697
    %v1763 = vunpack.c.h.b16 %v1697
    %v1764 = vunpack.c.l.b16 %v1698
    %v1765 = vunpack.c.h.b16 %v1698
    %v1766 = vunpack.c.l.b16 %v1699
    %v1767 = vunpack.c.h.b16 %v1699
    %v1768 = vunpack.c.l.b16 %v1700
    %v1769 = vunpack.c.h.b16 %v1700
    %v1770 = vunpack.c.l.b16 %v1701
    %v1771 = vunpack.c.h.b16 %v1701
    %v1772 = vunpack.c.l.b16 %v1702
    %v1773 = vunpack.c.h.b16 %v1702
    %v1774 = vunpack.c.l.b16 %v1703
    %v1775 = vunpack.c.h.b16 %v1703
    %v1776 = vunpack.c.l.b16 %v1704
    %v1777 = vunpack.c.h.b16 %v1704
    %v1778 = vunpack.c.l.b16 %v1705
    %v1779 = vunpack.c.h.b16 %v1705
    %v1780 = vunpack.c.l.b16 %v1706
    %v1781 = vunpack.c.h.b16 %v1706
    %v1782 = vunpack.c.l.b16 %v1707
    %v1783 = vunpack.c.h.b16 %v1707
    %v1784 = vunpack.c.l.b16 %v1708
    %v1785 = vunpack.c.h.b16 %v1708
    %v1786 = vunpack.c.l.b16 %v1709
    %v1787 = vunpack.c.h.b16 %v1709
    %v1788 = vunpack.c.l.b16 %v1710
    %v1789 = vunpack.c.h.b16 %v1710
    %v1790 = vunpack.c.l.b16 %v1711
    %v1791 = vunpack.c.h.b16 %v1711
    %v1792 = vunpack.c.l.b16 %v1712
    %v1793 = vunpack.c.h.b16 %v1712
    %v1794 = vunpack.c.l.b16 %v1713
    %v1795 = vunpack.c.h.b16 %v1713
    %v1796 = vunpack.c.l.b16 %v1714
    %v1797 = vunpack.c.h.b16 %v1714
    %v1798 = vunpack.c.l.b16 %v1715
    %v1799 = vunpack.c.h.b16 %v1715
    %v1800 = vunpack.c.l.b16 %v1716
    %v1801 = vunpack.c.h.b16 %v1716
    %v1802 = vunpack.c.l.b16 %v1717
    %v1803 = vunpack.c.h.b16 %v1717
    %v1804 = vunpack.c.l.b16 %v1718
    %v1805 = vunpack.c.h.b16 %v1718
    %v1806 = vunpack.c.l.b16 %v1719
    %v1807 = vunpack.c.h.b16 %v1719
    %v1808 = vunpack.c.l.b16 %v1720
    %v1809 = vunpack.c.h.b16 %v1720
    %v1810 = vunpack.c.l.b16 %v1721
    %v1811 = vunpack.c.h.b16 %v1721
    %v1812 = vunpack.c.l.b16 %v1722
    %v1813 = vunpack.c.h.b16 %v1722
    %v1814 = vunpack.c.l.b16 %v1723
    %v1815 = vunpack.c.h.b16 %v1723
    %v1816 = vunpack.c.l.b16 %v1724
    %v1817 = vunpack.c.h.b16 %v1724
    %v1818 = vunpack.c.l.b16 %v1725
    %v1819 = vunpack.c.h.b16 %v1725
    %v1820 = vunpack.c.l.b16 %v1726
    %v1821 = vunpack.c.h.b16 %v1726
    %v1822 = vunpack.c.l.b16 %v1727
    %v1823 = vunpack.c.h.b16 %v1727
    %v1824 = vpack.c.b16 %v1764, %v1760
    %v1825 = vpack.c.b16 %v1765, %v1761
    %v1826 = vpack.c.b16 %v1766, %v1762
    %v1827 = vpack.c.b16 %v1767, %v1763
    %v1828 = vpack.c.b16 %v1772, %v1768
    %v1829 = vpack.c.b16 %v1773, %v1769
    %v1830 = vpack.c.b16 %v1774, %v1770
    %v1831 = vpack.c.b16 %v1775, %v1771
    %v1832 = vpack.c.b16 %v1780, %v1776
    %v1833 = vpack.c.b16 %v1781, %v1777
    %v1834 = vpack.c.b16 %v1782, %v1778
    %v1835 = vpack.c.b16 %v1783, %v1779
    %v1836 = vpack.c.b16 %v1788, %v1784
    %v1837 = vpack.c.b16 %v1789, %v1785
    %v1838 = vpack.c.b16 %v1790, %v1786
    %v1839 = vpack.c.b16 %v1791, %v1787
    %v1840 = vpack.c.b16 %v1796, %v1792
    %v1841 = vpack.c.b16 %v1797, %v1793
    %v1842 = vpack.c.b16 %v1798, %v1794
    %v1843 = vpack.c.b16 %v1799, %v1795
    %v1844 = vpack.c.b16 %v1804, %v1800
    %v1845 = vpack.c.b16 %v1805, %v1801
    %v1846 = vpack.c.b16 %v1806, %v1802
    %v1847 = vpack.c.b16 %v1807, %v1803
    %v1848 = vpack.c.b16 %v1812, %v1808
    %v1849 = vpack.c.b16 %v1813, %v1809
    %v1850 = vpack.c.b16 %v1814, %v1810
    %v1851 = vpack.c.b16 %v1815, %v1811
    %v1852 = vpack.c.b16 %v1820, %v1816
    %v1853 = vpack.c.b16 %v1821, %v1817
    %v1854 = vpack.c.b16 %v1822, %v1818
    %v1855 = vpack.c.b16 %v1823, %v1819
    %1888 = vmatpush.bf16.msra.mxu0 %v1852
    %1889 = vmatpush.bf16.msra.mxu0 %v1848
    %1890 = vmatpush.bf16.msra.mxu0 %v1844
    %1891 = vmatpush.bf16.msra.mxu0 %v1840
    %1892 = vmatpush.bf16.msra.mxu0 %v1836
    %1893 = vmatpush.bf16.msra.mxu0 %v1832
    %1894 = vmatpush.bf16.msra.mxu0 %v1828
    %1895 = vmatpush.bf16.msra.mxu0 %v1824
    %1896 = vmatmul.bf16.gmra.mxu0 0
    %v1897 = vpop.f32.mrf.mxu0
    %v1898 = vadd.f32 0.0, %v1897
    %v1899 = vpop.f32.mrf.mxu0
    %1900 = vdwg.mxu0
    %1901 = vmatpush.bf16.msra.mxu0 %v1853
    %1902 = vmatpush.bf16.msra.mxu0 %v1849
    %1903 = vmatpush.bf16.msra.mxu0 %v1845
    %1904 = vmatpush.bf16.msra.mxu0 %v1841
    %1905 = vmatpush.bf16.msra.mxu0 %v1837
    %1906 = vmatpush.bf16.msra.mxu0 %v1833
    %1907 = vmatpush.bf16.msra.mxu0 %v1829
    %1908 = vmatpush.bf16.msra.mxu0 %v1825
    %1909 = vmatmul.bf16.gmra.mxu0 0
    %v1910 = vpop.f32.mrf.mxu0
    %v1911 = vadd.f32 0.0, %v1910
    %v1912 = vpop.f32.mrf.mxu0
    %1913 = vdwg.mxu0
    %1914 = vmatpush.bf16.msra.mxu0 %v1854
    %1915 = vmatpush.bf16.msra.mxu0 %v1850
    %1916 = vmatpush.bf16.msra.mxu0 %v1846
    %1917 = vmatpush.bf16.msra.mxu0 %v1842
    %1918 = vmatpush.bf16.msra.mxu0 %v1838
    %1919 = vmatpush.bf16.msra.mxu0 %v1834
    %1920 = vmatpush.bf16.msra.mxu0 %v1830
    %1921 = vmatpush.bf16.msra.mxu0 %v1826
    %1922 = vmatmul.bf16.gmra.mxu0 0
    %v1923 = vpop.f32.mrf.mxu0
    %v1924 = vadd.f32 0.0, %v1923
    %v1925 = vpop.f32.mrf.mxu0
    %1926 = vdwg.mxu0
    %1927 = vmatpush.bf16.msra.mxu0 %v1855
    %1928 = vmatpush.bf16.msra.mxu0 %v1851
    %1929 = vmatpush.bf16.msra.mxu0 %v1847
    %1930 = vmatpush.bf16.msra.mxu0 %v1843
    %1931 = vmatpush.bf16.msra.mxu0 %v1839
    %1932 = vmatpush.bf16.msra.mxu0 %v1835
    %1933 = vmatpush.bf16.msra.mxu0 %v1831
    %1934 = vmatpush.bf16.msra.mxu0 %v1827
    %1935 = vmatmul.bf16.gmra.mxu0 0
    %v1936 = vpop.f32.mrf.mxu0
    %v1937 = vadd.f32 0.0, %v1936
    %v1938 = vpop.f32.mrf.mxu0
    %1939 = vdwg.mxu0
    %v1940 = vadd.f32 %v1650, %v1898
    %v1941 = vadd.f32 %v1664, %v1911
    %v1942 = vadd.f32 %v1678, %v1924
    %v1943 = vadd.f32 %v1692, %v1937
    %v1944 = vxor.u32 %v1940, 2147483648
    %v1945 = vmul.f32 %v1944, 1.442695
    %v1946 = vpow.pop %v1945
    %v1947 = vadd.f32 %v1946, 1.0
    %v1948 = vrcp.pop %v1947
    %v1949 = vmul.f32 %v1947, %v1948
    %v1950 = vsub.f32 1.0, %v1949
    %v1951 = vmul.f32 %v1948, %v1950
    %v1952 = vadd.f32 %v1948, %v1951
    %vm1953 = vweird.f32 %v1947
    %vm1954 = vweird.f32 %v1948
    %vm1955 = vmor %vm1953, %vm1954
    %v1956 = vsel %vm1955, %v1948, %v1952
    %v1957 = vand.u32 2147483647, %v1947
    %vm1958 = vcmp.eq.f32.partialorder %v1957, 8.507059e+37
    %v1959 = vand.u32 %v1947, 2147483648
    %v1960 = vor.u32 1.1754944e-38, %v1959
    %v1961 = vsel %vm1958, %v1960, %v1956
    %v1962 = vmul.f32 1.0, %v1961
    %v1963 = vxor.u32 %v1941, 2147483648
    %v1964 = vmul.f32 %v1963, 1.442695
    %v1965 = vpow.pop %v1964
    %v1966 = vadd.f32 %v1965, 1.0
    %v1967 = vrcp.pop %v1966
    %v1968 = vmul.f32 %v1966, %v1967
    %v1969 = vsub.f32 1.0, %v1968
    %v1970 = vmul.f32 %v1967, %v1969
    %v1971 = vadd.f32 %v1967, %v1970
    %vm1972 = vweird.f32 %v1966
    %vm1973 = vweird.f32 %v1967
    %vm1974 = vmor %vm1972, %vm1973
    %v1975 = vsel %vm1974, %v1967, %v1971
    %v1976 = vand.u32 2147483647, %v1966
    %vm1977 = vcmp.eq.f32.partialorder %v1976, 8.507059e+37
    %v1978 = vand.u32 %v1966, 2147483648
    %v1979 = vor.u32 1.1754944e-38, %v1978
    %v1980 = vsel %vm1977, %v1979, %v1975
    %v1981 = vmul.f32 1.0, %v1980
    %v1982 = vtanh.pop %v1942
    %v1983 = vxor.u32 %v1943, 2147483648
    %v1984 = vmul.f32 %v1983, 1.442695
    %v1985 = vpow.pop %v1984
    %v1986 = vadd.f32 %v1985, 1.0
    %v1987 = vrcp.pop %v1986
    %v1988 = vmul.f32 %v1986, %v1987
    %v1989 = vsub.f32 1.0, %v1988
    %v1990 = vmul.f32 %v1987, %v1989
    %v1991 = vadd.f32 %v1987, %v1990
    %vm1992 = vweird.f32 %v1986
    %vm1993 = vweird.f32 %v1987
    %vm1994 = vmor %vm1992, %vm1993
    %v1995 = vsel %vm1994, %v1987, %v1991
    %v1996 = vand.u32 2147483647, %v1986
    %vm1997 = vcmp.eq.f32.partialorder %v1996, 8.507059e+37
    %v1998 = vand.u32 %v1986, 2147483648
    %v1999 = vor.u32 1.1754944e-38, %v1998
    %v2000 = vsel %vm1997, %v1999, %v1995
    %v2001 = vmul.f32 1.0, %v2000
    %v2002 = vmul.f32 %v1981, 0.0
    %v2003 = vmul.f32 %v1962, %v1982
    %v2004 = vadd.f32 %v2002, %v2003
    %v2005 = vtanh.pop %v2004
    %v2006 = vmul.f32 %v2001, %v2005
    %v2007 = vpack.c.bf16 %v2006, %v2006
    %2008 = vmatpush.bf16.msra.mxu0 %v1852
    %2009 = vmatpush.bf16.msra.mxu0 %v1848
    %2010 = vmatpush.bf16.msra.mxu0 %v1844
    %2011 = vmatpush.bf16.msra.mxu0 %v1840
    %2012 = vmatpush.bf16.msra.mxu0 %v1836
    %2013 = vmatpush.bf16.msra.mxu0 %v1832
    %2014 = vmatpush.bf16.msra.mxu0 %v1828
    %2015 = vmatpush.bf16.msra.mxu0 %v1824
    %2016 = vmatmul.bf16.gmra.mxu0 %v2007
    %v2017 = vpop.f32.mrf.mxu0
    %v2018 = vadd.f32 0.0, %v2017
    %v2019 = vpop.f32.mrf.mxu0
    %2020 = vdwg.mxu0
    %2021 = vmatpush.bf16.msra.mxu0 %v1853
    %2022 = vmatpush.bf16.msra.mxu0 %v1849
    %2023 = vmatpush.bf16.msra.mxu0 %v1845
    %2024 = vmatpush.bf16.msra.mxu0 %v1841
    %2025 = vmatpush.bf16.msra.mxu0 %v1837
    %2026 = vmatpush.bf16.msra.mxu0 %v1833
    %2027 = vmatpush.bf16.msra.mxu0 %v1829
    %2028 = vmatpush.bf16.msra.mxu0 %v1825
    %2029 = vmatmul.bf16.gmra.mxu0 %v2007
    %v2030 = vpop.f32.mrf.mxu0
    %v2031 = vadd.f32 0.0, %v2030
    %v2032 = vpop.f32.mrf.mxu0
    %2033 = vdwg.mxu0
    %2034 = vmatpush.bf16.msra.mxu0 %v1854
    %2035 = vmatpush.bf16.msra.mxu0 %v1850
    %2036 = vmatpush.bf16.msra.mxu0 %v1846
    %2037 = vmatpush.bf16.msra.mxu0 %v1842
    %2038 = vmatpush.bf16.msra.mxu0 %v1838
    %2039 = vmatpush.bf16.msra.mxu0 %v1834
    %2040 = vmatpush.bf16.msra.mxu0 %v1830
    %2041 = vmatpush.bf16.msra.mxu0 %v1826
    %2042 = vmatmul.bf16.gmra.mxu0 %v2007
    %v2043 = vpop.f32.mrf.mxu0
    %v2044 = vadd.f32 0.0, %v2043
    %v2045 = vpop.f32.mrf.mxu0
    %2046 = vdwg.mxu0
    %2047 = vmatpush.bf16.msra.mxu0 %v1855
    %2048 = vmatpush.bf16.msra.mxu0 %v1851
    %2049 = vmatpush.bf16.msra.mxu0 %v1847
    %2050 = vmatpush.bf16.msra.mxu0 %v1843
    %2051 = vmatpush.bf16.msra.mxu0 %v1839
    %2052 = vmatpush.bf16.msra.mxu0 %v1835
    %2053 = vmatpush.bf16.msra.mxu0 %v1831
    %2054 = vmatpush.bf16.msra.mxu0 %v1827
    %2055 = vmatmul.bf16.gmra.mxu0 %v2007
    %v2056 = vpop.f32.mrf.mxu0
    %v2057 = vadd.f32 0.0, %v2056
    %v2058 = vpop.f32.mrf.mxu0
    %2059 = vdwg.mxu0
    %v2064 = vrot.slane %v2018, 6
    %v2065 = vrot.slane %v2031, 6
    %v2066 = vrot.slane %v2044, 6
    %v2067 = vrot.slane %v2057, 6
    %v2072 = vadd.f32 %v1650, %v2064
    %v2073 = vadd.f32 %v1664, %v2065
    %v2074 = vadd.f32 %v1678, %v2066
    %v2075 = vadd.f32 %v1692, %v2067
    %v2076 = vxor.u32 %v2072, 2147483648
    %v2077 = vmul.f32 %v2076, 1.442695
    %v2078 = vpow.pop %v2077
    %v2079 = vadd.f32 %v2078, 1.0
    %v2080 = vrcp.pop %v2079
    %v2081 = vmul.f32 %v2079, %v2080
    %v2082 = vsub.f32 1.0, %v2081
    %v2083 = vmul.f32 %v2080, %v2082
    %v2084 = vadd.f32 %v2080, %v2083
    %vm2085 = vweird.f32 %v2079
    %vm2086 = vweird.f32 %v2080
    %vm2087 = vmor %vm2085, %vm2086
    %v2088 = vsel %vm2087, %v2080, %v2084
    %v2089 = vand.u32 2147483647, %v2079
    %vm2090 = vcmp.eq.f32.partialorder %v2089, 8.507059e+37
    %v2091 = vand.u32 %v2079, 2147483648
    %v2092 = vor.u32 1.1754944e-38, %v2091
    %v2093 = vsel %vm2090, %v2092, %v2088
    %v2094 = vmul.f32 1.0, %v2093
    %v2095 = vxor.u32 %v2073, 2147483648
    %v2096 = vmul.f32 %v2095, 1.442695
    %v2097 = vpow.pop %v2096
    %v2098 = vadd.f32 %v2097, 1.0
    %v2099 = vrcp.pop %v2098
    %v2100 = vmul.f32 %v2098, %v2099
    %v2101 = vsub.f32 1.0, %v2100
    %v2102 = vmul.f32 %v2099, %v2101
    %v2103 = vadd.f32 %v2099, %v2102
    %vm2104 = vweird.f32 %v2098
    %vm2105 = vweird.f32 %v2099
    %vm2106 = vmor %vm2104, %vm2105
    %v2107 = vsel %vm2106, %v2099, %v2103
    %v2108 = vand.u32 2147483647, %v2098
    %vm2109 = vcmp.eq.f32.partialorder %v2108, 8.507059e+37
    %v2110 = vand.u32 %v2098, 2147483648
    %v2111 = vor.u32 1.1754944e-38, %v2110
    %v2112 = vsel %vm2109, %v2111, %v2107
    %v2113 = vmul.f32 1.0, %v2112
    %v2114 = vtanh.pop %v2074
    %v2115 = vxor.u32 %v2075, 2147483648
    %v2116 = vmul.f32 %v2115, 1.442695
    %v2117 = vpow.pop %v2116
    %v2118 = vadd.f32 %v2117, 1.0
    %v2119 = vrcp.pop %v2118
    %v2120 = vmul.f32 %v2118, %v2119
    %v2121 = vsub.f32 1.0, %v2120
    %v2122 = vmul.f32 %v2119, %v2121
    %v2123 = vadd.f32 %v2119, %v2122
    %vm2124 = vweird.f32 %v2118
    %vm2125 = vweird.f32 %v2119
    %vm2126 = vmor %vm2124, %vm2125
    %v2127 = vsel %vm2126, %v2119, %v2123
    %v2128 = vand.u32 2147483647, %v2118
    %vm2129 = vcmp.eq.f32.partialorder %v2128, 8.507059e+37
    %v2130 = vand.u32 %v2118, 2147483648
    %v2131 = vor.u32 1.1754944e-38, %v2130
    %v2132 = vsel %vm2129, %v2131, %v2127
    %v2133 = vmul.f32 1.0, %v2132
    %v2135 = vrot.slane %v2004, 6
    %v2137 = vmul.f32 %v2113, %v2135
    %v2138 = vmul.f32 %v2094, %v2114
    %v2139 = vadd.f32 %v2137, %v2138
    %v2140 = vtanh.pop %v2139
    %v2141 = vmul.f32 %v2133, %v2140
    %v2142 = vpack.c.bf16 %v2141, %v2141
    %v2144 = vrot.slane %v2142, 1
    %2146 = vmatpush.bf16.msra.mxu0 %v1852
    %2147 = vmatpush.bf16.msra.mxu0 %v1848
    %2148 = vmatpush.bf16.msra.mxu0 %v1844
    %2149 = vmatpush.bf16.msra.mxu0 %v1840
    %2150 = vmatpush.bf16.msra.mxu0 %v1836
    %2151 = vmatpush.bf16.msra.mxu0 %v1832
    %2152 = vmatpush.bf16.msra.mxu0 %v1828
    %2153 = vmatpush.bf16.msra.mxu0 %v1824
    %2154 = vmatmul.bf16.gmra.mxu0 %v2144
    %v2155 = vpop.f32.mrf.mxu0
    %v2156 = vadd.f32 0.0, %v2155
    %v2157 = vpop.f32.mrf.mxu0
    %2158 = vdwg.mxu0
    %2159 = vmatpush.bf16.msra.mxu0 %v1853
    %2160 = vmatpush.bf16.msra.mxu0 %v1849
    %2161 = vmatpush.bf16.msra.mxu0 %v1845
    %2162 = vmatpush.bf16.msra.mxu0 %v1841
    %2163 = vmatpush.bf16.msra.mxu0 %v1837
    %2164 = vmatpush.bf16.msra.mxu0 %v1833
    %2165 = vmatpush.bf16.msra.mxu0 %v1829
    %2166 = vmatpush.bf16.msra.mxu0 %v1825
    %2167 = vmatmul.bf16.gmra.mxu0 %v2144
    %v2168 = vpop.f32.mrf.mxu0
    %v2169 = vadd.f32 0.0, %v2168
    %v2170 = vpop.f32.mrf.mxu0
    %2171 = vdwg.mxu0
    %2172 = vmatpush.bf16.msra.mxu0 %v1854
    %2173 = vmatpush.bf16.msra.mxu0 %v1850
    %2174 = vmatpush.bf16.msra.mxu0 %v1846
    %2175 = vmatpush.bf16.msra.mxu0 %v1842
    %2176 = vmatpush.bf16.msra.mxu0 %v1838
    %2177 = vmatpush.bf16.msra.mxu0 %v1834
    %2178 = vmatpush.bf16.msra.mxu0 %v1830
    %2179 = vmatpush.bf16.msra.mxu0 %v1826
    %2180 = vmatmul.bf16.gmra.mxu0 %v2144
    %v2181 = vpop.f32.mrf.mxu0
    %v2182 = vadd.f32 0.0, %v2181
    %v2183 = vpop.f32.mrf.mxu0
    %2184 = vdwg.mxu0
    %2185 = vmatpush.bf16.msra.mxu0 %v1855
    %2186 = vmatpush.bf16.msra.mxu0 %v1851
    %2187 = vmatpush.bf16.msra.mxu0 %v1847
    %2188 = vmatpush.bf16.msra.mxu0 %v1843
    %2189 = vmatpush.bf16.msra.mxu0 %v1839
    %2190 = vmatpush.bf16.msra.mxu0 %v1835
    %2191 = vmatpush.bf16.msra.mxu0 %v1831
    %2192 = vmatpush.bf16.msra.mxu0 %v1827
    %2193 = vmatmul.bf16.gmra.mxu0 %v2144
    %v2194 = vpop.f32.mrf.mxu0
    %v2195 = vadd.f32 0.0, %v2194
    %v2196 = vpop.f32.mrf.mxu0
    %2197 = vdwg.mxu0
    %v2202 = vrot.slane %v2156, 4
    %v2203 = vrot.slane %v2169, 4
    %v2204 = vrot.slane %v2182, 4
    %v2205 = vrot.slane %v2195, 4
    %v2210 = vadd.f32 %v1650, %v2202
    %v2211 = vadd.f32 %v1664, %v2203
    %v2212 = vadd.f32 %v1678, %v2204
    %v2213 = vadd.f32 %v1692, %v2205
    %v2214 = vxor.u32 %v2210, 2147483648
    %v2215 = vmul.f32 %v2214, 1.442695
    %v2216 = vpow.pop %v2215
    %v2217 = vadd.f32 %v2216, 1.0
    %v2218 = vrcp.pop %v2217
    %v2219 = vmul.f32 %v2217, %v2218
    %v2220 = vsub.f32 1.0, %v2219
    %v2221 = vmul.f32 %v2218, %v2220
    %v2222 = vadd.f32 %v2218, %v2221
    %vm2223 = vweird.f32 %v2217
    %vm2224 = vweird.f32 %v2218
    %vm2225 = vmor %vm2223, %vm2224
    %v2226 = vsel %vm2225, %v2218, %v2222
    %v2227 = vand.u32 2147483647, %v2217
    %vm2228 = vcmp.eq.f32.partialorder %v2227, 8.507059e+37
    %v2229 = vand.u32 %v2217, 2147483648
    %v2230 = vor.u32 1.1754944e-38, %v2229
    %v2231 = vsel %vm2228, %v2230, %v2226
    %v2232 = vmul.f32 1.0, %v2231
    %v2233 = vxor.u32 %v2211, 2147483648
    %v2234 = vmul.f32 %v2233, 1.442695
    %v2235 = vpow.pop %v2234
    %v2236 = vadd.f32 %v2235, 1.0
    %v2237 = vrcp.pop %v2236
    %v2238 = vmul.f32 %v2236, %v2237
    %v2239 = vsub.f32 1.0, %v2238
    %v2240 = vmul.f32 %v2237, %v2239
    %v2241 = vadd.f32 %v2237, %v2240
    %vm2242 = vweird.f32 %v2236
    %vm2243 = vweird.f32 %v2237
    %vm2244 = vmor %vm2242, %vm2243
    %v2245 = vsel %vm2244, %v2237, %v2241
    %v2246 = vand.u32 2147483647, %v2236
    %vm2247 = vcmp.eq.f32.partialorder %v2246, 8.507059e+37
    %v2248 = vand.u32 %v2236, 2147483648
    %v2249 = vor.u32 1.1754944e-38, %v2248
    %v2250 = vsel %vm2247, %v2249, %v2245
    %v2251 = vmul.f32 1.0, %v2250
    %v2252 = vtanh.pop %v2212
    %v2253 = vxor.u32 %v2213, 2147483648
    %v2254 = vmul.f32 %v2253, 1.442695
    %v2255 = vpow.pop %v2254
    %v2256 = vadd.f32 %v2255, 1.0
    %v2257 = vrcp.pop %v2256
    %v2258 = vmul.f32 %v2256, %v2257
    %v2259 = vsub.f32 1.0, %v2258
    %v2260 = vmul.f32 %v2257, %v2259
    %v2261 = vadd.f32 %v2257, %v2260
    %vm2262 = vweird.f32 %v2256
    %vm2263 = vweird.f32 %v2257
    %vm2264 = vmor %vm2262, %vm2263
    %v2265 = vsel %vm2264, %v2257, %v2261
    %v2266 = vand.u32 2147483647, %v2256
    %vm2267 = vcmp.eq.f32.partialorder %v2266, 8.507059e+37
    %v2268 = vand.u32 %v2256, 2147483648
    %v2269 = vor.u32 1.1754944e-38, %v2268
    %v2270 = vsel %vm2267, %v2269, %v2265
    %v2271 = vmul.f32 1.0, %v2270
    %v2273 = vrot.slane %v2139, 6
    %v2275 = vmul.f32 %v2251, %v2273
    %v2276 = vmul.f32 %v2232, %v2252
    %v2277 = vadd.f32 %v2275, %v2276
    %v2278 = vtanh.pop %v2277
    %v2279 = vmul.f32 %v2271, %v2278
    %v2280 = vpack.c.bf16 %v2279, %v2279
    %v2282 = vrot.slane %v2280, 2
    %2284 = vmatpush.bf16.msra.mxu0 %v1852
    %2285 = vmatpush.bf16.msra.mxu0 %v1848
    %2286 = vmatpush.bf16.msra.mxu0 %v1844
    %2287 = vmatpush.bf16.msra.mxu0 %v1840
    %2288 = vmatpush.bf16.msra.mxu0 %v1836
    %2289 = vmatpush.bf16.msra.mxu0 %v1832
    %2290 = vmatpush.bf16.msra.mxu0 %v1828
    %2291 = vmatpush.bf16.msra.mxu0 %v1824
    %2292 = vmatmul.bf16.gmra.mxu0 %v2282
    %v2293 = vpop.f32.mrf.mxu0
    %v2294 = vadd.f32 0.0, %v2293
    %v2295 = vpop.f32.mrf.mxu0
    %2296 = vdwg.mxu0
    %2297 = vmatpush.bf16.msra.mxu0 %v1853
    %2298 = vmatpush.bf16.msra.mxu0 %v1849
    %2299 = vmatpush.bf16.msra.mxu0 %v1845
    %2300 = vmatpush.bf16.msra.mxu0 %v1841
    %2301 = vmatpush.bf16.msra.mxu0 %v1837
    %2302 = vmatpush.bf16.msra.mxu0 %v1833
    %2303 = vmatpush.bf16.msra.mxu0 %v1829
    %2304 = vmatpush.bf16.msra.mxu0 %v1825
    %2305 = vmatmul.bf16.gmra.mxu0 %v2282
    %v2306 = vpop.f32.mrf.mxu0
    %v2307 = vadd.f32 0.0, %v2306
    %v2308 = vpop.f32.mrf.mxu0
    %2309 = vdwg.mxu0
    %2310 = vmatpush.bf16.msra.mxu0 %v1854
    %2311 = vmatpush.bf16.msra.mxu0 %v1850
    %2312 = vmatpush.bf16.msra.mxu0 %v1846
    %2313 = vmatpush.bf16.msra.mxu0 %v1842
    %2314 = vmatpush.bf16.msra.mxu0 %v1838
    %2315 = vmatpush.bf16.msra.mxu0 %v1834
    %2316 = vmatpush.bf16.msra.mxu0 %v1830
    %2317 = vmatpush.bf16.msra.mxu0 %v1826
    %2318 = vmatmul.bf16.gmra.mxu0 %v2282
    %v2319 = vpop.f32.mrf.mxu0
    %v2320 = vadd.f32 0.0, %v2319
    %v2321 = vpop.f32.mrf.mxu0
    %2322 = vdwg.mxu0
    %2323 = vmatpush.bf16.msra.mxu0 %v1855
    %2324 = vmatpush.bf16.msra.mxu0 %v1851
    %2325 = vmatpush.bf16.msra.mxu0 %v1847
    %2326 = vmatpush.bf16.msra.mxu0 %v1843
    %2327 = vmatpush.bf16.msra.mxu0 %v1839
    %2328 = vmatpush.bf16.msra.mxu0 %v1835
    %2329 = vmatpush.bf16.msra.mxu0 %v1831
    %2330 = vmatpush.bf16.msra.mxu0 %v1827
    %2331 = vmatmul.bf16.gmra.mxu0 %v2282
    %v2332 = vpop.f32.mrf.mxu0
    %v2333 = vadd.f32 0.0, %v2332
    %v2334 = vpop.f32.mrf.mxu0
    %2335 = vdwg.mxu0
    %v2340 = vrot.slane %v2294, 2
    %v2341 = vrot.slane %v2307, 2
    %v2342 = vrot.slane %v2320, 2
    %v2343 = vrot.slane %v2333, 2
    %v2348 = vadd.f32 %v1650, %v2340
    %v2349 = vadd.f32 %v1664, %v2341
    %v2350 = vadd.f32 %v1678, %v2342
    %v2351 = vadd.f32 %v1692, %v2343
    %v2352 = vxor.u32 %v2348, 2147483648
    %v2353 = vmul.f32 %v2352, 1.442695
    %v2354 = vpow.pop %v2353
    %v2355 = vadd.f32 %v2354, 1.0
    %v2356 = vrcp.pop %v2355
    %v2357 = vmul.f32 %v2355, %v2356
    %v2358 = vsub.f32 1.0, %v2357
    %v2359 = vmul.f32 %v2356, %v2358
    %v2360 = vadd.f32 %v2356, %v2359
    %vm2361 = vweird.f32 %v2355
    %vm2362 = vweird.f32 %v2356
    %vm2363 = vmor %vm2361, %vm2362
    %v2364 = vsel %vm2363, %v2356, %v2360
    %v2365 = vand.u32 2147483647, %v2355
    %vm2366 = vcmp.eq.f32.partialorder %v2365, 8.507059e+37
    %v2367 = vand.u32 %v2355, 2147483648
    %v2368 = vor.u32 1.1754944e-38, %v2367
    %v2369 = vsel %vm2366, %v2368, %v2364
    %v2370 = vmul.f32 1.0, %v2369
    %v2371 = vxor.u32 %v2349, 2147483648
    %v2372 = vmul.f32 %v2371, 1.442695
    %v2373 = vpow.pop %v2372
    %v2374 = vadd.f32 %v2373, 1.0
    %v2375 = vrcp.pop %v2374
    %v2376 = vmul.f32 %v2374, %v2375
    %v2377 = vsub.f32 1.0, %v2376
    %v2378 = vmul.f32 %v2375, %v2377
    %v2379 = vadd.f32 %v2375, %v2378
    %vm2380 = vweird.f32 %v2374
    %vm2381 = vweird.f32 %v2375
    %vm2382 = vmor %vm2380, %vm2381
    %v2383 = vsel %vm2382, %v2375, %v2379
    %v2384 = vand.u32 2147483647, %v2374
    %vm2385 = vcmp.eq.f32.partialorder %v2384, 8.507059e+37
    %v2386 = vand.u32 %v2374, 2147483648
    %v2387 = vor.u32 1.1754944e-38, %v2386
    %v2388 = vsel %vm2385, %v2387, %v2383
    %v2389 = vmul.f32 1.0, %v2388
    %v2390 = vtanh.pop %v2350
    %v2391 = vxor.u32 %v2351, 2147483648
    %v2392 = vmul.f32 %v2391, 1.442695
    %v2393 = vpow.pop %v2392
    %v2394 = vadd.f32 %v2393, 1.0
    %v2395 = vrcp.pop %v2394
    %v2396 = vmul.f32 %v2394, %v2395
    %v2397 = vsub.f32 1.0, %v2396
    %v2398 = vmul.f32 %v2395, %v2397
    %v2399 = vadd.f32 %v2395, %v2398
    %vm2400 = vweird.f32 %v2394
    %vm2401 = vweird.f32 %v2395
    %vm2402 = vmor %vm2400, %vm2401
    %v2403 = vsel %vm2402, %v2395, %v2399
    %v2404 = vand.u32 2147483647, %v2394
    %vm2405 = vcmp.eq.f32.partialorder %v2404, 8.507059e+37
    %v2406 = vand.u32 %v2394, 2147483648
    %v2407 = vor.u32 1.1754944e-38, %v2406
    %v2408 = vsel %vm2405, %v2407, %v2403
    %v2409 = vmul.f32 1.0, %v2408
    %v2411 = vrot.slane %v2277, 6
    %v2413 = vmul.f32 %v2389, %v2411
    %v2414 = vmul.f32 %v2370, %v2390
    %v2415 = vadd.f32 %v2413, %v2414
    %v2416 = vtanh.pop %v2415
    %v2417 = vmul.f32 %v2409, %v2416
    %v2418 = vpack.c.bf16 %v2417, %v2417
    %v2420 = vrot.slane %v2418, 3
    %2422 = vmatpush.bf16.msra.mxu0 %v1852
    %2423 = vmatpush.bf16.msra.mxu0 %v1848
    %2424 = vmatpush.bf16.msra.mxu0 %v1844
    %2425 = vmatpush.bf16.msra.mxu0 %v1840
    %2426 = vmatpush.bf16.msra.mxu0 %v1836
    %2427 = vmatpush.bf16.msra.mxu0 %v1832
    %2428 = vmatpush.bf16.msra.mxu0 %v1828
    %2429 = vmatpush.bf16.msra.mxu0 %v1824
    %2430 = vmatmul.bf16.gmra.mxu0 %v2420
    %v2431 = vpop.f32.mrf.mxu0
    %v2432 = vadd.f32 0.0, %v2431
    %v2433 = vpop.f32.mrf.mxu0
    %2434 = vdwg.mxu0
    %2435 = vmatpush.bf16.msra.mxu0 %v1853
    %2436 = vmatpush.bf16.msra.mxu0 %v1849
    %2437 = vmatpush.bf16.msra.mxu0 %v1845
    %2438 = vmatpush.bf16.msra.mxu0 %v1841
    %2439 = vmatpush.bf16.msra.mxu0 %v1837
    %2440 = vmatpush.bf16.msra.mxu0 %v1833
    %2441 = vmatpush.bf16.msra.mxu0 %v1829
    %2442 = vmatpush.bf16.msra.mxu0 %v1825
    %2443 = vmatmul.bf16.gmra.mxu0 %v2420
    %v2444 = vpop.f32.mrf.mxu0
    %v2445 = vadd.f32 0.0, %v2444
    %v2446 = vpop.f32.mrf.mxu0
    %2447 = vdwg.mxu0
    %2448 = vmatpush.bf16.msra.mxu0 %v1854
    %2449 = vmatpush.bf16.msra.mxu0 %v1850
    %2450 = vmatpush.bf16.msra.mxu0 %v1846
    %2451 = vmatpush.bf16.msra.mxu0 %v1842
    %2452 = vmatpush.bf16.msra.mxu0 %v1838
    %2453 = vmatpush.bf16.msra.mxu0 %v1834
    %2454 = vmatpush.bf16.msra.mxu0 %v1830
    %2455 = vmatpush.bf16.msra.mxu0 %v1826
    %2456 = vmatmul.bf16.gmra.mxu0 %v2420
    %v2457 = vpop.f32.mrf.mxu0
    %v2458 = vadd.f32 0.0, %v2457
    %v2459 = vpop.f32.mrf.mxu0
    %2460 = vdwg.mxu0
    %2461 = vmatpush.bf16.msra.mxu0 %v1855
    %2462 = vmatpush.bf16.msra.mxu0 %v1851
    %2463 = vmatpush.bf16.msra.mxu0 %v1847
    %2464 = vmatpush.bf16.msra.mxu0 %v1843
    %2465 = vmatpush.bf16.msra.mxu0 %v1839
    %2466 = vmatpush.bf16.msra.mxu0 %v1835
    %2467 = vmatpush.bf16.msra.mxu0 %v1831
    %2468 = vmatpush.bf16.msra.mxu0 %v1827
    %2469 = vmatmul.bf16.gmra.mxu0 %v2420
    %v2470 = vpop.f32.mrf.mxu0
    %v2471 = vadd.f32 0.0, %v2470
    %v2472 = vpop.f32.mrf.mxu0
    %2473 = vdwg.mxu0
    %v2474 = vadd.f32 %v1652, %v2432
    %v2475 = vadd.f32 %v1666, %v2445
    %v2476 = vadd.f32 %v1680, %v2458
    %v2477 = vadd.f32 %v1694, %v2471
    %v2478 = vxor.u32 %v2474, 2147483648
    %v2479 = vmul.f32 %v2478, 1.442695
    %v2480 = vpow.pop %v2479
    %v2481 = vadd.f32 %v2480, 1.0
    %v2482 = vrcp.pop %v2481
    %v2483 = vmul.f32 %v2481, %v2482
    %v2484 = vsub.f32 1.0, %v2483
    %v2485 = vmul.f32 %v2482, %v2484
    %v2486 = vadd.f32 %v2482, %v2485
    %vm2487 = vweird.f32 %v2481
    %vm2488 = vweird.f32 %v2482
    %vm2489 = vmor %vm2487, %vm2488
    %v2490 = vsel %vm2489, %v2482, %v2486
    %v2491 = vand.u32 2147483647, %v2481
    %vm2492 = vcmp.eq.f32.partialorder %v2491, 8.507059e+37
    %v2493 = vand.u32 %v2481, 2147483648
    %v2494 = vor.u32 1.1754944e-38, %v2493
    %v2495 = vsel %vm2492, %v2494, %v2490
    %v2496 = vmul.f32 1.0, %v2495
    %v2497 = vxor.u32 %v2475, 2147483648
    %v2498 = vmul.f32 %v2497, 1.442695
    %v2499 = vpow.pop %v2498
    %v2500 = vadd.f32 %v2499, 1.0
    %v2501 = vrcp.pop %v2500
    %v2502 = vmul.f32 %v2500, %v2501
    %v2503 = vsub.f32 1.0, %v2502
    %v2504 = vmul.f32 %v2501, %v2503
    %v2505 = vadd.f32 %v2501, %v2504
    %vm2506 = vweird.f32 %v2500
    %vm2507 = vweird.f32 %v2501
    %vm2508 = vmor %vm2506, %vm2507
    %v2509 = vsel %vm2508, %v2501, %v2505
    %v2510 = vand.u32 2147483647, %v2500
    %vm2511 = vcmp.eq.f32.partialorder %v2510, 8.507059e+37
    %v2512 = vand.u32 %v2500, 2147483648
    %v2513 = vor.u32 1.1754944e-38, %v2512
    %v2514 = vsel %vm2511, %v2513, %v2509
    %v2515 = vmul.f32 1.0, %v2514
    %v2516 = vtanh.pop %v2476
    %v2517 = vxor.u32 %v2477, 2147483648
    %v2518 = vmul.f32 %v2517, 1.442695
    %v2519 = vpow.pop %v2518
    %v2520 = vadd.f32 %v2519, 1.0
    %v2521 = vrcp.pop %v2520
    %v2522 = vmul.f32 %v2520, %v2521
    %v2523 = vsub.f32 1.0, %v2522
    %v2524 = vmul.f32 %v2521, %v2523
    %v2525 = vadd.f32 %v2521, %v2524
    %vm2526 = vweird.f32 %v2520
    %vm2527 = vweird.f32 %v2521
    %vm2528 = vmor %vm2526, %vm2527
    %v2529 = vsel %vm2528, %v2521, %v2525
    %v2530 = vand.u32 2147483647, %v2520
    %vm2531 = vcmp.eq.f32.partialorder %v2530, 8.507059e+37
    %v2532 = vand.u32 %v2520, 2147483648
    %v2533 = vor.u32 1.1754944e-38, %v2532
    %v2534 = vsel %vm2531, %v2533, %v2529
    %v2535 = vmul.f32 1.0, %v2534
    %v2537 = vrot.slane %v2415, 6
    %v2539 = vmul.f32 %v2515, %v2537
    %v2540 = vmul.f32 %v2496, %v2516
    %v2541 = vadd.f32 %v2539, %v2540
    %v2542 = vtanh.pop %v2541
    %v2543 = vmul.f32 %v2535, %v2542
    %v2544 = vpack.c.bf16 %v2543, %v2543
    %2545 = vmatpush.bf16.msra.mxu0 %v1852
    %2546 = vmatpush.bf16.msra.mxu0 %v1848
    %2547 = vmatpush.bf16.msra.mxu0 %v1844
    %2548 = vmatpush.bf16.msra.mxu0 %v1840
    %2549 = vmatpush.bf16.msra.mxu0 %v1836
    %2550 = vmatpush.bf16.msra.mxu0 %v1832
    %2551 = vmatpush.bf16.msra.mxu0 %v1828
    %2552 = vmatpush.bf16.msra.mxu0 %v1824
    %2553 = vmatmul.bf16.gmra.mxu0 %v2544
    %v2554 = vpop.f32.mrf.mxu0
    %v2555 = vadd.f32 0.0, %v2554
    %v2556 = vpop.f32.mrf.mxu0
    %2557 = vdwg.mxu0
    %2558 = vmatpush.bf16.msra.mxu0 %v1853
    %2559 = vmatpush.bf16.msra.mxu0 %v1849
    %2560 = vmatpush.bf16.msra.mxu0 %v1845
    %2561 = vmatpush.bf16.msra.mxu0 %v1841
    %2562 = vmatpush.bf16.msra.mxu0 %v1837
    %2563 = vmatpush.bf16.msra.mxu0 %v1833
    %2564 = vmatpush.bf16.msra.mxu0 %v1829
    %2565 = vmatpush.bf16.msra.mxu0 %v1825
    %2566 = vmatmul.bf16.gmra.mxu0 %v2544
    %v2567 = vpop.f32.mrf.mxu0
    %v2568 = vadd.f32 0.0, %v2567
    %v2569 = vpop.f32.mrf.mxu0
    %2570 = vdwg.mxu0
    %2571 = vmatpush.bf16.msra.mxu0 %v1854
    %2572 = vmatpush.bf16.msra.mxu0 %v1850
    %2573 = vmatpush.bf16.msra.mxu0 %v1846
    %2574 = vmatpush.bf16.msra.mxu0 %v1842
    %2575 = vmatpush.bf16.msra.mxu0 %v1838
    %2576 = vmatpush.bf16.msra.mxu0 %v1834
    %2577 = vmatpush.bf16.msra.mxu0 %v1830
    %2578 = vmatpush.bf16.msra.mxu0 %v1826
    %2579 = vmatmul.bf16.gmra.mxu0 %v2544
    %v2580 = vpop.f32.mrf.mxu0
    %v2581 = vadd.f32 0.0, %v2580
    %v2582 = vpop.f32.mrf.mxu0
    %2583 = vdwg.mxu0
    %2584 = vmatpush.bf16.msra.mxu0 %v1855
    %2585 = vmatpush.bf16.msra.mxu0 %v1851
    %2586 = vmatpush.bf16.msra.mxu0 %v1847
    %2587 = vmatpush.bf16.msra.mxu0 %v1843
    %2588 = vmatpush.bf16.msra.mxu0 %v1839
    %2589 = vmatpush.bf16.msra.mxu0 %v1835
    %2590 = vmatpush.bf16.msra.mxu0 %v1831
    %2591 = vmatpush.bf16.msra.mxu0 %v1827
    %2592 = vmatmul.bf16.gmra.mxu0 %v2544
    %v2593 = vpop.f32.mrf.mxu0
    %v2594 = vadd.f32 0.0, %v2593
    %v2595 = vpop.f32.mrf.mxu0
    %2596 = vdwg.mxu0
    %v2601 = vrot.slane %v2555, 6
    %v2602 = vrot.slane %v2568, 6
    %v2603 = vrot.slane %v2581, 6
    %v2604 = vrot.slane %v2594, 6
    %v2609 = vadd.f32 %v1652, %v2601
    %v2610 = vadd.f32 %v1666, %v2602
    %v2611 = vadd.f32 %v1680, %v2603
    %v2612 = vadd.f32 %v1694, %v2604
    %v2613 = vxor.u32 %v2609, 2147483648
    %v2614 = vmul.f32 %v2613, 1.442695
    %v2615 = vpow.pop %v2614
    %v2616 = vadd.f32 %v2615, 1.0
    %v2617 = vrcp.pop %v2616
    %v2618 = vmul.f32 %v2616, %v2617
    %v2619 = vsub.f32 1.0, %v2618
    %v2620 = vmul.f32 %v2617, %v2619
    %v2621 = vadd.f32 %v2617, %v2620
    %vm2622 = vweird.f32 %v2616
    %vm2623 = vweird.f32 %v2617
    %vm2624 = vmor %vm2622, %vm2623
    %v2625 = vsel %vm2624, %v2617, %v2621
    %v2626 = vand.u32 2147483647, %v2616
    %vm2627 = vcmp.eq.f32.partialorder %v2626, 8.507059e+37
    %v2628 = vand.u32 %v2616, 2147483648
    %v2629 = vor.u32 1.1754944e-38, %v2628
    %v2630 = vsel %vm2627, %v2629, %v2625
    %v2631 = vmul.f32 1.0, %v2630
    %v2632 = vxor.u32 %v2610, 2147483648
    %v2633 = vmul.f32 %v2632, 1.442695
    %v2634 = vpow.pop %v2633
    %v2635 = vadd.f32 %v2634, 1.0
    %v2636 = vrcp.pop %v2635
    %v2637 = vmul.f32 %v2635, %v2636
    %v2638 = vsub.f32 1.0, %v2637
    %v2639 = vmul.f32 %v2636, %v2638
    %v2640 = vadd.f32 %v2636, %v2639
    %vm2641 = vweird.f32 %v2635
    %vm2642 = vweird.f32 %v2636
    %vm2643 = vmor %vm2641, %vm2642
    %v2644 = vsel %vm2643, %v2636, %v2640
    %v2645 = vand.u32 2147483647, %v2635
    %vm2646 = vcmp.eq.f32.partialorder %v2645, 8.507059e+37
    %v2647 = vand.u32 %v2635, 2147483648
    %v2648 = vor.u32 1.1754944e-38, %v2647
    %v2649 = vsel %vm2646, %v2648, %v2644
    %v2650 = vmul.f32 1.0, %v2649
    %v2651 = vtanh.pop %v2611
    %v2652 = vxor.u32 %v2612, 2147483648
    %v2653 = vmul.f32 %v2652, 1.442695
    %v2654 = vpow.pop %v2653
    %v2655 = vadd.f32 %v2654, 1.0
    %v2656 = vrcp.pop %v2655
    %v2657 = vmul.f32 %v2655, %v2656
    %v2658 = vsub.f32 1.0, %v2657
    %v2659 = vmul.f32 %v2656, %v2658
    %v2660 = vadd.f32 %v2656, %v2659
    %vm2661 = vweird.f32 %v2655
    %vm2662 = vweird.f32 %v2656
    %vm2663 = vmor %vm2661, %vm2662
    %v2664 = vsel %vm2663, %v2656, %v2660
    %v2665 = vand.u32 2147483647, %v2655
    %vm2666 = vcmp.eq.f32.partialorder %v2665, 8.507059e+37
    %v2667 = vand.u32 %v2655, 2147483648
    %v2668 = vor.u32 1.1754944e-38, %v2667
    %v2669 = vsel %vm2666, %v2668, %v2664
    %v2670 = vmul.f32 1.0, %v2669
    %v2672 = vrot.slane %v2541, 6
    %v2674 = vmul.f32 %v2650, %v2672
    %v2675 = vmul.f32 %v2631, %v2651
    %v2676 = vadd.f32 %v2674, %v2675
    %v2677 = vtanh.pop %v2676
    %v2678 = vmul.f32 %v2670, %v2677
    %v2679 = vpack.c.bf16 %v2678, %v2678
    %v2681 = vrot.slane %v2679, 1
    %2683 = vmatpush.bf16.msra.mxu0 %v1852
    %2684 = vmatpush.bf16.msra.mxu0 %v1848
    %2685 = vmatpush.bf16.msra.mxu0 %v1844
    %2686 = vmatpush.bf16.msra.mxu0 %v1840
    %2687 = vmatpush.bf16.msra.mxu0 %v1836
    %2688 = vmatpush.bf16.msra.mxu0 %v1832
    %2689 = vmatpush.bf16.msra.mxu0 %v1828
    %2690 = vmatpush.bf16.msra.mxu0 %v1824
    %2691 = vmatmul.bf16.gmra.mxu0 %v2681
    %v2692 = vpop.f32.mrf.mxu0
    %v2693 = vadd.f32 0.0, %v2692
    %v2694 = vpop.f32.mrf.mxu0
    %2695 = vdwg.mxu0
    %2696 = vmatpush.bf16.msra.mxu0 %v1853
    %2697 = vmatpush.bf16.msra.mxu0 %v1849
    %2698 = vmatpush.bf16.msra.mxu0 %v1845
    %2699 = vmatpush.bf16.msra.mxu0 %v1841
    %2700 = vmatpush.bf16.msra.mxu0 %v1837
    %2701 = vmatpush.bf16.msra.mxu0 %v1833
    %2702 = vmatpush.bf16.msra.mxu0 %v1829
    %2703 = vmatpush.bf16.msra.mxu0 %v1825
    %2704 = vmatmul.bf16.gmra.mxu0 %v2681
    %v2705 = vpop.f32.mrf.mxu0
    %v2706 = vadd.f32 0.0, %v2705
    %v2707 = vpop.f32.mrf.mxu0
    %2708 = vdwg.mxu0
    %2709 = vmatpush.bf16.msra.mxu0 %v1854
    %2710 = vmatpush.bf16.msra.mxu0 %v1850
    %2711 = vmatpush.bf16.msra.mxu0 %v1846
    %2712 = vmatpush.bf16.msra.mxu0 %v1842
    %2713 = vmatpush.bf16.msra.mxu0 %v1838
    %2714 = vmatpush.bf16.msra.mxu0 %v1834
    %2715 = vmatpush.bf16.msra.mxu0 %v1830
    %2716 = vmatpush.bf16.msra.mxu0 %v1826
    %2717 = vmatmul.bf16.gmra.mxu0 %v2681
    %v2718 = vpop.f32.mrf.mxu0
    %v2719 = vadd.f32 0.0, %v2718
    %v2720 = vpop.f32.mrf.mxu0
    %2721 = vdwg.mxu0
    %2722 = vmatpush.bf16.msra.mxu0 %v1855
    %2723 = vmatpush.bf16.msra.mxu0 %v1851
    %2724 = vmatpush.bf16.msra.mxu0 %v1847
    %2725 = vmatpush.bf16.msra.mxu0 %v1843
    %2726 = vmatpush.bf16.msra.mxu0 %v1839
    %2727 = vmatpush.bf16.msra.mxu0 %v1835
    %2728 = vmatpush.bf16.msra.mxu0 %v1831
    %2729 = vmatpush.bf16.msra.mxu0 %v1827
    %2730 = vmatmul.bf16.gmra.mxu0 %v2681
    %v2731 = vpop.f32.mrf.mxu0
    %v2732 = vadd.f32 0.0, %v2731
    %v2733 = vpop.f32.mrf.mxu0
    %2734 = vdwg.mxu0
    %v2739 = vrot.slane %v2693, 4
    %v2740 = vrot.slane %v2706, 4
    %v2741 = vrot.slane %v2719, 4
    %v2742 = vrot.slane %v2732, 4
    %v2747 = vadd.f32 %v1652, %v2739
    %v2748 = vadd.f32 %v1666, %v2740
    %v2749 = vadd.f32 %v1680, %v2741
    %v2750 = vadd.f32 %v1694, %v2742
    %v2751 = vxor.u32 %v2747, 2147483648
    %v2752 = vmul.f32 %v2751, 1.442695
    %v2753 = vpow.pop %v2752
    %v2754 = vadd.f32 %v2753, 1.0
    %v2755 = vrcp.pop %v2754
    %v2756 = vmul.f32 %v2754, %v2755
    %v2757 = vsub.f32 1.0, %v2756
    %v2758 = vmul.f32 %v2755, %v2757
    %v2759 = vadd.f32 %v2755, %v2758
    %vm2760 = vweird.f32 %v2754
    %vm2761 = vweird.f32 %v2755
    %vm2762 = vmor %vm2760, %vm2761
    %v2763 = vsel %vm2762, %v2755, %v2759
    %v2764 = vand.u32 2147483647, %v2754
    %vm2765 = vcmp.eq.f32.partialorder %v2764, 8.507059e+37
    %v2766 = vand.u32 %v2754, 2147483648
    %v2767 = vor.u32 1.1754944e-38, %v2766
    %v2768 = vsel %vm2765, %v2767, %v2763
    %v2769 = vmul.f32 1.0, %v2768
    %v2770 = vxor.u32 %v2748, 2147483648
    %v2771 = vmul.f32 %v2770, 1.442695
    %v2772 = vpow.pop %v2771
    %v2773 = vadd.f32 %v2772, 1.0
    %v2774 = vrcp.pop %v2773
    %v2775 = vmul.f32 %v2773, %v2774
    %v2776 = vsub.f32 1.0, %v2775
    %v2777 = vmul.f32 %v2774, %v2776
    %v2778 = vadd.f32 %v2774, %v2777
    %vm2779 = vweird.f32 %v2773
    %vm2780 = vweird.f32 %v2774
    %vm2781 = vmor %vm2779, %vm2780
    %v2782 = vsel %vm2781, %v2774, %v2778
    %v2783 = vand.u32 2147483647, %v2773
    %vm2784 = vcmp.eq.f32.partialorder %v2783, 8.507059e+37
    %v2785 = vand.u32 %v2773, 2147483648
    %v2786 = vor.u32 1.1754944e-38, %v2785
    %v2787 = vsel %vm2784, %v2786, %v2782
    %v2788 = vmul.f32 1.0, %v2787
    %v2789 = vtanh.pop %v2749
    %v2790 = vxor.u32 %v2750, 2147483648
    %v2791 = vmul.f32 %v2790, 1.442695
    %v2792 = vpow.pop %v2791
    %v2793 = vadd.f32 %v2792, 1.0
    %v2794 = vrcp.pop %v2793
    %v2795 = vmul.f32 %v2793, %v2794
    %v2796 = vsub.f32 1.0, %v2795
    %v2797 = vmul.f32 %v2794, %v2796
    %v2798 = vadd.f32 %v2794, %v2797
    %vm2799 = vweird.f32 %v2793
    %vm2800 = vweird.f32 %v2794
    %vm2801 = vmor %vm2799, %vm2800
    %v2802 = vsel %vm2801, %v2794, %v2798
    %v2803 = vand.u32 2147483647, %v2793
    %vm2804 = vcmp.eq.f32.partialorder %v2803, 8.507059e+37
    %v2805 = vand.u32 %v2793, 2147483648
    %v2806 = vor.u32 1.1754944e-38, %v2805
    %v2807 = vsel %vm2804, %v2806, %v2802
    %v2808 = vmul.f32 1.0, %v2807
    %v2810 = vrot.slane %v2676, 6
    %v2812 = vmul.f32 %v2788, %v2810
    %v2813 = vmul.f32 %v2769, %v2789
    %v2814 = vadd.f32 %v2812, %v2813
    %v2815 = vtanh.pop %v2814
    %v2816 = vmul.f32 %v2808, %v2815
    %v2817 = vpack.c.bf16 %v2816, %v2816
    %v2819 = vrot.slane %v2817, 2
    %2821 = vmatpush.bf16.msra.mxu0 %v1852
    %2822 = vmatpush.bf16.msra.mxu0 %v1848
    %2823 = vmatpush.bf16.msra.mxu0 %v1844
    %2824 = vmatpush.bf16.msra.mxu0 %v1840
    %2825 = vmatpush.bf16.msra.mxu0 %v1836
    %2826 = vmatpush.bf16.msra.mxu0 %v1832
    %2827 = vmatpush.bf16.msra.mxu0 %v1828
    %2828 = vmatpush.bf16.msra.mxu0 %v1824
    %2829 = vmatmul.bf16.gmra.mxu0 %v2819
    %v2830 = vpop.f32.mrf.mxu0
    %v2831 = vadd.f32 0.0, %v2830
    %v2832 = vpop.f32.mrf.mxu0
    %2833 = vdwg.mxu0
    %2834 = vmatpush.bf16.msra.mxu0 %v1853
    %2835 = vmatpush.bf16.msra.mxu0 %v1849
    %2836 = vmatpush.bf16.msra.mxu0 %v1845
    %2837 = vmatpush.bf16.msra.mxu0 %v1841
    %2838 = vmatpush.bf16.msra.mxu0 %v1837
    %2839 = vmatpush.bf16.msra.mxu0 %v1833
    %2840 = vmatpush.bf16.msra.mxu0 %v1829
    %2841 = vmatpush.bf16.msra.mxu0 %v1825
    %2842 = vmatmul.bf16.gmra.mxu0 %v2819
    %v2843 = vpop.f32.mrf.mxu0
    %v2844 = vadd.f32 0.0, %v2843
    %v2845 = vpop.f32.mrf.mxu0
    %2846 = vdwg.mxu0
    %2847 = vmatpush.bf16.msra.mxu0 %v1854
    %2848 = vmatpush.bf16.msra.mxu0 %v1850
    %2849 = vmatpush.bf16.msra.mxu0 %v1846
    %2850 = vmatpush.bf16.msra.mxu0 %v1842
    %2851 = vmatpush.bf16.msra.mxu0 %v1838
    %2852 = vmatpush.bf16.msra.mxu0 %v1834
    %2853 = vmatpush.bf16.msra.mxu0 %v1830
    %2854 = vmatpush.bf16.msra.mxu0 %v1826
    %2855 = vmatmul.bf16.gmra.mxu0 %v2819
    %v2856 = vpop.f32.mrf.mxu0
    %v2857 = vadd.f32 0.0, %v2856
    %v2858 = vpop.f32.mrf.mxu0
    %2859 = vdwg.mxu0
    %2860 = vmatpush.bf16.msra.mxu0 %v1855
    %2861 = vmatpush.bf16.msra.mxu0 %v1851
    %2862 = vmatpush.bf16.msra.mxu0 %v1847
    %2863 = vmatpush.bf16.msra.mxu0 %v1843
    %2864 = vmatpush.bf16.msra.mxu0 %v1839
    %2865 = vmatpush.bf16.msra.mxu0 %v1835
    %2866 = vmatpush.bf16.msra.mxu0 %v1831
    %2867 = vmatpush.bf16.msra.mxu0 %v1827
    %2868 = vmatmul.bf16.gmra.mxu0 %v2819
    %v2869 = vpop.f32.mrf.mxu0
    %v2870 = vadd.f32 0.0, %v2869
    %v2871 = vpop.f32.mrf.mxu0
    %2872 = vdwg.mxu0
    %v2877 = vrot.slane %v2831, 2
    %v2878 = vrot.slane %v2844, 2
    %v2879 = vrot.slane %v2857, 2
    %v2880 = vrot.slane %v2870, 2
    %v2885 = vadd.f32 %v1652, %v2877
    %v2886 = vadd.f32 %v1666, %v2878
    %v2887 = vadd.f32 %v1680, %v2879
    %v2888 = vadd.f32 %v1694, %v2880
    %v2889 = vxor.u32 %v2885, 2147483648
    %v2890 = vmul.f32 %v2889, 1.442695
    %v2891 = vpow.pop %v2890
    %v2892 = vadd.f32 %v2891, 1.0
    %v2893 = vrcp.pop %v2892
    %v2894 = vmul.f32 %v2892, %v2893
    %v2895 = vsub.f32 1.0, %v2894
    %v2896 = vmul.f32 %v2893, %v2895
    %v2897 = vadd.f32 %v2893, %v2896
    %vm2898 = vweird.f32 %v2892
    %vm2899 = vweird.f32 %v2893
    %vm2900 = vmor %vm2898, %vm2899
    %v2901 = vsel %vm2900, %v2893, %v2897
    %v2902 = vand.u32 2147483647, %v2892
    %vm2903 = vcmp.eq.f32.partialorder %v2902, 8.507059e+37
    %v2904 = vand.u32 %v2892, 2147483648
    %v2905 = vor.u32 1.1754944e-38, %v2904
    %v2906 = vsel %vm2903, %v2905, %v2901
    %v2907 = vmul.f32 1.0, %v2906
    %v2908 = vxor.u32 %v2886, 2147483648
    %v2909 = vmul.f32 %v2908, 1.442695
    %v2910 = vpow.pop %v2909
    %v2911 = vadd.f32 %v2910, 1.0
    %v2912 = vrcp.pop %v2911
    %v2913 = vmul.f32 %v2911, %v2912
    %v2914 = vsub.f32 1.0, %v2913
    %v2915 = vmul.f32 %v2912, %v2914
    %v2916 = vadd.f32 %v2912, %v2915
    %vm2917 = vweird.f32 %v2911
    %vm2918 = vweird.f32 %v2912
    %vm2919 = vmor %vm2917, %vm2918
    %v2920 = vsel %vm2919, %v2912, %v2916
    %v2921 = vand.u32 2147483647, %v2911
    %vm2922 = vcmp.eq.f32.partialorder %v2921, 8.507059e+37
    %v2923 = vand.u32 %v2911, 2147483648
    %v2924 = vor.u32 1.1754944e-38, %v2923
    %v2925 = vsel %vm2922, %v2924, %v2920
    %v2926 = vmul.f32 1.0, %v2925
    %v2927 = vtanh.pop %v2887
    %v2928 = vxor.u32 %v2888, 2147483648
    %v2929 = vmul.f32 %v2928, 1.442695
    %v2930 = vpow.pop %v2929
    %v2931 = vadd.f32 %v2930, 1.0
    %v2932 = vrcp.pop %v2931
    %v2933 = vmul.f32 %v2931, %v2932
    %v2934 = vsub.f32 1.0, %v2933
    %v2935 = vmul.f32 %v2932, %v2934
    %v2936 = vadd.f32 %v2932, %v2935
    %vm2937 = vweird.f32 %v2931
    %vm2938 = vweird.f32 %v2932
    %vm2939 = vmor %vm2937, %vm2938
    %v2940 = vsel %vm2939, %v2932, %v2936
    %v2941 = vand.u32 2147483647, %v2931
    %vm2942 = vcmp.eq.f32.partialorder %v2941, 8.507059e+37
    %v2943 = vand.u32 %v2931, 2147483648
    %v2944 = vor.u32 1.1754944e-38, %v2943
    %v2945 = vsel %vm2942, %v2944, %v2940
    %v2946 = vmul.f32 1.0, %v2945
    %v2948 = vrot.slane %v2814, 6
    %v2950 = vmul.f32 %v2926, %v2948
    %v2951 = vmul.f32 %v2907, %v2927
    %v2952 = vadd.f32 %v2950, %v2951
    %v2953 = vtanh.pop %v2952
    %v2954 = vmul.f32 %v2946, %v2953
    %2955 = vst [vmem:[#allocation9 - $0x6] sm:$0xc0] %v2954
    // Predicated region
    $region42: #{_forward_impl.1} parent=1 // pred_check
      _
    $region43: #{_forward_impl.1} parent=1 // pred_check_branch
      %2957 = sbr.rel (0) target = $region45
    $region44: #{_forward_impl.1} parent=1 // pred_region
      %2959 = vsyncadd [#allocation5], 0
      %s2961 = sshll.u32 [#allocation9], 4
      %s2962 = int_to_ptr.vmem [resolvable:$true] %s2961
      %s2963 = sshll.u32 %s7, 4
      %s2964 = int_to_ptr.hbm [resolvable:$true] %s2963
      %2966 = dma.vmem_to_hbm [thread:$0]  %s2962, 32, %s2964, [#allocation5]
    $region45: #{_forward_impl.1} parent=1 // pred_fallthru
      _
    // Predicated region
    $region46: #{_forward_impl.1} parent=1 // pred_check
      _
    $region47: #{_forward_impl.1} parent=1 // pred_check_branch
      %2968 = sbr.rel (0) target = $region49
    $region48: #{_forward_impl.1} parent=1 // pred_region
      %2970 = dma.done [#allocation5], 32
    $region49: #{_forward_impl.1} parent=1 // pred_fallthru
      _
    %2971 = vsyncpa [#allocation4], 1
    %2972 = vsyncpa [#allocation7], 1
    %2973 = vsyncpa [#allocation5], 1

</llo_original>
